<compile_context>
chip_gen: v7x
topology: tpu7x:2x2x1
jax: 0.10.0
libtpu: 0.0.40
codegen_flags: <defaults>
</compile_context>

<pallas_src>
import functools
import math

import jax
import jax.numpy as jnp
from jax.experimental import pallas as pl
from jax.experimental.pallas import tpu as pltpu


# ----------------------------------------------------------------------------
# Fused Decoder kernel: L pre-norm decoder blocks + final LayerNormalization.
# One grid step == one batch element ("parallel" -> both v7x TensorCores).
# ----------------------------------------------------------------------------
def _decoder_kernel(x_ref, enc_ref, tgt_bias_ref, src_bias_ref,
                    swqkv_ref, sbqkv_ref, swo_ref, sbo_ref,
                    cwq_ref, cbq_ref, cwkv_ref, cbkv_ref, cwo_ref, cbo_ref,
                    w1_ref, b1_ref, w2_ref, b2_ref, ln_ref,
                    o_ref, *, h):
    _, T, D = x_ref.shape
    S = enc_ref.shape[1]
    L = swqkv_ref.shape[0]
    dk = D // h
    eps = 1e-6
    f32 = jnp.float32
    cd = swqkv_ref.dtype                       # MXU operand dtype (f32 or bf16)

    x = x_ref[0].astype(f32)                   # (T, D) residual stream, f32
    enc_cd = enc_ref[0].astype(cd)             # (S, D): cast ONCE, reused every layer
    tgt_bias = tgt_bias_ref[...]               # (T, T) additive 0 / -1e9
    src_bias = src_bias_ref[...]               # (1, S) additive 0 / -1e9

    def layernorm(v, alpha, bias):
        # Matches the PyTorch module: unbiased std, normalize by (std + eps).
        mean = jnp.mean(v, axis=-1, keepdims=True)
        cent = v - mean
        var = jnp.sum(cent * cent, axis=-1, keepdims=True) * (1.0 / (D - 1))
        inv = pl.reciprocal(jnp.sqrt(var) + eps)     # exact: approx error compounds
        return alpha * cent * inv + bias

    def heads(m, col0):
        # Head-major (h, rows, dk) built once per tensor (single relayout;
        # avoids per-head slicing inside the attention math).
        return jnp.stack([m[:, col0 + i * dk: col0 + (i + 1) * dk]
                          for i in range(h)], axis=0)

    def attend(q_h, k_h, v_h, bias, wo, bo):
        # q_h: (h, T, dk); k_h / v_h: (h, kv, dk); f32 in, cast once per tensor.
        q_h = q_h.astype(cd)
        k_h = k_h.astype(cd)
        v_h = v_h.astype(cd)
        sc = jnp.einsum("hqd,hkd->hqk", q_h, k_h, preferred_element_type=f32)
        sc = sc + bias                          # one broadcast per attention
        sc = sc - jnp.max(sc, axis=-1, keepdims=True)
        p = jnp.exp(sc)                         # fully-masked row -> uniform (as ref)
        p = p * pl.reciprocal(jnp.sum(p, axis=-1, keepdims=True), approx=True)  # EUP
        ctx = jnp.einsum("hqk,hkd->hqd", p.astype(cd), v_h,
                         preferred_element_type=f32)          # (h, T, dk)
        ctx = jnp.concatenate([ctx[i] for i in range(h)], axis=-1)  # (T, D)
        return jnp.dot(ctx.astype(cd), wo, preferred_element_type=f32) + bo

    def layer(l, x):
        # ---- residual 1: masked self-attention (fused QKV projection) ----
        # 1/sqrt(dk) already folded into Wq / bq on the host.
        xn = layernorm(x, ln_ref[6 * l + 0], ln_ref[6 * l + 1]).astype(cd)
        qkv = jnp.dot(xn, swqkv_ref[l], preferred_element_type=f32) + sbqkv_ref[l]
        x = x + attend(heads(qkv, 0), heads(qkv, D), heads(qkv, 2 * D),
                       tgt_bias, swo_ref[l], sbo_ref[l])

        # ---- residual 2: cross-attention (fused KV projection on encoder) ----
        xn = layernorm(x, ln_ref[6 * l + 2], ln_ref[6 * l + 3]).astype(cd)
        q = jnp.dot(xn, cwq_ref[l], preferred_element_type=f32) + cbq_ref[l]
        kv = jnp.dot(enc_cd, cwkv_ref[l], preferred_element_type=f32) + cbkv_ref[l]
        x = x + attend(heads(q, 0), heads(kv, 0), heads(kv, D),
                       src_bias, cwo_ref[l], cbo_ref[l])

        # ---- residual 3: feed-forward (dropout p=0 -> identity, omitted) ----
        xn = layernorm(x, ln_ref[6 * l + 4], ln_ref[6 * l + 5]).astype(cd)
        hid = jnp.maximum(jnp.dot(xn, w1_ref[l], preferred_element_type=f32)
                          + b1_ref[l], 0.0)
        return x + jnp.dot(hid.astype(cd), w2_ref[l],
                           preferred_element_type=f32) + b2_ref[l]

    # fori_loop (not a static unroll) bounds vreg live ranges / compile time at real L.
    x = jax.lax.fori_loop(0, L, layer, x)

    # Final LayerNormalization of the Decoder.
    x = layernorm(x, ln_ref[6 * L + 0], ln_ref[6 * L + 1])
    o_ref[0] = x.astype(o_ref.dtype)


def decoder_pallas(x, enc, tgt_mask, src_mask, params, h,
                   compute_dtype=jnp.float32):
    B, T, D = x.shape
    S = enc.shape[1]
    L, _, F = params["ffn_w1"].shape
    dk = D // h
    scale = 1.0 / math.sqrt(dk)
    f32 = jnp.float32

    # Additive attention biases precomputed once on the host.
    neg = jnp.float32(-1e9)
    tgt_bias = jnp.where(tgt_mask == 0, neg, 0.0).reshape(T, T).astype(f32)
    src_bias = jnp.where(src_mask == 0, neg, 0.0).reshape(1, S).astype(f32)

    # Host-side weight packing: fold 1/sqrt(dk) into Wq/bq, fuse Q|K|V (self) and
    # K|V (cross) into single matmuls. Weights go to the MXU compute dtype (bf16 is
    # beneficial on v5e, v6e AND v7x); biases / LN scalars / residual stay f32.
    wcast = lambda w: w.astype(compute_dtype)
    sw, sb = params["self_w"], params["self_b"]       # (L,4,D,D), (L,4,D)
    cw, cb = params["cross_w"], params["cross_b"]
    self_wqkv = jnp.concatenate([sw[:, 0] * scale, sw[:, 1], sw[:, 2]], axis=-1)
    self_bqkv = jnp.concatenate([sb[:, 0] * scale, sb[:, 1], sb[:, 2]], axis=-1)
    cross_wkv = jnp.concatenate([cw[:, 1], cw[:, 2]], axis=-1)
    cross_bkv = jnp.concatenate([cb[:, 1], cb[:, 2]], axis=-1)

    operands = (
        x, enc, tgt_bias, src_bias,
        wcast(self_wqkv), self_bqkv.astype(f32), wcast(sw[:, 3]), sb[:, 3].astype(f32),
        wcast(cw[:, 0] * scale), (cb[:, 0] * scale).astype(f32),
        wcast(cross_wkv), cross_bkv.astype(f32),
        wcast(cw[:, 3]), cb[:, 3].astype(f32),
        wcast(params["ffn_w1"]), params["ffn_b1"],
        wcast(params["ffn_w2"]), params["ffn_b2"],
        params["ln"],
    )

    flops_per_batch = L * (
        8 * T * D * D            # self-attn q/k/v/o projections
        + 4 * T * T * D          # self-attn scores + PV
        + 4 * T * D * D          # cross-attn q + o projections
        + 4 * S * D * D          # cross-attn k + v projections
        + 4 * T * S * D          # cross-attn scores + PV
        + 4 * T * D * F)         # feed-forward
    bytes_accessed = sum(int(a.size) * a.dtype.itemsize for a in operands)
    bytes_accessed += int(x.size) * x.dtype.itemsize          # output
    cost = pl.CostEstimate(flops=int(B * flops_per_batch),
                           transcendentals=int(L * B * h * (T * T + T * S)),
                           bytes_accessed=int(bytes_accessed))

    # Tight VMEM budget: resident biases/weights + double-buffered x/enc/out blocks
    # + intermediate headroom; capped under v7x's 64 MiB physical VMEM.
    resident = sum(int(a.size) * a.dtype.itemsize for a in operands[2:])
    blocks = 2 * (T * D + S * D + T * D) * x.dtype.itemsize
    vmem_limit = int(min(64 * 1024 * 1024,
                         max(4 * 1024 * 1024, 2 * (resident + blocks))))

    in_specs = (
        [pl.BlockSpec((1, T, D), lambda b: (b, 0, 0)),       # x: per-batch block
         pl.BlockSpec((1, S, D), lambda b: (b, 0, 0))]        # encoder: per-batch block
        + [pl.BlockSpec(memory_space=pltpu.MemorySpace.VMEM)] * 16   # biases + weights
        + [pl.BlockSpec(memory_space=pltpu.MemorySpace.SMEM)])       # LN scalars

    return pl.pallas_call(
        functools.partial(_decoder_kernel, h=h),
        out_shape=jax.ShapeDtypeStruct((B, T, D), x.dtype),
        grid=(B,),
        in_specs=in_specs,
        out_specs=pl.BlockSpec((1, T, D), lambda b: (b, 0, 0)),
        compiler_params=pltpu.CompilerParams(
            dimension_semantics=("parallel",),      # shards batch across v7x cores
            vmem_limit_bytes=vmem_limit),
        cost_estimate=cost,
    )(*operands)


# ----------------------------------------------------------------------------
# Pure-JAX reference (mirrors the PyTorch forward; dropout p=0 -> identity).
# ----------------------------------------------------------------------------
def decoder_ref(x, enc, tgt_mask, src_mask, p, h):
    eps = 1e-6

    def ln(v, a, b):
        mean = v.mean(-1, keepdims=True)
        std = jnp.sqrt(((v - mean) ** 2).sum(-1, keepdims=True) / (v.shape[-1] - 1))
        return a * (v - mean) / (std + eps) + b

    def mha(q_in, kv_in, mask, W, Bb):
        q = q_in @ W[0] + Bb[0]
        k = kv_in @ W[1] + Bb[1]
        v = kv_in @ W[2] + Bb[2]
        Bn, Tq, D = q.shape
        Tk = k.shape[1]
        dk = D // h
        qh = q.reshape(Bn, Tq, h, dk).transpose(0, 2, 1, 3)
        kh = k.reshape(Bn, Tk, h, dk).transpose(0, 2, 1, 3)
        vh = v.reshape(Bn, Tk, h, dk).transpose(0, 2, 1, 3)
        sc = jnp.einsum("bhqd,bhkd->bhqk", qh, kh) / math.sqrt(dk)
        sc = jnp.where(mask[None, None] == 0.0, -1e9, sc)
        pr = jax.nn.softmax(sc, axis=-1)
        o = jnp.einsum("bhqk,bhkd->bhqd", pr, vh).transpose(0, 2, 1, 3).reshape(Bn, Tq, D)
        return o @ W[3] + Bb[3]

    a = p["ln"]
    L = p["self_w"].shape[0]
    for l in range(L):
        xn = ln(x, a[6 * l + 0], a[6 * l + 1])
        x = x + mha(xn, xn, tgt_mask, p["self_w"][l], p["self_b"][l])
        xn = ln(x, a[6 * l + 2], a[6 * l + 3])
        x = x + mha(xn, enc, src_mask, p["cross_w"][l], p["cross_b"][l])
        xn = ln(x, a[6 * l + 4], a[6 * l + 5])
        x = x + (jnp.maximum(xn @ p["ffn_w1"][l] + p["ffn_b1"][l], 0.0)
                 @ p["ffn_w2"][l] + p["ffn_b2"][l])
    return ln(x, a[6 * L + 0], a[6 * L + 1])


# ----------------------------------------------------------------------------
if __name__ == "__main__":
    B, T, S = 2, 8, 12           # batch, target length, source length
    D, H, F, L = 32, 4, 64, 2    # d_model, heads, d_ff, number of decoder layers

    key = jax.random.PRNGKey(0)
    ks = jax.random.split(key, 12)

    n_ln = 3 * L + 1             # 3 LayerNorms per block + final Decoder norm
    alphas = 1.0 + 0.05 * jax.random.normal(ks[10], (n_ln,), jnp.float32)
    betas = 0.05 * jax.random.normal(ks[11], (n_ln,), jnp.float32)

    params = {
        # Linear weights stored (in, out): y = x @ W + b (transpose of torch layout).
        "self_w": 0.1 * jax.random.normal(ks[0], (L, 4, D, D), jnp.float32),
        "self_b": 0.1 * jax.random.normal(ks[1], (L, 4, D), jnp.float32),
        "cross_w": 0.1 * jax.random.normal(ks[2], (L, 4, D, D), jnp.float32),
        "cross_b": 0.1 * jax.random.normal(ks[3], (L, 4, D), jnp.float32),
        "ffn_w1": 0.1 * jax.random.normal(ks[4], (L, D, F), jnp.float32),
        "ffn_b1": 0.1 * jax.random.normal(ks[5], (L, F), jnp.float32),
        "ffn_w2": 0.1 * jax.random.normal(ks[6], (L, F, D), jnp.float32),
        "ffn_b2": 0.1 * jax.random.normal(ks[7], (L, D), jnp.float32),
        # LayerNormalization scalars, interleaved [alpha, bias] per norm.
        "ln": jnp.stack([alphas, betas], axis=1).reshape(-1),
    }

    x = jax.random.normal(ks[8], (B, T, D), jnp.float32)
    enc = jax.random.normal(ks[9], (B, S, D), jnp.float32)
    tgt_mask = jnp.tril(jnp.ones((T, T), jnp.float32))             # causal mask
    src_mask = (jnp.arange(S) < S - 2).astype(jnp.float32)[None]   # 2 padded src pos

    ref = decoder_ref(x, enc, tgt_mask, src_mask, params, H)

    # f32 operand path (exact LN divide; approx reciprocal only in softmax).
    out_f32 = jax.block_until_ready(
        decoder_pallas(x, enc, tgt_mask, src_mask, params, H,
                       compute_dtype=jnp.float32))
    assert out_f32.shape == (B, T, D)
    assert jnp.allclose(out_f32, ref, atol=2e-2, rtol=2e-2), "f32 kernel mismatch"

    # bf16 MXU-operand path (v5e/v6e/v7x); f32 accumulation, looser tolerance.
    out_bf16 = jax.block_until_ready(
        decoder_pallas(x, enc, tgt_mask, src_mask, params, H,
                       compute_dtype=jnp.bfloat16))
    assert out_bf16.shape == (B, T, D)
    assert jnp.allclose(out_bf16, ref, atol=1e-1, rtol=1e-1), "bf16 kernel mismatch"

    print("KERNEL_OK")
</pallas_src>

<mosaic_0001>
module attributes {stable_mosaic.version = 11 : i64} {
  func.func @_decoder_kernel(%arg0: i32, %arg1: memref<1x8x32xf32, #tpu.memory_space<vmem>>, %arg2: memref<1x12x32xf32, #tpu.memory_space<vmem>>, %arg3: memref<8x8xf32, #tpu.memory_space<vmem>>, %arg4: memref<1x12xf32, #tpu.memory_space<vmem>>, %arg5: memref<2x32x96xf32, #tpu.memory_space<vmem>>, %arg6: memref<2x96xf32, #tpu.memory_space<vmem>>, %arg7: memref<2x32x32xf32, #tpu.memory_space<vmem>>, %arg8: memref<2x32xf32, #tpu.memory_space<vmem>>, %arg9: memref<2x32x32xf32, #tpu.memory_space<vmem>>, %arg10: memref<2x32xf32, #tpu.memory_space<vmem>>, %arg11: memref<2x32x64xf32, #tpu.memory_space<vmem>>, %arg12: memref<2x64xf32, #tpu.memory_space<vmem>>, %arg13: memref<2x32x32xf32, #tpu.memory_space<vmem>>, %arg14: memref<2x32xf32, #tpu.memory_space<vmem>>, %arg15: memref<2x32x64xf32, #tpu.memory_space<vmem>>, %arg16: memref<2x64xf32, #tpu.memory_space<vmem>>, %arg17: memref<2x64x32xf32, #tpu.memory_space<vmem>>, %arg18: memref<2x32xf32, #tpu.memory_space<vmem>>, %arg19: memref<14xf32, #tpu.memory_space<smem>>, %arg20: memref<1x8x32xf32, #tpu.memory_space<vmem>>) attributes {dimension_semantics = [#tpu.dimension_semantics<parallel>], iteration_bounds = array<i64: 2>, scalar_prefetch = 0 : i64, scratch_operands = 0 : i64, tpu.core_type = #tpu.core_type<tc>, window_params = [{transform_indices = @transform_0, window_bounds = array<i64: 1, 8, 32>}, {transform_indices = @transform_1, window_bounds = array<i64: 1, 12, 32>}, {pipeline_mode = #tpu.pipeline_mode<synchronous>, transform_indices = @transform_2, window_bounds = array<i64: 8, 8>}, {pipeline_mode = #tpu.pipeline_mode<synchronous>, transform_indices = @transform_3, window_bounds = array<i64: 1, 12>}, {pipeline_mode = #tpu.pipeline_mode<synchronous>, transform_indices = @transform_4, window_bounds = array<i64: 2, 32, 96>}, {pipeline_mode = #tpu.pipeline_mode<synchronous>, transform_indices = @transform_5, window_bounds = array<i64: 2, 96>}, {pipeline_mode = #tpu.pipeline_mode<synchronous>, transform_indices = @transform_6, window_bounds = array<i64: 2, 32, 32>}, {pipeline_mode = #tpu.pipeline_mode<synchronous>, transform_indices = @transform_7, window_bounds = array<i64: 2, 32>}, {pipeline_mode = #tpu.pipeline_mode<synchronous>, transform_indices = @transform_8, window_bounds = array<i64: 2, 32, 32>}, {pipeline_mode = #tpu.pipeline_mode<synchronous>, transform_indices = @transform_9, window_bounds = array<i64: 2, 32>}, {pipeline_mode = #tpu.pipeline_mode<synchronous>, transform_indices = @transform_10, window_bounds = array<i64: 2, 32, 64>}, {pipeline_mode = #tpu.pipeline_mode<synchronous>, transform_indices = @transform_11, window_bounds = array<i64: 2, 64>}, {pipeline_mode = #tpu.pipeline_mode<synchronous>, transform_indices = @transform_12, window_bounds = array<i64: 2, 32, 32>}, {pipeline_mode = #tpu.pipeline_mode<synchronous>, transform_indices = @transform_13, window_bounds = array<i64: 2, 32>}, {pipeline_mode = #tpu.pipeline_mode<synchronous>, transform_indices = @transform_14, window_bounds = array<i64: 2, 32, 64>}, {pipeline_mode = #tpu.pipeline_mode<synchronous>, transform_indices = @transform_15, window_bounds = array<i64: 2, 64>}, {pipeline_mode = #tpu.pipeline_mode<synchronous>, transform_indices = @transform_16, window_bounds = array<i64: 2, 64, 32>}, {pipeline_mode = #tpu.pipeline_mode<synchronous>, transform_indices = @transform_17, window_bounds = array<i64: 2, 32>}, {transform_indices = @transform_18, window_bounds = array<i64: 14>}, {transform_indices = @transform_19, window_bounds = array<i64: 1, 8, 32>}]} {
    %c0 = arith.constant 0 : index
    %c0_0 = arith.constant 0 : index
    %c0_1 = arith.constant 0 : index
    %0 = vector.load %arg1[%c0, %c0_0, %c0_1] : memref<1x8x32xf32, #tpu.memory_space<vmem>>, vector<1x8x32xf32>
    %1 = vector.shape_cast %0 : vector<1x8x32xf32> to vector<8x32xf32>
    %c0_2 = arith.constant 0 : index
    %c0_3 = arith.constant 0 : index
    %c0_4 = arith.constant 0 : index
    %2 = vector.load %arg2[%c0_2, %c0_3, %c0_4] : memref<1x12x32xf32, #tpu.memory_space<vmem>>, vector<1x12x32xf32>
    %3 = vector.shape_cast %2 : vector<1x12x32xf32> to vector<12x32xf32>
    %c0_5 = arith.constant 0 : index
    %c0_6 = arith.constant 0 : index
    %4 = vector.load %arg3[%c0_5, %c0_6] : memref<8x8xf32, #tpu.memory_space<vmem>>, vector<8x8xf32>
    %c0_7 = arith.constant 0 : index
    %c0_8 = arith.constant 0 : index
    %5 = vector.load %arg4[%c0_7, %c0_8] : memref<1x12xf32, #tpu.memory_space<vmem>>, vector<1x12xf32>
    %c0_i32 = arith.constant 0 : i32
    %c2_i32 = arith.constant 2 : i32
    %6 = arith.addi %c0_i32, %c2_i32 : i32
    %c1_i32 = arith.constant 1 : i32
    %7 = scf.for %arg21 = %c0_i32 to %6 step %c1_i32 iter_args(%arg22 = %1) -> (vector<8x32xf32>)  : i32 {
      %c6_i32 = arith.constant 6 : i32
      %34 = arith.muli %c6_i32, %arg21 : i32
      %c0_i32_17 = arith.constant 0 : i32
      %35 = arith.addi %34, %c0_i32_17 : i32
      %36 = arith.index_cast %35 : i32 to index
      %37 = memref.load %arg19[%36] : memref<14xf32, #tpu.memory_space<smem>>
      %c6_i32_18 = arith.constant 6 : i32
      %38 = arith.muli %c6_i32_18, %arg21 : i32
      %c1_i32_19 = arith.constant 1 : i32
      %39 = arith.addi %38, %c1_i32_19 : i32
      %40 = arith.index_cast %39 : i32 to index
      %41 = memref.load %arg19[%40] : memref<14xf32, #tpu.memory_space<smem>>
      %cst_20 = arith.constant dense<0.000000e+00> : vector<8xf32>
      %42 = vector.multi_reduction <add>, %arg22, %cst_20 [1] : vector<8x32xf32> to vector<8xf32>
      %43 = vector.shape_cast %42 : vector<8xf32> to vector<8x1xf32>
      %cst_21 = arith.constant 3.200000e+01 : f32
      %44 = vector.broadcast %cst_21 : f32 to vector<8x1xf32>
      %45 = arith.divf %43, %44 : vector<8x1xf32>
      %46 = vector.broadcast %45 : vector<8x1xf32> to vector<8x32xf32>
      %47 = arith.subf %arg22, %46 : vector<8x32xf32>
      %48 = arith.mulf %47, %47 : vector<8x32xf32>
      %cst_22 = arith.constant dense<0.000000e+00> : vector<8xf32>
      %49 = vector.multi_reduction <add>, %48, %cst_22 [1] : vector<8x32xf32> to vector<8xf32>
      %50 = vector.shape_cast %49 : vector<8xf32> to vector<8x1xf32>
      %cst_23 = arith.constant 0.0322580636 : f32
      %51 = vector.broadcast %cst_23 : f32 to vector<8x1xf32>
      %52 = arith.mulf %50, %51 : vector<8x1xf32>
      %53 = math.sqrt %52 : vector<8x1xf32>
      %cst_24 = arith.constant 9.99999997E-7 : f32
      %54 = vector.broadcast %cst_24 : f32 to vector<8x1xf32>
      %55 = arith.addf %53, %54 : vector<8x1xf32>
      %56 = tpu.reciprocal %55 : vector<8x1xf32> -> vector<8x1xf32>
      %57 = vector.broadcast %37 : f32 to vector<8x32xf32>
      %58 = arith.mulf %57, %47 : vector<8x32xf32>
      %59 = vector.broadcast %56 : vector<8x1xf32> to vector<8x32xf32>
      %60 = arith.mulf %58, %59 : vector<8x32xf32>
      %61 = vector.broadcast %41 : f32 to vector<8x32xf32>
      %62 = arith.addf %60, %61 : vector<8x32xf32>
      %63 = arith.index_cast %arg21 : i32 to index
      %c0_25 = arith.constant 0 : index
      %c0_26 = arith.constant 0 : index
      %64 = vector.load %arg5[%63, %c0_25, %c0_26] : memref<2x32x96xf32, #tpu.memory_space<vmem>>, vector<1x32x96xf32>
      %65 = vector.shape_cast %64 : vector<1x32x96xf32> to vector<32x96xf32>
      %cst_27 = arith.constant dense<0.000000e+00> : vector<8x96xf32>
      %66 = tpu.matmul %62, %65, %cst_27 {dimension_numbers = #tpu.dot_dimension_numbers<[1], [0], [0], [1], [0, 0, 1, 1], [], []>} : vector<8x32xf32>, vector<32x96xf32>, vector<8x96xf32> -> vector<8x96xf32>
      %67 = arith.index_cast %arg21 : i32 to index
      %c0_28 = arith.constant 0 : index
      %68 = vector.load %arg6[%67, %c0_28] : memref<2x96xf32, #tpu.memory_space<vmem>>, vector<1x96xf32>
      %69 = vector.shape_cast %68 : vector<1x96xf32> to vector<96xf32>
      %70 = vector.shape_cast %69 : vector<96xf32> to vector<1x96xf32>
      %71 = vector.broadcast %70 : vector<1x96xf32> to vector<8x96xf32>
      %72 = arith.addf %66, %71 : vector<8x96xf32>
      %73 = vector.extract_strided_slice %72 {offsets = [0, 0], sizes = [8, 8], strides = [1, 1]} : vector<8x96xf32> to vector<8x8xf32>
      %74 = vector.extract_strided_slice %72 {offsets = [0, 8], sizes = [8, 8], strides = [1, 1]} : vector<8x96xf32> to vector<8x8xf32>
      %75 = vector.extract_strided_slice %72 {offsets = [0, 16], sizes = [8, 8], strides = [1, 1]} : vector<8x96xf32> to vector<8x8xf32>
      %76 = vector.extract_strided_slice %72 {offsets = [0, 24], sizes = [8, 8], strides = [1, 1]} : vector<8x96xf32> to vector<8x8xf32>
      %77 = vector.shape_cast %73 : vector<8x8xf32> to vector<1x8x8xf32>
      %78 = vector.shape_cast %74 : vector<8x8xf32> to vector<1x8x8xf32>
      %79 = vector.shape_cast %75 : vector<8x8xf32> to vector<1x8x8xf32>
      %80 = vector.shape_cast %76 : vector<8x8xf32> to vector<1x8x8xf32>
      %81 = tpu.concatenate %77, %78, %79, %80 in 0 : vector<1x8x8xf32>, vector<1x8x8xf32>, vector<1x8x8xf32>, vector<1x8x8xf32> -> vector<4x8x8xf32>
      %82 = vector.extract_strided_slice %72 {offsets = [0, 32], sizes = [8, 8], strides = [1, 1]} : vector<8x96xf32> to vector<8x8xf32>
      %83 = vector.extract_strided_slice %72 {offsets = [0, 40], sizes = [8, 8], strides = [1, 1]} : vector<8x96xf32> to vector<8x8xf32>
      %84 = vector.extract_strided_slice %72 {offsets = [0, 48], sizes = [8, 8], strides = [1, 1]} : vector<8x96xf32> to vector<8x8xf32>
      %85 = vector.extract_strided_slice %72 {offsets = [0, 56], sizes = [8, 8], strides = [1, 1]} : vector<8x96xf32> to vector<8x8xf32>
      %86 = vector.shape_cast %82 : vector<8x8xf32> to vector<1x8x8xf32>
      %87 = vector.shape_cast %83 : vector<8x8xf32> to vector<1x8x8xf32>
      %88 = vector.shape_cast %84 : vector<8x8xf32> to vector<1x8x8xf32>
      %89 = vector.shape_cast %85 : vector<8x8xf32> to vector<1x8x8xf32>
      %90 = tpu.concatenate %86, %87, %88, %89 in 0 : vector<1x8x8xf32>, vector<1x8x8xf32>, vector<1x8x8xf32>, vector<1x8x8xf32> -> vector<4x8x8xf32>
      %91 = vector.extract_strided_slice %72 {offsets = [0, 64], sizes = [8, 8], strides = [1, 1]} : vector<8x96xf32> to vector<8x8xf32>
      %92 = vector.extract_strided_slice %72 {offsets = [0, 72], sizes = [8, 8], strides = [1, 1]} : vector<8x96xf32> to vector<8x8xf32>
      %93 = vector.extract_strided_slice %72 {offsets = [0, 80], sizes = [8, 8], strides = [1, 1]} : vector<8x96xf32> to vector<8x8xf32>
      %94 = vector.extract_strided_slice %72 {offsets = [0, 88], sizes = [8, 8], strides = [1, 1]} : vector<8x96xf32> to vector<8x8xf32>
      %95 = vector.shape_cast %91 : vector<8x8xf32> to vector<1x8x8xf32>
      %96 = vector.shape_cast %92 : vector<8x8xf32> to vector<1x8x8xf32>
      %97 = vector.shape_cast %93 : vector<8x8xf32> to vector<1x8x8xf32>
      %98 = vector.shape_cast %94 : vector<8x8xf32> to vector<1x8x8xf32>
      %99 = tpu.concatenate %95, %96, %97, %98 in 0 : vector<1x8x8xf32>, vector<1x8x8xf32>, vector<1x8x8xf32>, vector<1x8x8xf32> -> vector<4x8x8xf32>
      %100 = arith.index_cast %arg21 : i32 to index
      %c0_29 = arith.constant 0 : index
      %c0_30 = arith.constant 0 : index
      %101 = vector.load %arg7[%100, %c0_29, %c0_30] : memref<2x32x32xf32, #tpu.memory_space<vmem>>, vector<1x32x32xf32>
      %102 = vector.shape_cast %101 : vector<1x32x32xf32> to vector<32x32xf32>
      %103 = arith.index_cast %arg21 : i32 to index
      %c0_31 = arith.constant 0 : index
      %104 = vector.load %arg8[%103, %c0_31] : memref<2x32xf32, #tpu.memory_space<vmem>>, vector<1x32xf32>
      %105 = vector.shape_cast %104 : vector<1x32xf32> to vector<32xf32>
      "tpu.trace_start"() <{level = 10 : i32, message = "hqd,hkd->hqk"}> : () -> ()
      %cst_32 = arith.constant dense<0.000000e+00> : vector<4x8x8xf32>
      %106 = tpu.matmul %81, %90, %cst_32 {dimension_numbers = #tpu.dot_dimension_numbers<[2], [2], [1], [1], [0, 0, 0, 1, 1, 1], [0], [0]>} : vector<4x8x8xf32>, vector<4x8x8xf32>, vector<4x8x8xf32> -> vector<4x8x8xf32>
      "tpu.trace_stop"() : () -> ()
      %107 = vector.shape_cast %4 : vector<8x8xf32> to vector<1x8x8xf32>
      %108 = vector.broadcast %107 : vector<1x8x8xf32> to vector<4x8x8xf32>
      %109 = arith.addf %106, %108 : vector<4x8x8xf32>
      %cst_33 = arith.constant dense<0xFF800000> : vector<4x8xf32>
      %110 = vector.multi_reduction <maximumf>, %109, %cst_33 [2] : vector<4x8x8xf32> to vector<4x8xf32>
      %111 = vector.shape_cast %110 : vector<4x8xf32> to vector<4x8x1xf32>
      %112 = vector.broadcast %111 : vector<4x8x1xf32> to vector<4x8x8xf32>
      %113 = arith.subf %109, %112 : vector<4x8x8xf32>
      %114 = math.exp %113 : vector<4x8x8xf32>
      %cst_34 = arith.constant dense<0.000000e+00> : vector<4x8xf32>
      %115 = vector.multi_reduction <add>, %114, %cst_34 [2] : vector<4x8x8xf32> to vector<4x8xf32>
      %116 = vector.shape_cast %115 : vector<4x8xf32> to vector<4x8x1xf32>
      %117 = tpu.reciprocal %116 {approx = true} : vector<4x8x1xf32> -> vector<4x8x1xf32>
      %118 = vector.broadcast %117 : vector<4x8x1xf32> to vector<4x8x8xf32>
      %119 = arith.mulf %114, %118 : vector<4x8x8xf32>
      "tpu.trace_start"() <{level = 10 : i32, message = "hqk,hkd->hqd"}> : () -> ()
      %cst_35 = arith.constant dense<0.000000e+00> : vector<4x8x8xf32>
      %120 = tpu.matmul %119, %99, %cst_35 {dimension_numbers = #tpu.dot_dimension_numbers<[2], [1], [1], [2], [0, 0, 0, 1, 1, 2], [0], [0]>} : vector<4x8x8xf32>, vector<4x8x8xf32>, vector<4x8x8xf32> -> vector<4x8x8xf32>
      "tpu.trace_stop"() : () -> ()
      %121 = vector.extract_strided_slice %120 {offsets = [0, 0, 0], sizes = [1, 8, 8], strides = [1, 1, 1]} : vector<4x8x8xf32> to vector<1x8x8xf32>
      %122 = vector.shape_cast %121 : vector<1x8x8xf32> to vector<8x8xf32>
      %123 = vector.extract_strided_slice %120 {offsets = [1, 0, 0], sizes = [1, 8, 8], strides = [1, 1, 1]} : vector<4x8x8xf32> to vector<1x8x8xf32>
      %124 = vector.shape_cast %123 : vector<1x8x8xf32> to vector<8x8xf32>
      %125 = vector.extract_strided_slice %120 {offsets = [2, 0, 0], sizes = [1, 8, 8], strides = [1, 1, 1]} : vector<4x8x8xf32> to vector<1x8x8xf32>
      %126 = vector.shape_cast %125 : vector<1x8x8xf32> to vector<8x8xf32>
      %127 = vector.extract_strided_slice %120 {offsets = [3, 0, 0], sizes = [1, 8, 8], strides = [1, 1, 1]} : vector<4x8x8xf32> to vector<1x8x8xf32>
      %128 = vector.shape_cast %127 : vector<1x8x8xf32> to vector<8x8xf32>
      %129 = tpu.concatenate %122, %124, %126, %128 in 1 : vector<8x8xf32>, vector<8x8xf32>, vector<8x8xf32>, vector<8x8xf32> -> vector<8x32xf32>
      %cst_36 = arith.constant dense<0.000000e+00> : vector<8x32xf32>
      %130 = tpu.matmul %129, %102, %cst_36 {dimension_numbers = #tpu.dot_dimension_numbers<[1], [0], [0], [1], [0, 0, 1, 1], [], []>} : vector<8x32xf32>, vector<32x32xf32>, vector<8x32xf32> -> vector<8x32xf32>
      %131 = vector.shape_cast %105 : vector<32xf32> to vector<1x32xf32>
      %132 = vector.broadcast %131 : vector<1x32xf32> to vector<8x32xf32>
      %133 = arith.addf %130, %132 : vector<8x32xf32>
      %134 = arith.addf %arg22, %133 : vector<8x32xf32>
      %c6_i32_37 = arith.constant 6 : i32
      %135 = arith.muli %c6_i32_37, %arg21 : i32
      %c2_i32_38 = arith.constant 2 : i32
      %136 = arith.addi %135, %c2_i32_38 : i32
      %137 = arith.index_cast %136 : i32 to index
      %138 = memref.load %arg19[%137] : memref<14xf32, #tpu.memory_space<smem>>
      %c6_i32_39 = arith.constant 6 : i32
      %139 = arith.muli %c6_i32_39, %arg21 : i32
      %c3_i32 = arith.constant 3 : i32
      %140 = arith.addi %139, %c3_i32 : i32
      %141 = arith.index_cast %140 : i32 to index
      %142 = memref.load %arg19[%141] : memref<14xf32, #tpu.memory_space<smem>>
      %cst_40 = arith.constant dense<0.000000e+00> : vector<8xf32>
      %143 = vector.multi_reduction <add>, %134, %cst_40 [1] : vector<8x32xf32> to vector<8xf32>
      %144 = vector.shape_cast %143 : vector<8xf32> to vector<8x1xf32>
      %cst_41 = arith.constant 3.200000e+01 : f32
      %145 = vector.broadcast %cst_41 : f32 to vector<8x1xf32>
      %146 = arith.divf %144, %145 : vector<8x1xf32>
      %147 = vector.broadcast %146 : vector<8x1xf32> to vector<8x32xf32>
      %148 = arith.subf %134, %147 : vector<8x32xf32>
      %149 = arith.mulf %148, %148 : vector<8x32xf32>
      %cst_42 = arith.constant dense<0.000000e+00> : vector<8xf32>
      %150 = vector.multi_reduction <add>, %149, %cst_42 [1] : vector<8x32xf32> to vector<8xf32>
      %151 = vector.shape_cast %150 : vector<8xf32> to vector<8x1xf32>
      %cst_43 = arith.constant 0.0322580636 : f32
      %152 = vector.broadcast %cst_43 : f32 to vector<8x1xf32>
      %153 = arith.mulf %151, %152 : vector<8x1xf32>
      %154 = math.sqrt %153 : vector<8x1xf32>
      %cst_44 = arith.constant 9.99999997E-7 : f32
      %155 = vector.broadcast %cst_44 : f32 to vector<8x1xf32>
      %156 = arith.addf %154, %155 : vector<8x1xf32>
      %157 = tpu.reciprocal %156 : vector<8x1xf32> -> vector<8x1xf32>
      %158 = vector.broadcast %138 : f32 to vector<8x32xf32>
      %159 = arith.mulf %158, %148 : vector<8x32xf32>
      %160 = vector.broadcast %157 : vector<8x1xf32> to vector<8x32xf32>
      %161 = arith.mulf %159, %160 : vector<8x32xf32>
      %162 = vector.broadcast %142 : f32 to vector<8x32xf32>
      %163 = arith.addf %161, %162 : vector<8x32xf32>
      %164 = arith.index_cast %arg21 : i32 to index
      %c0_45 = arith.constant 0 : index
      %c0_46 = arith.constant 0 : index
      %165 = vector.load %arg9[%164, %c0_45, %c0_46] : memref<2x32x32xf32, #tpu.memory_space<vmem>>, vector<1x32x32xf32>
      %166 = vector.shape_cast %165 : vector<1x32x32xf32> to vector<32x32xf32>
      %cst_47 = arith.constant dense<0.000000e+00> : vector<8x32xf32>
      %167 = tpu.matmul %163, %166, %cst_47 {dimension_numbers = #tpu.dot_dimension_numbers<[1], [0], [0], [1], [0, 0, 1, 1], [], []>} : vector<8x32xf32>, vector<32x32xf32>, vector<8x32xf32> -> vector<8x32xf32>
      %168 = arith.index_cast %arg21 : i32 to index
      %c0_48 = arith.constant 0 : index
      %169 = vector.load %arg10[%168, %c0_48] : memref<2x32xf32, #tpu.memory_space<vmem>>, vector<1x32xf32>
      %170 = vector.shape_cast %169 : vector<1x32xf32> to vector<32xf32>
      %171 = vector.shape_cast %170 : vector<32xf32> to vector<1x32xf32>
      %172 = vector.broadcast %171 : vector<1x32xf32> to vector<8x32xf32>
      %173 = arith.addf %167, %172 : vector<8x32xf32>
      %174 = arith.index_cast %arg21 : i32 to index
      %c0_49 = arith.constant 0 : index
      %c0_50 = arith.constant 0 : index
      %175 = vector.load %arg11[%174, %c0_49, %c0_50] : memref<2x32x64xf32, #tpu.memory_space<vmem>>, vector<1x32x64xf32>
      %176 = vector.shape_cast %175 : vector<1x32x64xf32> to vector<32x64xf32>
      %cst_51 = arith.constant dense<0.000000e+00> : vector<12x64xf32>
      %177 = tpu.matmul %3, %176, %cst_51 {dimension_numbers = #tpu.dot_dimension_numbers<[1], [0], [0], [1], [0, 0, 1, 1], [], []>} : vector<12x32xf32>, vector<32x64xf32>, vector<12x64xf32> -> vector<12x64xf32>
      %178 = arith.index_cast %arg21 : i32 to index
      %c0_52 = arith.constant 0 : index
      %179 = vector.load %arg12[%178, %c0_52] : memref<2x64xf32, #tpu.memory_space<vmem>>, vector<1x64xf32>
      %180 = vector.shape_cast %179 : vector<1x64xf32> to vector<64xf32>
      %181 = vector.shape_cast %180 : vector<64xf32> to vector<1x64xf32>
      %182 = vector.broadcast %181 : vector<1x64xf32> to vector<12x64xf32>
      %183 = arith.addf %177, %182 : vector<12x64xf32>
      %184 = vector.extract_strided_slice %173 {offsets = [0, 0], sizes = [8, 8], strides = [1, 1]} : vector<8x32xf32> to vector<8x8xf32>
      %185 = vector.extract_strided_slice %173 {offsets = [0, 8], sizes = [8, 8], strides = [1, 1]} : vector<8x32xf32> to vector<8x8xf32>
      %186 = vector.extract_strided_slice %173 {offsets = [0, 16], sizes = [8, 8], strides = [1, 1]} : vector<8x32xf32> to vector<8x8xf32>
      %187 = vector.extract_strided_slice %173 {offsets = [0, 24], sizes = [8, 8], strides = [1, 1]} : vector<8x32xf32> to vector<8x8xf32>
      %188 = vector.shape_cast %184 : vector<8x8xf32> to vector<1x8x8xf32>
      %189 = vector.shape_cast %185 : vector<8x8xf32> to vector<1x8x8xf32>
      %190 = vector.shape_cast %186 : vector<8x8xf32> to vector<1x8x8xf32>
      %191 = vector.shape_cast %187 : vector<8x8xf32> to vector<1x8x8xf32>
      %192 = tpu.concatenate %188, %189, %190, %191 in 0 : vector<1x8x8xf32>, vector<1x8x8xf32>, vector<1x8x8xf32>, vector<1x8x8xf32> -> vector<4x8x8xf32>
      %193 = vector.extract_strided_slice %183 {offsets = [0, 0], sizes = [12, 8], strides = [1, 1]} : vector<12x64xf32> to vector<12x8xf32>
      %194 = vector.extract_strided_slice %183 {offsets = [0, 8], sizes = [12, 8], strides = [1, 1]} : vector<12x64xf32> to vector<12x8xf32>
      %195 = vector.extract_strided_slice %183 {offsets = [0, 16], sizes = [12, 8], strides = [1, 1]} : vector<12x64xf32> to vector<12x8xf32>
      %196 = vector.extract_strided_slice %183 {offsets = [0, 24], sizes = [12, 8], strides = [1, 1]} : vector<12x64xf32> to vector<12x8xf32>
      %197 = vector.shape_cast %193 : vector<12x8xf32> to vector<1x12x8xf32>
      %198 = vector.shape_cast %194 : vector<12x8xf32> to vector<1x12x8xf32>
      %199 = vector.shape_cast %195 : vector<12x8xf32> to vector<1x12x8xf32>
      %200 = vector.shape_cast %196 : vector<12x8xf32> to vector<1x12x8xf32>
      %201 = tpu.concatenate %197, %198, %199, %200 in 0 : vector<1x12x8xf32>, vector<1x12x8xf32>, vector<1x12x8xf32>, vector<1x12x8xf32> -> vector<4x12x8xf32>
      %202 = vector.extract_strided_slice %183 {offsets = [0, 32], sizes = [12, 8], strides = [1, 1]} : vector<12x64xf32> to vector<12x8xf32>
      %203 = vector.extract_strided_slice %183 {offsets = [0, 40], sizes = [12, 8], strides = [1, 1]} : vector<12x64xf32> to vector<12x8xf32>
      %204 = vector.extract_strided_slice %183 {offsets = [0, 48], sizes = [12, 8], strides = [1, 1]} : vector<12x64xf32> to vector<12x8xf32>
      %205 = vector.extract_strided_slice %183 {offsets = [0, 56], sizes = [12, 8], strides = [1, 1]} : vector<12x64xf32> to vector<12x8xf32>
      %206 = vector.shape_cast %202 : vector<12x8xf32> to vector<1x12x8xf32>
      %207 = vector.shape_cast %203 : vector<12x8xf32> to vector<1x12x8xf32>
      %208 = vector.shape_cast %204 : vector<12x8xf32> to vector<1x12x8xf32>
      %209 = vector.shape_cast %205 : vector<12x8xf32> to vector<1x12x8xf32>
      %210 = tpu.concatenate %206, %207, %208, %209 in 0 : vector<1x12x8xf32>, vector<1x12x8xf32>, vector<1x12x8xf32>, vector<1x12x8xf32> -> vector<4x12x8xf32>
      %211 = arith.index_cast %arg21 : i32 to index
      %c0_53 = arith.constant 0 : index
      %c0_54 = arith.constant 0 : index
      %212 = vector.load %arg13[%211, %c0_53, %c0_54] : memref<2x32x32xf32, #tpu.memory_space<vmem>>, vector<1x32x32xf32>
      %213 = vector.shape_cast %212 : vector<1x32x32xf32> to vector<32x32xf32>
      %214 = arith.index_cast %arg21 : i32 to index
      %c0_55 = arith.constant 0 : index
      %215 = vector.load %arg14[%214, %c0_55] : memref<2x32xf32, #tpu.memory_space<vmem>>, vector<1x32xf32>
      %216 = vector.shape_cast %215 : vector<1x32xf32> to vector<32xf32>
      "tpu.trace_start"() <{level = 10 : i32, message = "hqd,hkd->hqk"}> : () -> ()
      %cst_56 = arith.constant dense<0.000000e+00> : vector<4x8x12xf32>
      %217 = tpu.matmul %192, %201, %cst_56 {dimension_numbers = #tpu.dot_dimension_numbers<[2], [2], [1], [1], [0, 0, 0, 1, 1, 1], [0], [0]>} : vector<4x8x8xf32>, vector<4x12x8xf32>, vector<4x8x12xf32> -> vector<4x8x12xf32>
      "tpu.trace_stop"() : () -> ()
      %218 = vector.shape_cast %5 : vector<1x12xf32> to vector<1x1x12xf32>
      %219 = vector.broadcast %218 : vector<1x1x12xf32> to vector<4x8x12xf32>
      %220 = arith.addf %217, %219 : vector<4x8x12xf32>
      %cst_57 = arith.constant dense<0xFF800000> : vector<4x8xf32>
      %221 = vector.multi_reduction <maximumf>, %220, %cst_57 [2] : vector<4x8x12xf32> to vector<4x8xf32>
      %222 = vector.shape_cast %221 : vector<4x8xf32> to vector<4x8x1xf32>
      %223 = vector.broadcast %222 : vector<4x8x1xf32> to vector<4x8x12xf32>
      %224 = arith.subf %220, %223 : vector<4x8x12xf32>
      %225 = math.exp %224 : vector<4x8x12xf32>
      %cst_58 = arith.constant dense<0.000000e+00> : vector<4x8xf32>
      %226 = vector.multi_reduction <add>, %225, %cst_58 [2] : vector<4x8x12xf32> to vector<4x8xf32>
      %227 = vector.shape_cast %226 : vector<4x8xf32> to vector<4x8x1xf32>
      %228 = tpu.reciprocal %227 {approx = true} : vector<4x8x1xf32> -> vector<4x8x1xf32>
      %229 = vector.broadcast %228 : vector<4x8x1xf32> to vector<4x8x12xf32>
      %230 = arith.mulf %225, %229 : vector<4x8x12xf32>
      "tpu.trace_start"() <{level = 10 : i32, message = "hqk,hkd->hqd"}> : () -> ()
      %cst_59 = arith.constant dense<0.000000e+00> : vector<4x8x8xf32>
      %231 = tpu.matmul %230, %210, %cst_59 {dimension_numbers = #tpu.dot_dimension_numbers<[2], [1], [1], [2], [0, 0, 0, 1, 1, 2], [0], [0]>} : vector<4x8x12xf32>, vector<4x12x8xf32>, vector<4x8x8xf32> -> vector<4x8x8xf32>
      "tpu.trace_stop"() : () -> ()
      %232 = vector.extract_strided_slice %231 {offsets = [0, 0, 0], sizes = [1, 8, 8], strides = [1, 1, 1]} : vector<4x8x8xf32> to vector<1x8x8xf32>
      %233 = vector.shape_cast %232 : vector<1x8x8xf32> to vector<8x8xf32>
      %234 = vector.extract_strided_slice %231 {offsets = [1, 0, 0], sizes = [1, 8, 8], strides = [1, 1, 1]} : vector<4x8x8xf32> to vector<1x8x8xf32>
      %235 = vector.shape_cast %234 : vector<1x8x8xf32> to vector<8x8xf32>
      %236 = vector.extract_strided_slice %231 {offsets = [2, 0, 0], sizes = [1, 8, 8], strides = [1, 1, 1]} : vector<4x8x8xf32> to vector<1x8x8xf32>
      %237 = vector.shape_cast %236 : vector<1x8x8xf32> to vector<8x8xf32>
      %238 = vector.extract_strided_slice %231 {offsets = [3, 0, 0], sizes = [1, 8, 8], strides = [1, 1, 1]} : vector<4x8x8xf32> to vector<1x8x8xf32>
      %239 = vector.shape_cast %238 : vector<1x8x8xf32> to vector<8x8xf32>
      %240 = tpu.concatenate %233, %235, %237, %239 in 1 : vector<8x8xf32>, vector<8x8xf32>, vector<8x8xf32>, vector<8x8xf32> -> vector<8x32xf32>
      %cst_60 = arith.constant dense<0.000000e+00> : vector<8x32xf32>
      %241 = tpu.matmul %240, %213, %cst_60 {dimension_numbers = #tpu.dot_dimension_numbers<[1], [0], [0], [1], [0, 0, 1, 1], [], []>} : vector<8x32xf32>, vector<32x32xf32>, vector<8x32xf32> -> vector<8x32xf32>
      %242 = vector.shape_cast %216 : vector<32xf32> to vector<1x32xf32>
      %243 = vector.broadcast %242 : vector<1x32xf32> to vector<8x32xf32>
      %244 = arith.addf %241, %243 : vector<8x32xf32>
      %245 = arith.addf %134, %244 : vector<8x32xf32>
      %c6_i32_61 = arith.constant 6 : i32
      %246 = arith.muli %c6_i32_61, %arg21 : i32
      %c4_i32 = arith.constant 4 : i32
      %247 = arith.addi %246, %c4_i32 : i32
      %248 = arith.index_cast %247 : i32 to index
      %249 = memref.load %arg19[%248] : memref<14xf32, #tpu.memory_space<smem>>
      %c6_i32_62 = arith.constant 6 : i32
      %250 = arith.muli %c6_i32_62, %arg21 : i32
      %c5_i32 = arith.constant 5 : i32
      %251 = arith.addi %250, %c5_i32 : i32
      %252 = arith.index_cast %251 : i32 to index
      %253 = memref.load %arg19[%252] : memref<14xf32, #tpu.memory_space<smem>>
      %cst_63 = arith.constant dense<0.000000e+00> : vector<8xf32>
      %254 = vector.multi_reduction <add>, %245, %cst_63 [1] : vector<8x32xf32> to vector<8xf32>
      %255 = vector.shape_cast %254 : vector<8xf32> to vector<8x1xf32>
      %cst_64 = arith.constant 3.200000e+01 : f32
      %256 = vector.broadcast %cst_64 : f32 to vector<8x1xf32>
      %257 = arith.divf %255, %256 : vector<8x1xf32>
      %258 = vector.broadcast %257 : vector<8x1xf32> to vector<8x32xf32>
      %259 = arith.subf %245, %258 : vector<8x32xf32>
      %260 = arith.mulf %259, %259 : vector<8x32xf32>
      %cst_65 = arith.constant dense<0.000000e+00> : vector<8xf32>
      %261 = vector.multi_reduction <add>, %260, %cst_65 [1] : vector<8x32xf32> to vector<8xf32>
      %262 = vector.shape_cast %261 : vector<8xf32> to vector<8x1xf32>
      %cst_66 = arith.constant 0.0322580636 : f32
      %263 = vector.broadcast %cst_66 : f32 to vector<8x1xf32>
      %264 = arith.mulf %262, %263 : vector<8x1xf32>
      %265 = math.sqrt %264 : vector<8x1xf32>
      %cst_67 = arith.constant 9.99999997E-7 : f32
      %266 = vector.broadcast %cst_67 : f32 to vector<8x1xf32>
      %267 = arith.addf %265, %266 : vector<8x1xf32>
      %268 = tpu.reciprocal %267 : vector<8x1xf32> -> vector<8x1xf32>
      %269 = vector.broadcast %249 : f32 to vector<8x32xf32>
      %270 = arith.mulf %269, %259 : vector<8x32xf32>
      %271 = vector.broadcast %268 : vector<8x1xf32> to vector<8x32xf32>
      %272 = arith.mulf %270, %271 : vector<8x32xf32>
      %273 = vector.broadcast %253 : f32 to vector<8x32xf32>
      %274 = arith.addf %272, %273 : vector<8x32xf32>
      %275 = arith.index_cast %arg21 : i32 to index
      %c0_68 = arith.constant 0 : index
      %c0_69 = arith.constant 0 : index
      %276 = vector.load %arg15[%275, %c0_68, %c0_69] : memref<2x32x64xf32, #tpu.memory_space<vmem>>, vector<1x32x64xf32>
      %277 = vector.shape_cast %276 : vector<1x32x64xf32> to vector<32x64xf32>
      %cst_70 = arith.constant dense<0.000000e+00> : vector<8x64xf32>
      %278 = tpu.matmul %274, %277, %cst_70 {dimension_numbers = #tpu.dot_dimension_numbers<[1], [0], [0], [1], [0, 0, 1, 1], [], []>} : vector<8x32xf32>, vector<32x64xf32>, vector<8x64xf32> -> vector<8x64xf32>
      %279 = arith.index_cast %arg21 : i32 to index
      %c0_71 = arith.constant 0 : index
      %280 = vector.load %arg16[%279, %c0_71] : memref<2x64xf32, #tpu.memory_space<vmem>>, vector<1x64xf32>
      %281 = vector.shape_cast %280 : vector<1x64xf32> to vector<64xf32>
      %282 = vector.shape_cast %281 : vector<64xf32> to vector<1x64xf32>
      %283 = vector.broadcast %282 : vector<1x64xf32> to vector<8x64xf32>
      %284 = arith.addf %278, %283 : vector<8x64xf32>
      %cst_72 = arith.constant 0.000000e+00 : f32
      %285 = vector.broadcast %cst_72 : f32 to vector<8x64xf32>
      %286 = arith.maximumf %284, %285 : vector<8x64xf32>
      %287 = arith.index_cast %arg21 : i32 to index
      %c0_73 = arith.constant 0 : index
      %c0_74 = arith.constant 0 : index
      %288 = vector.load %arg17[%287, %c0_73, %c0_74] : memref<2x64x32xf32, #tpu.memory_space<vmem>>, vector<1x64x32xf32>
      %289 = vector.shape_cast %288 : vector<1x64x32xf32> to vector<64x32xf32>
      %cst_75 = arith.constant dense<0.000000e+00> : vector<8x32xf32>
      %290 = tpu.matmul %286, %289, %cst_75 {dimension_numbers = #tpu.dot_dimension_numbers<[1], [0], [0], [1], [0, 0, 1, 1], [], []>} : vector<8x64xf32>, vector<64x32xf32>, vector<8x32xf32> -> vector<8x32xf32>
      %291 = arith.addf %245, %290 : vector<8x32xf32>
      %292 = arith.index_cast %arg21 : i32 to index
      %c0_76 = arith.constant 0 : index
      %293 = vector.load %arg18[%292, %c0_76] : memref<2x32xf32, #tpu.memory_space<vmem>>, vector<1x32xf32>
      %294 = vector.shape_cast %293 : vector<1x32xf32> to vector<32xf32>
      %295 = vector.shape_cast %294 : vector<32xf32> to vector<1x32xf32>
      %296 = vector.broadcast %295 : vector<1x32xf32> to vector<8x32xf32>
      %297 = arith.addf %291, %296 : vector<8x32xf32>
      scf.yield %297 : vector<8x32xf32>
    }
    %c2_i32_9 = arith.constant 2 : i32
    %c12 = arith.constant 12 : index
    %8 = memref.load %arg19[%c12] : memref<14xf32, #tpu.memory_space<smem>>
    %c13 = arith.constant 13 : index
    %9 = memref.load %arg19[%c13] : memref<14xf32, #tpu.memory_space<smem>>
    %cst = arith.constant dense<0.000000e+00> : vector<8xf32>
    %10 = vector.multi_reduction <add>, %7, %cst [1] : vector<8x32xf32> to vector<8xf32>
    %11 = vector.shape_cast %10 : vector<8xf32> to vector<8x1xf32>
    %cst_10 = arith.constant 3.200000e+01 : f32
    %12 = vector.broadcast %cst_10 : f32 to vector<8x1xf32>
    %13 = arith.divf %11, %12 : vector<8x1xf32>
    %14 = vector.broadcast %13 : vector<8x1xf32> to vector<8x32xf32>
    %15 = arith.subf %7, %14 : vector<8x32xf32>
    %16 = arith.mulf %15, %15 : vector<8x32xf32>
    %cst_11 = arith.constant dense<0.000000e+00> : vector<8xf32>
    %17 = vector.multi_reduction <add>, %16, %cst_11 [1] : vector<8x32xf32> to vector<8xf32>
    %18 = vector.shape_cast %17 : vector<8xf32> to vector<8x1xf32>
    %cst_12 = arith.constant 0.0322580636 : f32
    %19 = vector.broadcast %cst_12 : f32 to vector<8x1xf32>
    %20 = arith.mulf %18, %19 : vector<8x1xf32>
    %21 = math.sqrt %20 : vector<8x1xf32>
    %cst_13 = arith.constant 9.99999997E-7 : f32
    %22 = vector.broadcast %cst_13 : f32 to vector<8x1xf32>
    %23 = arith.addf %21, %22 : vector<8x1xf32>
    %24 = tpu.reciprocal %23 : vector<8x1xf32> -> vector<8x1xf32>
    %25 = vector.broadcast %8 : f32 to vector<8x32xf32>
    %26 = arith.mulf %25, %15 : vector<8x32xf32>
    %27 = vector.broadcast %24 : vector<8x1xf32> to vector<8x32xf32>
    %28 = arith.mulf %26, %27 : vector<8x32xf32>
    %29 = vector.broadcast %9 : f32 to vector<8x32xf32>
    %30 = arith.addf %28, %29 : vector<8x32xf32>
    %c0_14 = arith.constant 0 : index
    %c0_15 = arith.constant 0 : index
    %c0_16 = arith.constant 0 : index
    %31 = vector.load %arg20[%c0_14, %c0_15, %c0_16] : memref<1x8x32xf32, #tpu.memory_space<vmem>>, vector<1x8x32xf32>
    %32 = vector.shape_cast %31 : vector<1x8x32xf32> to vector<8x32xf32>
    %33 = vector.shape_cast %30 : vector<8x32xf32> to vector<1x8x32xf32>
    tpu.vector_store %arg20[%c0_14, %c0_15, %c0_16], %33 {strides = array<i32>} : memref<1x8x32xf32, #tpu.memory_space<vmem>>, vector<1x8x32xf32>,
    return
  }
  func.func @transform_0(%arg0: i32) -> (i32, i32, i32) {
    %c0_i32 = arith.constant 0 : i32
    %c0_i32_0 = arith.constant 0 : i32
    %c0_i32_1 = arith.constant 0 : i32
    return %arg0, %c0_i32, %c0_i32_0 : i32, i32, i32
  }
  func.func @transform_1(%arg0: i32) -> (i32, i32, i32) {
    %c0_i32 = arith.constant 0 : i32
    %c0_i32_0 = arith.constant 0 : i32
    %c0_i32_1 = arith.constant 0 : i32
    return %arg0, %c0_i32, %c0_i32_0 : i32, i32, i32
  }
  func.func @transform_2(%arg0: i32) -> (i32, i32) {
    %c0_i32 = arith.constant 0 : i32
    %c0_i32_0 = arith.constant 0 : i32
    %c0_i32_1 = arith.constant 0 : i32
    return %c0_i32, %c0_i32_0 : i32, i32
  }
  func.func @transform_3(%arg0: i32) -> (i32, i32) {
    %c0_i32 = arith.constant 0 : i32
    %c0_i32_0 = arith.constant 0 : i32
    %c0_i32_1 = arith.constant 0 : i32
    return %c0_i32, %c0_i32_0 : i32, i32
  }
  func.func @transform_4(%arg0: i32) -> (i32, i32, i32) {
    %c0_i32 = arith.constant 0 : i32
    %c0_i32_0 = arith.constant 0 : i32
    %c0_i32_1 = arith.constant 0 : i32
    %c0_i32_2 = arith.constant 0 : i32
    return %c0_i32, %c0_i32_0, %c0_i32_1 : i32, i32, i32
  }
  func.func @transform_5(%arg0: i32) -> (i32, i32) {
    %c0_i32 = arith.constant 0 : i32
    %c0_i32_0 = arith.constant 0 : i32
    %c0_i32_1 = arith.constant 0 : i32
    return %c0_i32, %c0_i32_0 : i32, i32
  }
  func.func @transform_6(%arg0: i32) -> (i32, i32, i32) {
    %c0_i32 = arith.constant 0 : i32
    %c0_i32_0 = arith.constant 0 : i32
    %c0_i32_1 = arith.constant 0 : i32
    %c0_i32_2 = arith.constant 0 : i32
    return %c0_i32, %c0_i32_0, %c0_i32_1 : i32, i32, i32
  }
  func.func @transform_7(%arg0: i32) -> (i32, i32) {
    %c0_i32 = arith.constant 0 : i32
    %c0_i32_0 = arith.constant 0 : i32
    %c0_i32_1 = arith.constant 0 : i32
    return %c0_i32, %c0_i32_0 : i32, i32
  }
  func.func @transform_8(%arg0: i32) -> (i32, i32, i32) {
    %c0_i32 = arith.constant 0 : i32
    %c0_i32_0 = arith.constant 0 : i32
    %c0_i32_1 = arith.constant 0 : i32
    %c0_i32_2 = arith.constant 0 : i32
    return %c0_i32, %c0_i32_0, %c0_i32_1 : i32, i32, i32
  }
  func.func @transform_9(%arg0: i32) -> (i32, i32) {
    %c0_i32 = arith.constant 0 : i32
    %c0_i32_0 = arith.constant 0 : i32
    %c0_i32_1 = arith.constant 0 : i32
    return %c0_i32, %c0_i32_0 : i32, i32
  }
  func.func @transform_10(%arg0: i32) -> (i32, i32, i32) {
    %c0_i32 = arith.constant 0 : i32
    %c0_i32_0 = arith.constant 0 : i32
    %c0_i32_1 = arith.constant 0 : i32
    %c0_i32_2 = arith.constant 0 : i32
    return %c0_i32, %c0_i32_0, %c0_i32_1 : i32, i32, i32
  }
  func.func @transform_11(%arg0: i32) -> (i32, i32) {
    %c0_i32 = arith.constant 0 : i32
    %c0_i32_0 = arith.constant 0 : i32
    %c0_i32_1 = arith.constant 0 : i32
    return %c0_i32, %c0_i32_0 : i32, i32
  }
  func.func @transform_12(%arg0: i32) -> (i32, i32, i32) {
    %c0_i32 = arith.constant 0 : i32
    %c0_i32_0 = arith.constant 0 : i32
    %c0_i32_1 = arith.constant 0 : i32
    %c0_i32_2 = arith.constant 0 : i32
    return %c0_i32, %c0_i32_0, %c0_i32_1 : i32, i32, i32
  }
  func.func @transform_13(%arg0: i32) -> (i32, i32) {
    %c0_i32 = arith.constant 0 : i32
    %c0_i32_0 = arith.constant 0 : i32
    %c0_i32_1 = arith.constant 0 : i32
    return %c0_i32, %c0_i32_0 : i32, i32
  }
  func.func @transform_14(%arg0: i32) -> (i32, i32, i32) {
    %c0_i32 = arith.constant 0 : i32
    %c0_i32_0 = arith.constant 0 : i32
    %c0_i32_1 = arith.constant 0 : i32
    %c0_i32_2 = arith.constant 0 : i32
    return %c0_i32, %c0_i32_0, %c0_i32_1 : i32, i32, i32
  }
  func.func @transform_15(%arg0: i32) -> (i32, i32) {
    %c0_i32 = arith.constant 0 : i32
    %c0_i32_0 = arith.constant 0 : i32
    %c0_i32_1 = arith.constant 0 : i32
    return %c0_i32, %c0_i32_0 : i32, i32
  }
  func.func @transform_16(%arg0: i32) -> (i32, i32, i32) {
    %c0_i32 = arith.constant 0 : i32
    %c0_i32_0 = arith.constant 0 : i32
    %c0_i32_1 = arith.constant 0 : i32
    %c0_i32_2 = arith.constant 0 : i32
    return %c0_i32, %c0_i32_0, %c0_i32_1 : i32, i32, i32
  }
  func.func @transform_17(%arg0: i32) -> (i32, i32) {
    %c0_i32 = arith.constant 0 : i32
    %c0_i32_0 = arith.constant 0 : i32
    %c0_i32_1 = arith.constant 0 : i32
    return %c0_i32, %c0_i32_0 : i32, i32
  }
  func.func @transform_18(%arg0: i32) -> i32 {
    %c0_i32 = arith.constant 0 : i32
    %c0_i32_0 = arith.constant 0 : i32
    return %c0_i32 : i32
  }
  func.func @transform_19(%arg0: i32) -> (i32, i32, i32) {
    %c0_i32 = arith.constant 0 : i32
    %c0_i32_0 = arith.constant 0 : i32
    %c0_i32_1 = arith.constant 0 : i32
    return %arg0, %c0_i32, %c0_i32_0 : i32, i32, i32
  }
}

</mosaic_0001>

<llo_original>
// kernel: tpu_custom_call.1
$region0: #{tpu_custom_call.1}
  #allocation0 [shape = 'u32[]', space=smem, size = 0x4, offset = 0x4, fixed_abs, tag = 'smem constant byte address 0x4 - core index']
  #allocation1 [shape = 'u32[144,128]{1,0:T(1,128)}', space=vmem, size = 0x12000, scoped, tag = 'internal scratch']
  %s0 = inlined_call_operand.vmem [shape: f32[2,8,32], index: 0, kind: input, shape index: {}]
  %s1 = inlined_call_operand.vmem [shape: f32[2,12,32], index: 1, kind: input, shape index: {}]
  %s2 = inlined_call_operand.vmem [shape: f32[8,8], index: 2, kind: input, shape index: {}]
  %s3 = inlined_call_operand.vmem [shape: f32[1,12], index: 3, kind: input, shape index: {}]
  %s4 = inlined_call_operand.vmem [shape: f32[2,32,96], index: 4, kind: input, shape index: {}]
  %s5 = inlined_call_operand.vmem [shape: f32[2,96], index: 5, kind: input, shape index: {}]
  %s6 = inlined_call_operand.vmem [shape: f32[2,32,32], index: 6, kind: input, shape index: {}]
  %s7 = inlined_call_operand.vmem [shape: f32[2,32], index: 7, kind: input, shape index: {}]
  %s8 = inlined_call_operand.vmem [shape: f32[2,32,32], index: 8, kind: input, shape index: {}]
  %s9 = inlined_call_operand.vmem [shape: f32[2,32], index: 9, kind: input, shape index: {}]
  %s10 = inlined_call_operand.hbm [shape: f32[2,32,64], index: 10, kind: input, shape index: {}]
  %s11 = inlined_call_operand.vmem [shape: f32[2,64], index: 11, kind: input, shape index: {}]
  %s12 = inlined_call_operand.hbm [shape: f32[2,32,32], index: 12, kind: input, shape index: {}]
  %s13 = inlined_call_operand.vmem [shape: f32[2,32], index: 13, kind: input, shape index: {}]
  %s14 = inlined_call_operand.hbm [shape: f32[2,32,64], index: 14, kind: input, shape index: {}]
  %s15 = inlined_call_operand.vmem [shape: f32[2,64], index: 15, kind: input, shape index: {}]
  %s16 = inlined_call_operand.vmem [shape: f32[2,64,32], index: 16, kind: input, shape index: {}]
  %s17 = inlined_call_operand.vmem [shape: f32[2,32], index: 17, kind: input, shape index: {}]
  %s18 = inlined_call_operand.vmem [shape: f32[14], index: 18, kind: input, shape index: {}]
  %s19 = inlined_call_operand.hbm [shape: f32[2,8,32], index: 19, kind: output, shape index: {}]
  %s20 = sld [smem:[#allocation0]]
  $region132: #{tpu_custom_call.1} parent=0
    _
  %s22 = ssub.s32 1, %s20
  %s23 = scalar_select 0, %s22, %s20
  $region1: #{tpu_custom_call.1} parent=0
    #allocation2 [shape = 'u8[32768]{0}', space=vmem, size = 0x8000, scoped, tag = 'input window, operand 10, single buffered']
    #allocation3 [shape = 's32[2]{0}', space=sflag, size = 0x8, scoped, tag = 'scoped memory for tpu_custom_call.1']
    #allocation4 [shape = 's32[2]{0}', space=sflag, size = 0x8, scoped, tag = 'scoped memory for tpu_custom_call.1']
    #allocation5 [shape = 's32[2]{0}', space=sflag, size = 0x8, scoped, tag = 'scoped memory for tpu_custom_call.1']
    #allocation6 [shape = 'u8[32768]{0}', space=vmem, size = 0x8000, scoped, tag = 'input window, operand 12, single buffered']
    #allocation7 [shape = 's32[1]{0}', space=sflag, size = 0x4, scoped, tag = 'scoped memory for tpu_custom_call.1']
    #allocation8 [shape = 'u8[32768]{0}', space=vmem, size = 0x8000, scoped, tag = 'input window, operand 14, single buffered']
    #allocation9 [shape = 'u8[512]{0}', space=smem, size = 0x200, scoped, tag = 'input window, operand 18, single buffered']
    #allocation10 [shape = 'u8[8192]{0}', space=vmem, size = 0x2000, scoped, tag = 'output window, operand 0']
    %24 = vsyncpa [#allocation3], 0
    %25 = vsyncpa [#allocation7], 0
    %26 = vsyncpa [#allocation5], 0
    %27 = vsyncpa [#allocation4], 0
    %s28 = scalar_lea.sflag [#allocation4], 1
    %29 = vsyncpa %s28, 0
    loop: start=0, step=1, limit=4
    $region2: #{tpu_custom_call.1} parent=1 // loop_pre_header
      _
    $region3: #{tpu_custom_call.1} parent=1 // loop_header
      %s31 = sphi 0, %s35
      %p32 = scmp.ge.s32.totalorder %s31, 4
      %s41 = sphi 0, %s43
      %s44 = sphi 0, %s41
      %s45 = sphi 0, %s44
      %s61 = sphi 0, %s45
      %s67 = sphi 0, %s69
      %s70 = sphi 0, %s67
      %s71 = sphi 0, %s70
      %s87 = sphi 0, %s71
      %s91 = sphi 0, %s91
      %s93 = sphi 0, %s91
      %s94 = sphi 0, %s93
      %s108 = sphi 0, %s94
      %s112 = sphi 0, %s112
      %s114 = sphi 0, %s112
      %s115 = sphi 0, %s114
      %s129 = sphi 0, %s115
      %s133 = sphi 0, %s133
      %s135 = sphi 0, %s133
      %s136 = sphi 0, %s135
      %s150 = sphi 0, %s136
      %s154 = sphi 0, %s154
      %s156 = sphi 0, %s154
      %s157 = sphi 0, %s156
      %s171 = sphi 0, %s157
      %s175 = sphi 0, %s175
      %s177 = sphi 0, %s175
      %s178 = sphi 0, %s177
      %s192 = sphi 0, %s178
      %s196 = sphi 0, %s196
      %s198 = sphi 0, %s196
      %s199 = sphi 0, %s198
      %s213 = sphi 0, %s199
      %s217 = sphi 0, %s217
      %s219 = sphi 0, %s217
      %s220 = sphi 0, %s219
      %s234 = sphi 0, %s220
      %s238 = sphi 0, %s238
      %s240 = sphi 0, %s238
      %s241 = sphi 0, %s240
      %s255 = sphi 0, %s241
      %s259 = sphi 0, %s259
      %s261 = sphi 0, %s259
      %s262 = sphi 0, %s261
      %s276 = sphi 0, %s262
      %s280 = sphi 0, %s280
      %s282 = sphi 0, %s280
      %s283 = sphi 0, %s282
      %s297 = sphi 0, %s283
      %s301 = sphi 0, %s301
      %s303 = sphi 0, %s301
      %s304 = sphi 0, %s303
      %s318 = sphi 0, %s304
      %s322 = sphi 0, %s322
      %s324 = sphi 0, %s322
      %s325 = sphi 0, %s324
      %s339 = sphi 0, %s325
      %s343 = sphi 0, %s343
      %s345 = sphi 0, %s343
      %s346 = sphi 0, %s345
      %s360 = sphi 0, %s346
      %s364 = sphi 0, %s364
      %s366 = sphi 0, %s364
      %s367 = sphi 0, %s366
      %s381 = sphi 0, %s367
      %s385 = sphi 0, %s385
      %s387 = sphi 0, %s385
      %s388 = sphi 0, %s387
      %s402 = sphi 0, %s388
      %s406 = sphi 0, %s406
      %s408 = sphi 0, %s406
      %s409 = sphi 0, %s408
      %s423 = sphi 0, %s409
      %s427 = sphi 0, %s427
      %s429 = sphi 0, %s427
      %s430 = sphi 0, %s429
      %s444 = sphi 0, %s430
      %s450 = sphi 0, %s452
      %s453 = sphi 0, %s450
      %s454 = sphi 0, %s453
      %s470 = sphi 0, %s454
    $region4: #{tpu_custom_call.1} parent=1 // loop_header_branch
      %34 = sbr.rel (%p32) target = $region8
    $region5: #{tpu_custom_call.1} parent=1 // loop_body
      %s36 = ssub.s32 %s31, 1
      %s37 = ssub.s32 %s31, 2
      %s38 = sadd.s32 %s31, 1
      %s39 = ssub.s32 %s31, %s38
      %p40 = scmp.eq.s32.totalorder %s39, 0
      %s42 = sadd.s32 %s41, 1
      %s43 = scalar_select %p40, %s41, %s42
      %p46 = pneg %p40
      %p47 = scmp.eq.s32.totalorder %s31, 1
      %p48 = por %p46, %p47
      %p49 = scmp.ne.s32.totalorder %s41, %s44
      %p50 = scmp.eq.s32.totalorder %s31, 0
      %p51 = por %p49, %p50
      %p52 = scmp.ne.s32.totalorder %s41, %s44
      %p53 = scmp.eq.s32.totalorder %s36, 1
      %p54 = por %p52, %p53
      %p55 = scmp.ne.s32.totalorder %s44, %s45
      %p56 = scmp.eq.s32.totalorder %s36, 0
      %p57 = por %p55, %p56
      %p58 = scmp.ne.s32.totalorder %s44, %s45
      %p59 = scmp.eq.s32.totalorder %s37, 1
      %p60 = por %p58, %p59
      %p62 = scmp.ne.s32.totalorder %s45, %s61
      %p63 = scmp.eq.s32.totalorder %s37, 0
      %p64 = por %p62, %p63
      %s65 = ssub.s32 %s31, %s38
      %p66 = scmp.eq.s32.totalorder %s65, 0
      %s68 = sadd.s32 %s67, 1
      %s69 = scalar_select %p66, %s67, %s68
      %p72 = pneg %p66
      %p73 = scmp.eq.s32.totalorder %s31, 1
      %p74 = por %p72, %p73
      %p75 = scmp.ne.s32.totalorder %s67, %s70
      %p76 = scmp.eq.s32.totalorder %s31, 0
      %p77 = por %p75, %p76
      %p78 = scmp.ne.s32.totalorder %s67, %s70
      %p79 = scmp.eq.s32.totalorder %s36, 1
      %p80 = por %p78, %p79
      %p81 = scmp.ne.s32.totalorder %s70, %s71
      %p82 = scmp.eq.s32.totalorder %s36, 0
      %p83 = por %p81, %p82
      %p84 = scmp.ne.s32.totalorder %s70, %s71
      %p85 = scmp.eq.s32.totalorder %s37, 1
      %p86 = por %p84, %p85
      %p88 = scmp.ne.s32.totalorder %s71, %s87
      %p89 = scmp.eq.s32.totalorder %s37, 0
      %p90 = por %p88, %p89
      %s92 = sadd.s32 %s91, 1
      %p95 = scmp.eq.s32.totalorder %s31, 1
      %p96 = scmp.ne.s32.totalorder %s91, %s93
      %p97 = scmp.eq.s32.totalorder %s31, 0
      %p98 = por %p96, %p97
      %p99 = scmp.ne.s32.totalorder %s91, %s93
      %p100 = scmp.eq.s32.totalorder %s36, 1
      %p101 = por %p99, %p100
      %p102 = scmp.ne.s32.totalorder %s93, %s94
      %p103 = scmp.eq.s32.totalorder %s36, 0
      %p104 = por %p102, %p103
      %p105 = scmp.ne.s32.totalorder %s93, %s94
      %p106 = scmp.eq.s32.totalorder %s37, 1
      %p107 = por %p105, %p106
      %p109 = scmp.ne.s32.totalorder %s94, %s108
      %p110 = scmp.eq.s32.totalorder %s37, 0
      %p111 = por %p109, %p110
      %s113 = sadd.s32 %s112, 1
      %p116 = scmp.eq.s32.totalorder %s31, 1
      %p117 = scmp.ne.s32.totalorder %s112, %s114
      %p118 = scmp.eq.s32.totalorder %s31, 0
      %p119 = por %p117, %p118
      %p120 = scmp.ne.s32.totalorder %s112, %s114
      %p121 = scmp.eq.s32.totalorder %s36, 1
      %p122 = por %p120, %p121
      %p123 = scmp.ne.s32.totalorder %s114, %s115
      %p124 = scmp.eq.s32.totalorder %s36, 0
      %p125 = por %p123, %p124
      %p126 = scmp.ne.s32.totalorder %s114, %s115
      %p127 = scmp.eq.s32.totalorder %s37, 1
      %p128 = por %p126, %p127
      %p130 = scmp.ne.s32.totalorder %s115, %s129
      %p131 = scmp.eq.s32.totalorder %s37, 0
      %p132 = por %p130, %p131
      %s134 = sadd.s32 %s133, 1
      %p137 = scmp.eq.s32.totalorder %s31, 1
      %p138 = scmp.ne.s32.totalorder %s133, %s135
      %p139 = scmp.eq.s32.totalorder %s31, 0
      %p140 = por %p138, %p139
      %p141 = scmp.ne.s32.totalorder %s133, %s135
      %p142 = scmp.eq.s32.totalorder %s36, 1
      %p143 = por %p141, %p142
      %p144 = scmp.ne.s32.totalorder %s135, %s136
      %p145 = scmp.eq.s32.totalorder %s36, 0
      %p146 = por %p144, %p145
      %p147 = scmp.ne.s32.totalorder %s135, %s136
      %p148 = scmp.eq.s32.totalorder %s37, 1
      %p149 = por %p147, %p148
      %p151 = scmp.ne.s32.totalorder %s136, %s150
      %p152 = scmp.eq.s32.totalorder %s37, 0
      %p153 = por %p151, %p152
      %s155 = sadd.s32 %s154, 1
      %p158 = scmp.eq.s32.totalorder %s31, 1
      %p159 = scmp.ne.s32.totalorder %s154, %s156
      %p160 = scmp.eq.s32.totalorder %s31, 0
      %p161 = por %p159, %p160
      %p162 = scmp.ne.s32.totalorder %s154, %s156
      %p163 = scmp.eq.s32.totalorder %s36, 1
      %p164 = por %p162, %p163
      %p165 = scmp.ne.s32.totalorder %s156, %s157
      %p166 = scmp.eq.s32.totalorder %s36, 0
      %p167 = por %p165, %p166
      %p168 = scmp.ne.s32.totalorder %s156, %s157
      %p169 = scmp.eq.s32.totalorder %s37, 1
      %p170 = por %p168, %p169
      %p172 = scmp.ne.s32.totalorder %s157, %s171
      %p173 = scmp.eq.s32.totalorder %s37, 0
      %p174 = por %p172, %p173
      %s176 = sadd.s32 %s175, 1
      %p179 = scmp.eq.s32.totalorder %s31, 1
      %p180 = scmp.ne.s32.totalorder %s175, %s177
      %p181 = scmp.eq.s32.totalorder %s31, 0
      %p182 = por %p180, %p181
      %p183 = scmp.ne.s32.totalorder %s175, %s177
      %p184 = scmp.eq.s32.totalorder %s36, 1
      %p185 = por %p183, %p184
      %p186 = scmp.ne.s32.totalorder %s177, %s178
      %p187 = scmp.eq.s32.totalorder %s36, 0
      %p188 = por %p186, %p187
      %p189 = scmp.ne.s32.totalorder %s177, %s178
      %p190 = scmp.eq.s32.totalorder %s37, 1
      %p191 = por %p189, %p190
      %p193 = scmp.ne.s32.totalorder %s178, %s192
      %p194 = scmp.eq.s32.totalorder %s37, 0
      %p195 = por %p193, %p194
      %s197 = sadd.s32 %s196, 1
      %p200 = scmp.eq.s32.totalorder %s31, 1
      %p201 = scmp.ne.s32.totalorder %s196, %s198
      %p202 = scmp.eq.s32.totalorder %s31, 0
      %p203 = por %p201, %p202
      %p204 = scmp.ne.s32.totalorder %s196, %s198
      %p205 = scmp.eq.s32.totalorder %s36, 1
      %p206 = por %p204, %p205
      %p207 = scmp.ne.s32.totalorder %s198, %s199
      %p208 = scmp.eq.s32.totalorder %s36, 0
      %p209 = por %p207, %p208
      %p210 = scmp.ne.s32.totalorder %s198, %s199
      %p211 = scmp.eq.s32.totalorder %s37, 1
      %p212 = por %p210, %p211
      %p214 = scmp.ne.s32.totalorder %s199, %s213
      %p215 = scmp.eq.s32.totalorder %s37, 0
      %p216 = por %p214, %p215
      %s218 = sadd.s32 %s217, 1
      %p221 = scmp.eq.s32.totalorder %s31, 1
      %p222 = scmp.ne.s32.totalorder %s217, %s219
      %p223 = scmp.eq.s32.totalorder %s31, 0
      %p224 = por %p222, %p223
      %p225 = scmp.ne.s32.totalorder %s217, %s219
      %p226 = scmp.eq.s32.totalorder %s36, 1
      %p227 = por %p225, %p226
      %p228 = scmp.ne.s32.totalorder %s219, %s220
      %p229 = scmp.eq.s32.totalorder %s36, 0
      %p230 = por %p228, %p229
      %p231 = scmp.ne.s32.totalorder %s219, %s220
      %p232 = scmp.eq.s32.totalorder %s37, 1
      %p233 = por %p231, %p232
      %p235 = scmp.ne.s32.totalorder %s220, %s234
      %p236 = scmp.eq.s32.totalorder %s37, 0
      %p237 = por %p235, %p236
      %s239 = sadd.s32 %s238, 1
      %p242 = scmp.eq.s32.totalorder %s31, 1
      %p243 = scmp.ne.s32.totalorder %s238, %s240
      %p244 = scmp.eq.s32.totalorder %s31, 0
      %p245 = por %p243, %p244
      %p246 = scmp.ne.s32.totalorder %s238, %s240
      %p247 = scmp.eq.s32.totalorder %s36, 1
      %p248 = por %p246, %p247
      %p249 = scmp.ne.s32.totalorder %s240, %s241
      %p250 = scmp.eq.s32.totalorder %s36, 0
      %p251 = por %p249, %p250
      %p252 = scmp.ne.s32.totalorder %s240, %s241
      %p253 = scmp.eq.s32.totalorder %s37, 1
      %p254 = por %p252, %p253
      %p256 = scmp.ne.s32.totalorder %s241, %s255
      %p257 = scmp.eq.s32.totalorder %s37, 0
      %p258 = por %p256, %p257
      %s260 = sadd.s32 %s259, 1
      %p263 = scmp.eq.s32.totalorder %s31, 1
      %p264 = scmp.ne.s32.totalorder %s259, %s261
      %p265 = scmp.eq.s32.totalorder %s31, 0
      %p266 = por %p264, %p265
      %p267 = scmp.ne.s32.totalorder %s259, %s261
      %p268 = scmp.eq.s32.totalorder %s36, 1
      %p269 = por %p267, %p268
      %p270 = scmp.ne.s32.totalorder %s261, %s262
      %p271 = scmp.eq.s32.totalorder %s36, 0
      %p272 = por %p270, %p271
      %p273 = scmp.ne.s32.totalorder %s261, %s262
      %p274 = scmp.eq.s32.totalorder %s37, 1
      %p275 = por %p273, %p274
      %p277 = scmp.ne.s32.totalorder %s262, %s276
      %p278 = scmp.eq.s32.totalorder %s37, 0
      %p279 = por %p277, %p278
      %s281 = sadd.s32 %s280, 1
      %p284 = scmp.eq.s32.totalorder %s31, 1
      %p285 = scmp.ne.s32.totalorder %s280, %s282
      %p286 = scmp.eq.s32.totalorder %s31, 0
      %p287 = por %p285, %p286
      %p288 = scmp.ne.s32.totalorder %s280, %s282
      %p289 = scmp.eq.s32.totalorder %s36, 1
      %p290 = por %p288, %p289
      %p291 = scmp.ne.s32.totalorder %s282, %s283
      %p292 = scmp.eq.s32.totalorder %s36, 0
      %p293 = por %p291, %p292
      %p294 = scmp.ne.s32.totalorder %s282, %s283
      %p295 = scmp.eq.s32.totalorder %s37, 1
      %p296 = por %p294, %p295
      %p298 = scmp.ne.s32.totalorder %s283, %s297
      %p299 = scmp.eq.s32.totalorder %s37, 0
      %p300 = por %p298, %p299
      %s302 = sadd.s32 %s301, 1
      %p305 = scmp.eq.s32.totalorder %s31, 1
      %p306 = scmp.ne.s32.totalorder %s301, %s303
      %p307 = scmp.eq.s32.totalorder %s31, 0
      %p308 = por %p306, %p307
      %p309 = scmp.ne.s32.totalorder %s301, %s303
      %p310 = scmp.eq.s32.totalorder %s36, 1
      %p311 = por %p309, %p310
      %p312 = scmp.ne.s32.totalorder %s303, %s304
      %p313 = scmp.eq.s32.totalorder %s36, 0
      %p314 = por %p312, %p313
      %p315 = scmp.ne.s32.totalorder %s303, %s304
      %p316 = scmp.eq.s32.totalorder %s37, 1
      %p317 = por %p315, %p316
      %p319 = scmp.ne.s32.totalorder %s304, %s318
      %p320 = scmp.eq.s32.totalorder %s37, 0
      %p321 = por %p319, %p320
      %s323 = sadd.s32 %s322, 1
      %p326 = scmp.eq.s32.totalorder %s31, 1
      %p327 = scmp.ne.s32.totalorder %s322, %s324
      %p328 = scmp.eq.s32.totalorder %s31, 0
      %p329 = por %p327, %p328
      %p330 = scmp.ne.s32.totalorder %s322, %s324
      %p331 = scmp.eq.s32.totalorder %s36, 1
      %p332 = por %p330, %p331
      %p333 = scmp.ne.s32.totalorder %s324, %s325
      %p334 = scmp.eq.s32.totalorder %s36, 0
      %p335 = por %p333, %p334
      %p336 = scmp.ne.s32.totalorder %s324, %s325
      %p337 = scmp.eq.s32.totalorder %s37, 1
      %p338 = por %p336, %p337
      %p340 = scmp.ne.s32.totalorder %s325, %s339
      %p341 = scmp.eq.s32.totalorder %s37, 0
      %p342 = por %p340, %p341
      %s344 = sadd.s32 %s343, 1
      %p347 = scmp.eq.s32.totalorder %s31, 1
      %p348 = scmp.ne.s32.totalorder %s343, %s345
      %p349 = scmp.eq.s32.totalorder %s31, 0
      %p350 = por %p348, %p349
      %p351 = scmp.ne.s32.totalorder %s343, %s345
      %p352 = scmp.eq.s32.totalorder %s36, 1
      %p353 = por %p351, %p352
      %p354 = scmp.ne.s32.totalorder %s345, %s346
      %p355 = scmp.eq.s32.totalorder %s36, 0
      %p356 = por %p354, %p355
      %p357 = scmp.ne.s32.totalorder %s345, %s346
      %p358 = scmp.eq.s32.totalorder %s37, 1
      %p359 = por %p357, %p358
      %p361 = scmp.ne.s32.totalorder %s346, %s360
      %p362 = scmp.eq.s32.totalorder %s37, 0
      %p363 = por %p361, %p362
      %s365 = sadd.s32 %s364, 1
      %p368 = scmp.eq.s32.totalorder %s31, 1
      %p369 = scmp.ne.s32.totalorder %s364, %s366
      %p370 = scmp.eq.s32.totalorder %s31, 0
      %p371 = por %p369, %p370
      %p372 = scmp.ne.s32.totalorder %s364, %s366
      %p373 = scmp.eq.s32.totalorder %s36, 1
      %p374 = por %p372, %p373
      %p375 = scmp.ne.s32.totalorder %s366, %s367
      %p376 = scmp.eq.s32.totalorder %s36, 0
      %p377 = por %p375, %p376
      %p378 = scmp.ne.s32.totalorder %s366, %s367
      %p379 = scmp.eq.s32.totalorder %s37, 1
      %p380 = por %p378, %p379
      %p382 = scmp.ne.s32.totalorder %s367, %s381
      %p383 = scmp.eq.s32.totalorder %s37, 0
      %p384 = por %p382, %p383
      %s386 = sadd.s32 %s385, 1
      %p389 = scmp.eq.s32.totalorder %s31, 1
      %p390 = scmp.ne.s32.totalorder %s385, %s387
      %p391 = scmp.eq.s32.totalorder %s31, 0
      %p392 = por %p390, %p391
      %p393 = scmp.ne.s32.totalorder %s385, %s387
      %p394 = scmp.eq.s32.totalorder %s36, 1
      %p395 = por %p393, %p394
      %p396 = scmp.ne.s32.totalorder %s387, %s388
      %p397 = scmp.eq.s32.totalorder %s36, 0
      %p398 = por %p396, %p397
      %p399 = scmp.ne.s32.totalorder %s387, %s388
      %p400 = scmp.eq.s32.totalorder %s37, 1
      %p401 = por %p399, %p400
      %p403 = scmp.ne.s32.totalorder %s388, %s402
      %p404 = scmp.eq.s32.totalorder %s37, 0
      %p405 = por %p403, %p404
      %s407 = sadd.s32 %s406, 1
      %p410 = scmp.eq.s32.totalorder %s31, 1
      %p411 = scmp.ne.s32.totalorder %s406, %s408
      %p412 = scmp.eq.s32.totalorder %s31, 0
      %p413 = por %p411, %p412
      %p414 = scmp.ne.s32.totalorder %s406, %s408
      %p415 = scmp.eq.s32.totalorder %s36, 1
      %p416 = por %p414, %p415
      %p417 = scmp.ne.s32.totalorder %s408, %s409
      %p418 = scmp.eq.s32.totalorder %s36, 0
      %p419 = por %p417, %p418
      %p420 = scmp.ne.s32.totalorder %s408, %s409
      %p421 = scmp.eq.s32.totalorder %s37, 1
      %p422 = por %p420, %p421
      %p424 = scmp.ne.s32.totalorder %s409, %s423
      %p425 = scmp.eq.s32.totalorder %s37, 0
      %p426 = por %p424, %p425
      %s428 = sadd.s32 %s427, 1
      %p431 = scmp.eq.s32.totalorder %s31, 1
      %p432 = scmp.ne.s32.totalorder %s427, %s429
      %p433 = scmp.eq.s32.totalorder %s31, 0
      %p434 = por %p432, %p433
      %p435 = scmp.ne.s32.totalorder %s427, %s429
      %p436 = scmp.eq.s32.totalorder %s36, 1
      %p437 = por %p435, %p436
      %p438 = scmp.ne.s32.totalorder %s429, %s430
      %p439 = scmp.eq.s32.totalorder %s36, 0
      %p440 = por %p438, %p439
      %p441 = scmp.ne.s32.totalorder %s429, %s430
      %p442 = scmp.eq.s32.totalorder %s37, 1
      %p443 = por %p441, %p442
      %p445 = scmp.ne.s32.totalorder %s430, %s444
      %p446 = scmp.eq.s32.totalorder %s37, 0
      %p447 = por %p445, %p446
      %s448 = ssub.s32 %s31, %s38
      %p449 = scmp.eq.s32.totalorder %s448, 0
      %s451 = sadd.s32 %s450, 1
      %s452 = scalar_select %p449, %s450, %s451
      %p455 = pneg %p449
      %p456 = scmp.eq.s32.totalorder %s31, 1
      %p457 = por %p455, %p456
      %p458 = scmp.ne.s32.totalorder %s450, %s453
      %p459 = scmp.eq.s32.totalorder %s31, 0
      %p460 = por %p458, %p459
      %p461 = scmp.ne.s32.totalorder %s450, %s453
      %p462 = scmp.eq.s32.totalorder %s36, 1
      %p463 = por %p461, %p462
      %p464 = scmp.ne.s32.totalorder %s453, %s454
      %p465 = scmp.eq.s32.totalorder %s36, 0
      %p466 = por %p464, %p465
      %p467 = scmp.ne.s32.totalorder %s453, %s454
      %p468 = scmp.eq.s32.totalorder %s37, 1
      %p469 = por %p467, %p468
      %p471 = scmp.ne.s32.totalorder %s454, %s470
      %p472 = scmp.eq.s32.totalorder %s37, 0
      %p473 = por %p471, %p472
      %p474 = scmp.le.s32.totalorder 1, %s31
      %p475 = scmp.lt.s32.totalorder %s31, 3
      %p476 = pnand %p474, %p475
      %p477 = pneg %p476
      // Predicated region
      $region9: #{tpu_custom_call.1} parent=5 // pred_check
        _
      $region10: #{tpu_custom_call.1} parent=5 // pred_check_branch
        %479 = sbr.rel (%p476) target = $region12
      $region11: #{tpu_custom_call.1} parent=5 // pred_region
        %s480 = ssub.s32 %s31, 1
        // Predicated region
        $region13: #{tpu_custom_call.1} parent=11 // pred_check
          %p481 = pneg %p104
        $region14: #{tpu_custom_call.1} parent=11 // pred_check_branch
          %483 = sbr.rel (%p481) target = $region16
        $region15: #{tpu_custom_call.1} parent=11 // pred_region
          _
        $region16: #{tpu_custom_call.1} parent=11 // pred_fallthru
          _
        // Predicated region
        $region17: #{tpu_custom_call.1} parent=11 // pred_check
          %p484 = pneg %p125
        $region18: #{tpu_custom_call.1} parent=11 // pred_check_branch
          %486 = sbr.rel (%p484) target = $region20
        $region19: #{tpu_custom_call.1} parent=11 // pred_region
          _
        $region20: #{tpu_custom_call.1} parent=11 // pred_fallthru
          _
        // Predicated region
        $region21: #{tpu_custom_call.1} parent=11 // pred_check
          %p487 = pneg %p146
        $region22: #{tpu_custom_call.1} parent=11 // pred_check_branch
          %489 = sbr.rel (%p487) target = $region24
        $region23: #{tpu_custom_call.1} parent=11 // pred_region
          _
        $region24: #{tpu_custom_call.1} parent=11 // pred_fallthru
          _
        // Predicated region
        $region25: #{tpu_custom_call.1} parent=11 // pred_check
          %p490 = pneg %p167
        $region26: #{tpu_custom_call.1} parent=11 // pred_check_branch
          %492 = sbr.rel (%p490) target = $region28
        $region27: #{tpu_custom_call.1} parent=11 // pred_region
          _
        $region28: #{tpu_custom_call.1} parent=11 // pred_fallthru
          _
        // Predicated region
        $region29: #{tpu_custom_call.1} parent=11 // pred_check
          %p493 = pneg %p188
        $region30: #{tpu_custom_call.1} parent=11 // pred_check_branch
          %495 = sbr.rel (%p493) target = $region32
        $region31: #{tpu_custom_call.1} parent=11 // pred_region
          _
        $region32: #{tpu_custom_call.1} parent=11 // pred_fallthru
          _
        // Predicated region
        $region33: #{tpu_custom_call.1} parent=11 // pred_check
          %p496 = pneg %p209
        $region34: #{tpu_custom_call.1} parent=11 // pred_check_branch
          %498 = sbr.rel (%p496) target = $region36
        $region35: #{tpu_custom_call.1} parent=11 // pred_region
          _
        $region36: #{tpu_custom_call.1} parent=11 // pred_fallthru
          _
        // Predicated region
        $region37: #{tpu_custom_call.1} parent=11 // pred_check
          %p499 = pneg %p230
        $region38: #{tpu_custom_call.1} parent=11 // pred_check_branch
          %501 = sbr.rel (%p499) target = $region40
        $region39: #{tpu_custom_call.1} parent=11 // pred_region
          _
        $region40: #{tpu_custom_call.1} parent=11 // pred_fallthru
          _
        // Predicated region
        $region41: #{tpu_custom_call.1} parent=11 // pred_check
          %p502 = pneg %p251
        $region42: #{tpu_custom_call.1} parent=11 // pred_check_branch
          %504 = sbr.rel (%p502) target = $region44
        $region43: #{tpu_custom_call.1} parent=11 // pred_region
          _
        $region44: #{tpu_custom_call.1} parent=11 // pred_fallthru
          _
        // Predicated region
        $region45: #{tpu_custom_call.1} parent=11 // pred_check
          %p505 = pneg %p272
        $region46: #{tpu_custom_call.1} parent=11 // pred_check_branch
          %507 = sbr.rel (%p505) target = $region48
        $region47: #{tpu_custom_call.1} parent=11 // pred_region
          %s509 = ssub.s32 1024, 1024
          %510 = vsyncadd [#allocation3], %s509
          %s511 = sshll.u32 [#allocation2], 4
          %s512 = int_to_ptr.vmem [resolvable:$true] %s511
          %517 = dma.hbm_to_vmem [thread:$0]  %s10, 1024, %s512, [#allocation3], 128, 128, 8
        $region48: #{tpu_custom_call.1} parent=11 // pred_fallthru
          _
        // Predicated region
        $region49: #{tpu_custom_call.1} parent=11 // pred_check
          %p518 = pneg %p293
        $region50: #{tpu_custom_call.1} parent=11 // pred_check_branch
          %520 = sbr.rel (%p518) target = $region52
        $region51: #{tpu_custom_call.1} parent=11 // pred_region
          _
        $region52: #{tpu_custom_call.1} parent=11 // pred_fallthru
          _
        // Predicated region
        $region53: #{tpu_custom_call.1} parent=11 // pred_check
          %p521 = pneg %p314
        $region54: #{tpu_custom_call.1} parent=11 // pred_check_branch
          %523 = sbr.rel (%p521) target = $region56
        $region55: #{tpu_custom_call.1} parent=11 // pred_region
          %s525 = ssub.s32 1024, 1024
          %526 = vsyncadd [#allocation7], %s525
          %s527 = sshll.u32 [#allocation6], 4
          %s528 = int_to_ptr.vmem [resolvable:$true] %s527
          %533 = dma.hbm_to_vmem [thread:$0]  %s12, 1024, %s528, [#allocation7], 128, 128, 8
        $region56: #{tpu_custom_call.1} parent=11 // pred_fallthru
          _
        // Predicated region
        $region57: #{tpu_custom_call.1} parent=11 // pred_check
          %p534 = pneg %p335
        $region58: #{tpu_custom_call.1} parent=11 // pred_check_branch
          %536 = sbr.rel (%p534) target = $region60
        $region59: #{tpu_custom_call.1} parent=11 // pred_region
          _
        $region60: #{tpu_custom_call.1} parent=11 // pred_fallthru
          _
        // Predicated region
        $region61: #{tpu_custom_call.1} parent=11 // pred_check
          %p537 = pneg %p356
        $region62: #{tpu_custom_call.1} parent=11 // pred_check_branch
          %539 = sbr.rel (%p537) target = $region64
        $region63: #{tpu_custom_call.1} parent=11 // pred_region
          %s541 = ssub.s32 1024, 1024
          %542 = vsyncadd [#allocation7], %s541
          %s543 = sshll.u32 [#allocation8], 4
          %s544 = int_to_ptr.vmem [resolvable:$true] %s543
          %549 = dma.hbm_to_vmem [thread:$0]  %s14, 1024, %s544, [#allocation7], 128, 128, 8
        $region64: #{tpu_custom_call.1} parent=11 // pred_fallthru
          _
        // Predicated region
        $region65: #{tpu_custom_call.1} parent=11 // pred_check
          %p550 = pneg %p377
        $region66: #{tpu_custom_call.1} parent=11 // pred_check_branch
          %552 = sbr.rel (%p550) target = $region68
        $region67: #{tpu_custom_call.1} parent=11 // pred_region
          _
        $region68: #{tpu_custom_call.1} parent=11 // pred_fallthru
          _
        // Predicated region
        $region69: #{tpu_custom_call.1} parent=11 // pred_check
          %p553 = pneg %p398
        $region70: #{tpu_custom_call.1} parent=11 // pred_check_branch
          %555 = sbr.rel (%p553) target = $region72
        $region71: #{tpu_custom_call.1} parent=11 // pred_region
          _
        $region72: #{tpu_custom_call.1} parent=11 // pred_fallthru
          _
        // Predicated region
        $region73: #{tpu_custom_call.1} parent=11 // pred_check
          %p556 = pneg %p419
        $region74: #{tpu_custom_call.1} parent=11 // pred_check_branch
          %558 = sbr.rel (%p556) target = $region76
        $region75: #{tpu_custom_call.1} parent=11 // pred_region
          _
        $region76: #{tpu_custom_call.1} parent=11 // pred_fallthru
          _
        // Predicated region
        $region77: #{tpu_custom_call.1} parent=11 // pred_check
          %p559 = pneg %p440
        $region78: #{tpu_custom_call.1} parent=11 // pred_check_branch
          %561 = sbr.rel (%p559) target = $region80
        $region79: #{tpu_custom_call.1} parent=11 // pred_region
          %s563 = ssub.s32 16, 16
          %564 = vsyncadd [#allocation5], %s563
          %s566 = sshll.u32 %s18, 4
          %s567 = int_to_ptr.vmem [resolvable:$true] %s566
          %569 = dma.vmem_to_smem %s567, 16, [#allocation9], [#allocation5]
        $region80: #{tpu_custom_call.1} parent=11 // pred_fallthru
          _
      $region12: #{tpu_custom_call.1} parent=5 // pred_fallthru
        _
      %p570 = scmp.lt.s32.totalorder %s31, 2
      // Predicated region
      $region81: #{tpu_custom_call.1} parent=5 // pred_check
        %p571 = pneg %p570
      $region82: #{tpu_custom_call.1} parent=5 // pred_check_branch
        %573 = sbr.rel (%p571) target = $region84
      $region83: #{tpu_custom_call.1} parent=5 // pred_region
        // Predicated region
        $region85: #{tpu_custom_call.1} parent=83 // pred_check
          %p574 = pneg %p51
        $region86: #{tpu_custom_call.1} parent=83 // pred_check_branch
          %576 = sbr.rel (%p574) target = $region88
        $region87: #{tpu_custom_call.1} parent=83 // pred_region
          %p577 = scmp.lt.s32.totalorder %s31, 1
          %s578 = scalar_select %p577, %s31, 1
          %s579 = smul.addr %s578, 8
          %s580 = scalar_lea.vmem %s0, %s579
        $region88: #{tpu_custom_call.1} parent=83 // pred_fallthru
          _
        // Predicated region
        $region89: #{tpu_custom_call.1} parent=83 // pred_check
          %p581 = pneg %p77
        $region90: #{tpu_custom_call.1} parent=83 // pred_check_branch
          %583 = sbr.rel (%p581) target = $region92
        $region91: #{tpu_custom_call.1} parent=83 // pred_region
          %p584 = scmp.lt.s32.totalorder %s31, 1
          %s585 = scalar_select %p584, %s31, 1
          %s586 = smul.addr %s585, 2
          %s587 = smul.addr %s586, 8
          %s588 = scalar_lea.vmem %s1, %s587
        $region92: #{tpu_custom_call.1} parent=83 // pred_fallthru
          _
      $region84: #{tpu_custom_call.1} parent=5 // pred_fallthru
        _
      %p589 = scmp.le.s32.totalorder 1, %s31
      %p590 = scmp.lt.s32.totalorder %s31, 3
      %p591 = pnand %p589, %p590
      %p592 = pneg %p591
      // Predicated region
      $region93: #{tpu_custom_call.1} parent=5 // pred_check
        _
      $region94: #{tpu_custom_call.1} parent=5 // pred_check_branch
        %594 = sbr.rel (%p591) target = $region96
      $region95: #{tpu_custom_call.1} parent=5 // pred_region
        %s595 = ssub.s32 %s31, 1
        // Predicated region
        $region97: #{tpu_custom_call.1} parent=95 // pred_check
          %p596 = pneg %p272
        $region98: #{tpu_custom_call.1} parent=95 // pred_check_branch
          %598 = sbr.rel (%p596) target = $region100
        $region99: #{tpu_custom_call.1} parent=95 // pred_region
          %599 = dma.done [#allocation3], 1024
        $region100: #{tpu_custom_call.1} parent=95 // pred_fallthru
          _
        // Predicated region
        $region101: #{tpu_custom_call.1} parent=95 // pred_check
          %p600 = pneg %p314
        $region102: #{tpu_custom_call.1} parent=95 // pred_check_branch
          %602 = sbr.rel (%p600) target = $region104
        $region103: #{tpu_custom_call.1} parent=95 // pred_region
          %603 = dma.done [#allocation7], 1024
        $region104: #{tpu_custom_call.1} parent=95 // pred_fallthru
          _
        // Predicated region
        $region105: #{tpu_custom_call.1} parent=95 // pred_check
          %p604 = pneg %p356
        $region106: #{tpu_custom_call.1} parent=95 // pred_check_branch
          %606 = sbr.rel (%p604) target = $region108
        $region107: #{tpu_custom_call.1} parent=95 // pred_region
          %607 = dma.done [#allocation7], 1024
        $region108: #{tpu_custom_call.1} parent=95 // pred_fallthru
          _
        // Predicated region
        $region109: #{tpu_custom_call.1} parent=95 // pred_check
          %p608 = pneg %p440
        $region110: #{tpu_custom_call.1} parent=95 // pred_check_branch
          %610 = sbr.rel (%p608) target = $region112
        $region111: #{tpu_custom_call.1} parent=95 // pred_region
          %611 = dma.done [#allocation5], 16
        $region112: #{tpu_custom_call.1} parent=95 // pred_fallthru
          _
        %612 = sfence
        %p613 = scmp.lt.s32.totalorder %s36, 1
        %s614 = scalar_select %p613, %s36, 1
        %s615 = smul.addr %s614, 8
        %s616 = scalar_lea.vmem %s0, %s615
        %p617 = pneg %p57
        %p618 = pneg %p54
        %p619 = scmp.lt.s32.totalorder %s36, 1
        %s620 = scalar_select %p619, %s36, 1
        %s621 = smul.addr %s620, 2
        %s622 = smul.addr %s621, 8
        %s623 = scalar_lea.vmem %s1, %s622
        %p624 = pneg %p83
        %p625 = pneg %p80
        %p626 = pneg %p104
        %p627 = pneg %p101
        %p628 = pneg %p125
        %p629 = pneg %p122
        %p630 = pneg %p146
        %p631 = pneg %p143
        %p632 = pneg %p167
        %p633 = pneg %p164
        %p634 = pneg %p188
        %p635 = pneg %p185
        %p636 = pneg %p209
        %p637 = pneg %p206
        %p638 = pneg %p230
        %p639 = pneg %p227
        %p640 = pneg %p251
        %p641 = pneg %p248
        %p642 = pneg %p272
        %p643 = pneg %p269
        %p644 = pneg %p293
        %p645 = pneg %p290
        %p646 = pneg %p314
        %p647 = pneg %p311
        %p648 = pneg %p335
        %p649 = pneg %p332
        %p650 = pneg %p356
        %p651 = pneg %p353
        %p652 = pneg %p377
        %p653 = pneg %p374
        %p654 = pneg %p398
        %p655 = pneg %p395
        %p656 = pneg %p419
        %p657 = pneg %p416
        %p658 = pneg %p440
        %p659 = pneg %p437
        %p660 = pneg %p466
        %p661 = pneg %p463
        %s662 = sand.u32 %s453, 1
        %s663 = scalar_lea.sflag [#allocation4], %s662
        %s664 = sand.u32 %s453, 1
        %s665 = smul.addr %s664, 8
        %s666 = scalar_lea.vmem [#allocation10], %s665
        %p667 = scmp.lt.s32.totalorder %s36, 1
        %s668 = scalar_select %p667, %s36, 1
        %s669 = smul.addr %s668, 8
        %s670 = scalar_lea.vmem %s0, %s669
        %p671 = scmp.lt.s32.totalorder %s36, 1
        %s672 = scalar_select %p671, %s36, 1
        %s673 = smul.addr %s672, 2
        %s674 = smul.addr %s673, 8
        %s675 = scalar_lea.vmem %s1, %s674
        %v676 = vld [vmem:[%s670] sm:$0xff]
        %v677 = vld [vmem:[%s675] sm:$0xff]
        %v678 = vld [vmem:[%s675 + $0x8] sm:$0xf]
        %v679 = vld [vmem:[%s2] sm:$0xff]
        %v680 = vld [vmem:[%s3] sm:$0x1]
        loop: start=0, step=1, limit=2
        $region113: #{tpu_custom_call.1} parent=95 // loop_pre_header
          _
        $region114: #{tpu_custom_call.1} parent=95 // loop_header
          %s682 = sphi 0, %s686
          %p683 = scmp.ge.s32.totalorder %s682, 2
          %v687 = vphi %v676, %v2770
        $region115: #{tpu_custom_call.1} parent=95 // loop_header_branch
          %685 = sbr.rel (%p683) target = $region119
        $region116: #{tpu_custom_call.1} parent=95 // loop_body
          %s688 = smul.u32 %s682, 6
          %s689 = sld [smem:[#allocation9 + %s688]]
          %s690 = sadd.s32 %s688, 1
          %s691 = sld [smem:[#allocation9 + %s690]]
          %vm692 = vcmask 261120
          %v693 = vsel %vm692, %v687, 0.0
          %694 = vadd.xlane.f32.xlu0 %v693
          %v695 = vpop.xlane.xlu0 %694
          %v696 = vrcp.pop 32.0
          %v697 = vmul.f32 %v695, %v696
          %v698 = vsub.f32 %v687, %v697
          %v699 = vmul.f32 %v698, %v698
          %v700 = vsel %vm692, %v699, 0.0
          %701 = vadd.xlane.f32.xlu0 %v700
          %v702 = vpop.xlane.xlu0 %701
          %v703 = vmul.f32 %v702, 0.032258064
          %v704 = vrsqrt.pop %v703
          %v705 = vmul.f32 %v703, %v704
          %vm706 = vcmp.eq.f32.partialorder %v703, inf
          %v707 = vsel %vm706, %v703, %v705
          %vm708 = vcmp.eq.f32.partialorder %v703, 0.0
          %v709 = vand.u32 %v703, 2147483648
          %v710 = vsel %vm708, %v709, %v707
          %v711 = vadd.f32 %v710, 1e-06
          %v712 = vrcp.pop %v711
          %v713 = vstv %s689
          %v714 = vmul.f32 %v713, %v698
          %v715 = vmul.f32 %v714, %v712
          %v716 = vstv %s691
          %v717 = vadd.f32 %v715, %v716
          %s718 = smul.u32 %s682, 32
          %s719 = scalar_lea.vmem %s4, %s718
          %v720 = vld [vmem:[%s719] sm:$0xff]
          %v721 = vld [vmem:[%s719 + $0x8] sm:$0xff]
          %v722 = vld [vmem:[%s719 + $0x10] sm:$0xff]
          %v723 = vld [vmem:[%s719 + $0x18] sm:$0xff]
          %s724 = scalar_lea.vmem %s5, %s682
          %v725 = vld [vmem:[%s724] sm:$0x1]
          %v726 = vlaneseq
          %v727 = vshrl.u32 %v726, 7
          %v728 = vsub.s32 0, %v727
          %v729 = vrot.slane %v725, %v728
          %v731 = vsel %vm692, %v717, 0
          %733 = vmatprep.subr.mxu0 0.0
          %734 = vmatpush1.msra.mxu0 %v720
          %735 = vmatprep.subr.mxu0 0.0
          %736 = vmatpush1.msra.mxu0 %v721
          %737 = vmatprep.subr.mxu0 0.0
          %738 = vmatpush1.msra.mxu0 %v722
          %739 = vmatprep.subr.mxu0 0.0
          %740 = vmatpush1.msra.mxu0 %v723
          %741 = vmatprep.subr.mxu0 0.0
          %742 = vmatpush1.msra.mxu0 0.0
          %743 = vmatprep.subr.mxu0 0.0
          %744 = vmatpush1.msra.mxu0 0.0
          %745 = vmatprep.subr.mxu0 0.0
          %746 = vmatpush1.msra.mxu0 0.0
          %747 = vmatprep.subr.mxu0 0.0
          %748 = vmatpush1.msra.mxu0 0.0
          %749 = vmatprep.subr.mxu0 0.0
          %750 = vmatpush1.msra.mxu0 0.0
          %751 = vmatprep.subr.mxu0 0.0
          %752 = vmatpush1.msra.mxu0 0.0
          %753 = vmatprep.subr.mxu0 0.0
          %754 = vmatpush1.msra.mxu0 0.0
          %755 = vmatprep.subr.mxu0 0.0
          %756 = vmatpush1.msra.mxu0 0.0
          %757 = vmatprep.subr.mxu0 0.0
          %758 = vmatpush1.msra.mxu0 0.0
          %759 = vmatprep.subr.mxu0 0.0
          %760 = vmatpush1.msra.mxu0 0.0
          %761 = vmatprep.subr.mxu0 0.0
          %762 = vmatpush1.msra.mxu0 0.0
          %763 = vmatprep.subr.mxu0 0.0
          %764 = vmatpush1.msra.mxu0 0.0
          %765 = vmatprep.subr.mxu0 0.0
          %766 = vmatpush1.msra.mxu0 0.0
          %767 = vmatprep.subr.mxu0 0.0
          %768 = vmatpush1.msra.mxu0 0.0
          %769 = vmatprep.subr.mxu0 0.0
          %770 = vmatpush1.msra.mxu0 0.0
          %771 = vmatprep.subr.mxu0 0.0
          %772 = vmatpush1.msra.mxu0 0.0
          %773 = vmatprep.subr.mxu0 0.0
          %774 = vmatpush1.msra.mxu0 0.0
          %775 = vmatprep.subr.mxu0 0.0
          %776 = vmatpush1.msra.mxu0 0.0
          %777 = vmatprep.subr.mxu0 0.0
          %778 = vmatpush1.msra.mxu0 0.0
          %779 = vmatprep.subr.mxu0 0.0
          %780 = vmatpush1.msra.mxu0 0.0
          %781 = vmatprep.subr.mxu0 0.0
          %782 = vmatpush1.msra.mxu0 0.0
          %783 = vmatprep.subr.mxu0 0.0
          %784 = vmatpush1.msra.mxu0 0.0
          %785 = vmatprep.subr.mxu0 0.0
          %786 = vmatpush1.msra.mxu0 0.0
          %787 = vmatprep.subr.mxu0 0.0
          %788 = vmatpush1.msra.mxu0 0.0
          %789 = vmatprep.subr.mxu0 0.0
          %790 = vmatpush1.msra.mxu0 0.0
          %791 = vmatprep.subr.mxu0 0.0
          %792 = vmatpush1.msra.mxu0 0.0
          %793 = vmatprep.subr.mxu0 0.0
          %794 = vmatpush1.msra.mxu0 0.0
          %795 = vmatprep.subr.mxu0 0.0
          %796 = vmatpush1.msra.mxu0 0.0
          %797 = vmatprep.mubr.f32.mxu0 0.0
          %798 = vmatmul.mubr.f32.gmra.mrb[0].mxu0 %v731
          %v799 = vpop.f32.mrb[0].mxu0
          %v800 = vadd.f32 %v729, %v799
          %v801 = vpop.f32.mrb[0].mxu0
          %802 = vdwg.mxu0
          %804 = vrot.lane.b32.xlu0 %v800, 120
          %v805 = vpop.permute.xlu0 %804
          %806 = vrot.lane.b32.xlu0 %v800, 112
          %v807 = vpop.permute.xlu0 %806
          %808 = vrot.lane.b32.xlu0 %v800, 104
          %v809 = vpop.permute.xlu0 %808
          %s810 = scalar_lea.vmem %s6, %s718
          %v811 = vld [vmem:[%s810] sm:$0xff]
          %v812 = vld [vmem:[%s810 + $0x8] sm:$0xff]
          %v813 = vld [vmem:[%s810 + $0x10] sm:$0xff]
          %v814 = vld [vmem:[%s810 + $0x18] sm:$0xff]
          %s815 = scalar_lea.vmem %s7, %s682
          %v816 = vld [vmem:[%s815] sm:$0x1]
          %817 = vrot.lane.b32.xlu0 %v800, 96
          %v818 = vpop.permute.xlu0 %817
          %vm819 = vcmask 64512
          %v820 = vsel %vm819, %v800, 0
          %v822 = vsel %vm819, %v818, 0
          %824 = vmatprep.subr.mxu0 0.0
          %825 = vmatpush1.xpose.msra.mxu0 %v822
          %826 = vmatprep.subr.mxu0 0.0
          %827 = vmatpush1.xpose.msra.mxu0 0.0
          %828 = vmatprep.subr.mxu0 0.0
          %829 = vmatpush1.xpose.msra.mxu0 0.0
          %830 = vmatprep.subr.mxu0 0.0
          %831 = vmatpush1.xpose.msra.mxu0 0.0
          %832 = vmatprep.subr.mxu0 0.0
          %833 = vmatpush1.xpose.msra.mxu0 0.0
          %834 = vmatprep.subr.mxu0 0.0
          %835 = vmatpush1.xpose.msra.mxu0 0.0
          %836 = vmatprep.subr.mxu0 0.0
          %837 = vmatpush1.xpose.msra.mxu0 0.0
          %838 = vmatprep.subr.mxu0 0.0
          %839 = vmatpush1.xpose.msra.mxu0 0.0
          %840 = vmatprep.subr.mxu0 0.0
          %841 = vmatpush1.xpose.msra.mxu0 0.0
          %842 = vmatprep.subr.mxu0 0.0
          %843 = vmatpush1.xpose.msra.mxu0 0.0
          %844 = vmatprep.subr.mxu0 0.0
          %845 = vmatpush1.xpose.msra.mxu0 0.0
          %846 = vmatprep.subr.mxu0 0.0
          %847 = vmatpush1.xpose.msra.mxu0 0.0
          %848 = vmatprep.subr.mxu0 0.0
          %849 = vmatpush1.xpose.msra.mxu0 0.0
          %850 = vmatprep.subr.mxu0 0.0
          %851 = vmatpush1.xpose.msra.mxu0 0.0
          %852 = vmatprep.subr.mxu0 0.0
          %853 = vmatpush1.xpose.msra.mxu0 0.0
          %854 = vmatprep.subr.mxu0 0.0
          %855 = vmatpush1.xpose.msra.mxu0 0.0
          %856 = vmatprep.subr.mxu0 0.0
          %857 = vmatpush1.xpose.msra.mxu0 0.0
          %858 = vmatprep.subr.mxu0 0.0
          %859 = vmatpush1.xpose.msra.mxu0 0.0
          %860 = vmatprep.subr.mxu0 0.0
          %861 = vmatpush1.xpose.msra.mxu0 0.0
          %862 = vmatprep.subr.mxu0 0.0
          %863 = vmatpush1.xpose.msra.mxu0 0.0
          %864 = vmatprep.subr.mxu0 0.0
          %865 = vmatpush1.xpose.msra.mxu0 0.0
          %866 = vmatprep.subr.mxu0 0.0
          %867 = vmatpush1.xpose.msra.mxu0 0.0
          %868 = vmatprep.subr.mxu0 0.0
          %869 = vmatpush1.xpose.msra.mxu0 0.0
          %870 = vmatprep.subr.mxu0 0.0
          %871 = vmatpush1.xpose.msra.mxu0 0.0
          %872 = vmatprep.subr.mxu0 0.0
          %873 = vmatpush1.xpose.msra.mxu0 0.0
          %874 = vmatprep.subr.mxu0 0.0
          %875 = vmatpush1.xpose.msra.mxu0 0.0
          %876 = vmatprep.subr.mxu0 0.0
          %877 = vmatpush1.xpose.msra.mxu0 0.0
          %878 = vmatprep.subr.mxu0 0.0
          %879 = vmatpush1.xpose.msra.mxu0 0.0
          %880 = vmatprep.subr.mxu0 0.0
          %881 = vmatpush1.xpose.msra.mxu0 0.0
          %882 = vmatprep.subr.mxu0 0.0
          %883 = vmatpush1.xpose.msra.mxu0 0.0
          %884 = vmatprep.subr.mxu0 0.0
          %885 = vmatpush1.xpose.msra.mxu0 0.0
          %886 = vmatprep.subr.mxu0 0.0
          %887 = vmatpush1.xpose.msra.mxu0 0.0
          %888 = vmatprep.mubr.f32.mxu0 0.0
          %889 = vmatmul.mubr.f32.gmra.mrb[0].mxu0 %v820
          %v890 = vpop.f32.mrb[0].mxu0
          %v891 = vadd.f32 %v679, %v890
          %v892 = vpop.f32.mrb[0].mxu0
          %893 = vdwg.mxu0
          %894 = vrot.lane.b32.xlu0 %v805, 96
          %v895 = vpop.permute.xlu0 %894
          %v896 = vsel %vm819, %v805, 0
          %v898 = vsel %vm819, %v895, 0
          %900 = vmatprep.subr.mxu0 0.0
          %901 = vmatpush1.xpose.msra.mxu0 %v898
          %902 = vmatprep.subr.mxu0 0.0
          %903 = vmatpush1.xpose.msra.mxu0 0.0
          %904 = vmatprep.subr.mxu0 0.0
          %905 = vmatpush1.xpose.msra.mxu0 0.0
          %906 = vmatprep.subr.mxu0 0.0
          %907 = vmatpush1.xpose.msra.mxu0 0.0
          %908 = vmatprep.subr.mxu0 0.0
          %909 = vmatpush1.xpose.msra.mxu0 0.0
          %910 = vmatprep.subr.mxu0 0.0
          %911 = vmatpush1.xpose.msra.mxu0 0.0
          %912 = vmatprep.subr.mxu0 0.0
          %913 = vmatpush1.xpose.msra.mxu0 0.0
          %914 = vmatprep.subr.mxu0 0.0
          %915 = vmatpush1.xpose.msra.mxu0 0.0
          %916 = vmatprep.subr.mxu0 0.0
          %917 = vmatpush1.xpose.msra.mxu0 0.0
          %918 = vmatprep.subr.mxu0 0.0
          %919 = vmatpush1.xpose.msra.mxu0 0.0
          %920 = vmatprep.subr.mxu0 0.0
          %921 = vmatpush1.xpose.msra.mxu0 0.0
          %922 = vmatprep.subr.mxu0 0.0
          %923 = vmatpush1.xpose.msra.mxu0 0.0
          %924 = vmatprep.subr.mxu0 0.0
          %925 = vmatpush1.xpose.msra.mxu0 0.0
          %926 = vmatprep.subr.mxu0 0.0
          %927 = vmatpush1.xpose.msra.mxu0 0.0
          %928 = vmatprep.subr.mxu0 0.0
          %929 = vmatpush1.xpose.msra.mxu0 0.0
          %930 = vmatprep.subr.mxu0 0.0
          %931 = vmatpush1.xpose.msra.mxu0 0.0
          %932 = vmatprep.subr.mxu0 0.0
          %933 = vmatpush1.xpose.msra.mxu0 0.0
          %934 = vmatprep.subr.mxu0 0.0
          %935 = vmatpush1.xpose.msra.mxu0 0.0
          %936 = vmatprep.subr.mxu0 0.0
          %937 = vmatpush1.xpose.msra.mxu0 0.0
          %938 = vmatprep.subr.mxu0 0.0
          %939 = vmatpush1.xpose.msra.mxu0 0.0
          %940 = vmatprep.subr.mxu0 0.0
          %941 = vmatpush1.xpose.msra.mxu0 0.0
          %942 = vmatprep.subr.mxu0 0.0
          %943 = vmatpush1.xpose.msra.mxu0 0.0
          %944 = vmatprep.subr.mxu0 0.0
          %945 = vmatpush1.xpose.msra.mxu0 0.0
          %946 = vmatprep.subr.mxu0 0.0
          %947 = vmatpush1.xpose.msra.mxu0 0.0
          %948 = vmatprep.subr.mxu0 0.0
          %949 = vmatpush1.xpose.msra.mxu0 0.0
          %950 = vmatprep.subr.mxu0 0.0
          %951 = vmatpush1.xpose.msra.mxu0 0.0
          %952 = vmatprep.subr.mxu0 0.0
          %953 = vmatpush1.xpose.msra.mxu0 0.0
          %954 = vmatprep.subr.mxu0 0.0
          %955 = vmatpush1.xpose.msra.mxu0 0.0
          %956 = vmatprep.subr.mxu0 0.0
          %957 = vmatpush1.xpose.msra.mxu0 0.0
          %958 = vmatprep.subr.mxu0 0.0
          %959 = vmatpush1.xpose.msra.mxu0 0.0
          %960 = vmatprep.subr.mxu0 0.0
          %961 = vmatpush1.xpose.msra.mxu0 0.0
          %962 = vmatprep.subr.mxu0 0.0
          %963 = vmatpush1.xpose.msra.mxu0 0.0
          %964 = vmatprep.mubr.f32.mxu0 0.0
          %965 = vmatmul.mubr.f32.gmra.mrb[0].mxu0 %v896
          %v966 = vpop.f32.mrb[0].mxu0
          %v967 = vadd.f32 %v679, %v966
          %v968 = vpop.f32.mrb[0].mxu0
          %969 = vdwg.mxu0
          %970 = vrot.lane.b32.xlu0 %v807, 96
          %v971 = vpop.permute.xlu0 %970
          %v972 = vsel %vm819, %v807, 0
          %v974 = vsel %vm819, %v971, 0
          %976 = vmatprep.subr.mxu0 0.0
          %977 = vmatpush1.xpose.msra.mxu0 %v974
          %978 = vmatprep.subr.mxu0 0.0
          %979 = vmatpush1.xpose.msra.mxu0 0.0
          %980 = vmatprep.subr.mxu0 0.0
          %981 = vmatpush1.xpose.msra.mxu0 0.0
          %982 = vmatprep.subr.mxu0 0.0
          %983 = vmatpush1.xpose.msra.mxu0 0.0
          %984 = vmatprep.subr.mxu0 0.0
          %985 = vmatpush1.xpose.msra.mxu0 0.0
          %986 = vmatprep.subr.mxu0 0.0
          %987 = vmatpush1.xpose.msra.mxu0 0.0
          %988 = vmatprep.subr.mxu0 0.0
          %989 = vmatpush1.xpose.msra.mxu0 0.0
          %990 = vmatprep.subr.mxu0 0.0
          %991 = vmatpush1.xpose.msra.mxu0 0.0
          %992 = vmatprep.subr.mxu0 0.0
          %993 = vmatpush1.xpose.msra.mxu0 0.0
          %994 = vmatprep.subr.mxu0 0.0
          %995 = vmatpush1.xpose.msra.mxu0 0.0
          %996 = vmatprep.subr.mxu0 0.0
          %997 = vmatpush1.xpose.msra.mxu0 0.0
          %998 = vmatprep.subr.mxu0 0.0
          %999 = vmatpush1.xpose.msra.mxu0 0.0
          %1000 = vmatprep.subr.mxu0 0.0
          %1001 = vmatpush1.xpose.msra.mxu0 0.0
          %1002 = vmatprep.subr.mxu0 0.0
          %1003 = vmatpush1.xpose.msra.mxu0 0.0
          %1004 = vmatprep.subr.mxu0 0.0
          %1005 = vmatpush1.xpose.msra.mxu0 0.0
          %1006 = vmatprep.subr.mxu0 0.0
          %1007 = vmatpush1.xpose.msra.mxu0 0.0
          %1008 = vmatprep.subr.mxu0 0.0
          %1009 = vmatpush1.xpose.msra.mxu0 0.0
          %1010 = vmatprep.subr.mxu0 0.0
          %1011 = vmatpush1.xpose.msra.mxu0 0.0
          %1012 = vmatprep.subr.mxu0 0.0
          %1013 = vmatpush1.xpose.msra.mxu0 0.0
          %1014 = vmatprep.subr.mxu0 0.0
          %1015 = vmatpush1.xpose.msra.mxu0 0.0
          %1016 = vmatprep.subr.mxu0 0.0
          %1017 = vmatpush1.xpose.msra.mxu0 0.0
          %1018 = vmatprep.subr.mxu0 0.0
          %1019 = vmatpush1.xpose.msra.mxu0 0.0
          %1020 = vmatprep.subr.mxu0 0.0
          %1021 = vmatpush1.xpose.msra.mxu0 0.0
          %1022 = vmatprep.subr.mxu0 0.0
          %1023 = vmatpush1.xpose.msra.mxu0 0.0
          %1024 = vmatprep.subr.mxu0 0.0
          %1025 = vmatpush1.xpose.msra.mxu0 0.0
          %1026 = vmatprep.subr.mxu0 0.0
          %1027 = vmatpush1.xpose.msra.mxu0 0.0
          %1028 = vmatprep.subr.mxu0 0.0
          %1029 = vmatpush1.xpose.msra.mxu0 0.0
          %1030 = vmatprep.subr.mxu0 0.0
          %1031 = vmatpush1.xpose.msra.mxu0 0.0
          %1032 = vmatprep.subr.mxu0 0.0
          %1033 = vmatpush1.xpose.msra.mxu0 0.0
          %1034 = vmatprep.subr.mxu0 0.0
          %1035 = vmatpush1.xpose.msra.mxu0 0.0
          %1036 = vmatprep.subr.mxu0 0.0
          %1037 = vmatpush1.xpose.msra.mxu0 0.0
          %1038 = vmatprep.subr.mxu0 0.0
          %1039 = vmatpush1.xpose.msra.mxu0 0.0
          %1040 = vmatprep.mubr.f32.mxu0 0.0
          %1041 = vmatmul.mubr.f32.gmra.mrb[0].mxu0 %v972
          %v1042 = vpop.f32.mrb[0].mxu0
          %v1043 = vadd.f32 %v679, %v1042
          %v1044 = vpop.f32.mrb[0].mxu0
          %1045 = vdwg.mxu0
          %1046 = vrot.lane.b32.xlu0 %v809, 96
          %v1047 = vpop.permute.xlu0 %1046
          %v1048 = vsel %vm819, %v809, 0
          %v1050 = vsel %vm819, %v1047, 0
          %1052 = vmatprep.subr.mxu0 0.0
          %1053 = vmatpush1.xpose.msra.mxu0 %v1050
          %1054 = vmatprep.subr.mxu0 0.0
          %1055 = vmatpush1.xpose.msra.mxu0 0.0
          %1056 = vmatprep.subr.mxu0 0.0
          %1057 = vmatpush1.xpose.msra.mxu0 0.0
          %1058 = vmatprep.subr.mxu0 0.0
          %1059 = vmatpush1.xpose.msra.mxu0 0.0
          %1060 = vmatprep.subr.mxu0 0.0
          %1061 = vmatpush1.xpose.msra.mxu0 0.0
          %1062 = vmatprep.subr.mxu0 0.0
          %1063 = vmatpush1.xpose.msra.mxu0 0.0
          %1064 = vmatprep.subr.mxu0 0.0
          %1065 = vmatpush1.xpose.msra.mxu0 0.0
          %1066 = vmatprep.subr.mxu0 0.0
          %1067 = vmatpush1.xpose.msra.mxu0 0.0
          %1068 = vmatprep.subr.mxu0 0.0
          %1069 = vmatpush1.xpose.msra.mxu0 0.0
          %1070 = vmatprep.subr.mxu0 0.0
          %1071 = vmatpush1.xpose.msra.mxu0 0.0
          %1072 = vmatprep.subr.mxu0 0.0
          %1073 = vmatpush1.xpose.msra.mxu0 0.0
          %1074 = vmatprep.subr.mxu0 0.0
          %1075 = vmatpush1.xpose.msra.mxu0 0.0
          %1076 = vmatprep.subr.mxu0 0.0
          %1077 = vmatpush1.xpose.msra.mxu0 0.0
          %1078 = vmatprep.subr.mxu0 0.0
          %1079 = vmatpush1.xpose.msra.mxu0 0.0
          %1080 = vmatprep.subr.mxu0 0.0
          %1081 = vmatpush1.xpose.msra.mxu0 0.0
          %1082 = vmatprep.subr.mxu0 0.0
          %1083 = vmatpush1.xpose.msra.mxu0 0.0
          %1084 = vmatprep.subr.mxu0 0.0
          %1085 = vmatpush1.xpose.msra.mxu0 0.0
          %1086 = vmatprep.subr.mxu0 0.0
          %1087 = vmatpush1.xpose.msra.mxu0 0.0
          %1088 = vmatprep.subr.mxu0 0.0
          %1089 = vmatpush1.xpose.msra.mxu0 0.0
          %1090 = vmatprep.subr.mxu0 0.0
          %1091 = vmatpush1.xpose.msra.mxu0 0.0
          %1092 = vmatprep.subr.mxu0 0.0
          %1093 = vmatpush1.xpose.msra.mxu0 0.0
          %1094 = vmatprep.subr.mxu0 0.0
          %1095 = vmatpush1.xpose.msra.mxu0 0.0
          %1096 = vmatprep.subr.mxu0 0.0
          %1097 = vmatpush1.xpose.msra.mxu0 0.0
          %1098 = vmatprep.subr.mxu0 0.0
          %1099 = vmatpush1.xpose.msra.mxu0 0.0
          %1100 = vmatprep.subr.mxu0 0.0
          %1101 = vmatpush1.xpose.msra.mxu0 0.0
          %1102 = vmatprep.subr.mxu0 0.0
          %1103 = vmatpush1.xpose.msra.mxu0 0.0
          %1104 = vmatprep.subr.mxu0 0.0
          %1105 = vmatpush1.xpose.msra.mxu0 0.0
          %1106 = vmatprep.subr.mxu0 0.0
          %1107 = vmatpush1.xpose.msra.mxu0 0.0
          %1108 = vmatprep.subr.mxu0 0.0
          %1109 = vmatpush1.xpose.msra.mxu0 0.0
          %1110 = vmatprep.subr.mxu0 0.0
          %1111 = vmatpush1.xpose.msra.mxu0 0.0
          %1112 = vmatprep.subr.mxu0 0.0
          %1113 = vmatpush1.xpose.msra.mxu0 0.0
          %1114 = vmatprep.subr.mxu0 0.0
          %1115 = vmatpush1.xpose.msra.mxu0 0.0
          %1116 = vmatprep.mubr.f32.mxu0 0.0
          %1117 = vmatmul.mubr.f32.gmra.mrb[0].mxu0 %v1048
          %v1118 = vpop.f32.mrb[0].mxu0
          %v1119 = vadd.f32 %v679, %v1118
          %v1120 = vpop.f32.mrb[0].mxu0
          %1121 = vdwg.mxu0
          %v1122 = vsel %vm819, %v891, -inf
          %1123 = vmax.xlane.f32.xlu0 %v1122
          %v1124 = vpop.xlane.xlu0 %1123
          %v1125 = vsel %vm819, %v967, -inf
          %1126 = vmax.xlane.f32.xlu0 %v1125
          %v1127 = vpop.xlane.xlu0 %1126
          %v1128 = vsel %vm819, %v1043, -inf
          %1129 = vmax.xlane.f32.xlu0 %v1128
          %v1130 = vpop.xlane.xlu0 %1129
          %v1131 = vsel %vm819, %v1119, -inf
          %1132 = vmax.xlane.f32.xlu0 %v1131
          %v1133 = vpop.xlane.xlu0 %1132
          %v1134 = vsub.f32 %v891, %v1124
          %v1135 = vsub.f32 %v967, %v1127
          %v1136 = vsub.f32 %v1043, %v1130
          %v1137 = vsub.f32 %v1119, %v1133
          %v1138 = vmul.f32 %v1134, 1.442695
          %v1139 = vpow.pop %v1138
          %v1140 = vmul.f32 %v1135, 1.442695
          %v1141 = vpow.pop %v1140
          %v1142 = vmul.f32 %v1136, 1.442695
          %v1143 = vpow.pop %v1142
          %v1144 = vmul.f32 %v1137, 1.442695
          %v1145 = vpow.pop %v1144
          %v1146 = vsel %vm819, %v1139, 0.0
          %1147 = vadd.xlane.f32.xlu0 %v1146
          %v1148 = vpop.xlane.xlu0 %1147
          %v1149 = vsel %vm819, %v1141, 0.0
          %1150 = vadd.xlane.f32.xlu0 %v1149
          %v1151 = vpop.xlane.xlu0 %1150
          %v1152 = vsel %vm819, %v1143, 0.0
          %1153 = vadd.xlane.f32.xlu0 %v1152
          %v1154 = vpop.xlane.xlu0 %1153
          %v1155 = vsel %vm819, %v1145, 0.0
          %1156 = vadd.xlane.f32.xlu0 %v1155
          %v1157 = vpop.xlane.xlu0 %1156
          %v1158 = vrcp.pop %v1148
          %v1159 = vrcp.pop %v1151
          %v1160 = vrcp.pop %v1154
          %v1161 = vrcp.pop %v1157
          %v1162 = vmul.f32 %v1139, %v1158
          %v1163 = vmul.f32 %v1141, %v1159
          %v1164 = vmul.f32 %v1143, %v1160
          %v1165 = vmul.f32 %v1145, %v1161
          %1166 = vrot.lane.b32.xlu0 %v800, 64
          %v1167 = vpop.permute.xlu0 %1166
          %v1170 = vsel %vm819, %v1162, 0
          %1172 = vmatprep.subr.mxu0 0.0
          %1173 = vmatpush1.msra.mxu0 %v1167
          %1174 = vmatprep.subr.mxu0 0.0
          %1175 = vmatpush1.msra.mxu0 0.0
          %1176 = vmatprep.subr.mxu0 0.0
          %1177 = vmatpush1.msra.mxu0 0.0
          %1178 = vmatprep.subr.mxu0 0.0
          %1179 = vmatpush1.msra.mxu0 0.0
          %1180 = vmatprep.subr.mxu0 0.0
          %1181 = vmatpush1.msra.mxu0 0.0
          %1182 = vmatprep.subr.mxu0 0.0
          %1183 = vmatpush1.msra.mxu0 0.0
          %1184 = vmatprep.subr.mxu0 0.0
          %1185 = vmatpush1.msra.mxu0 0.0
          %1186 = vmatprep.subr.mxu0 0.0
          %1187 = vmatpush1.msra.mxu0 0.0
          %1188 = vmatprep.subr.mxu0 0.0
          %1189 = vmatpush1.msra.mxu0 0.0
          %1190 = vmatprep.subr.mxu0 0.0
          %1191 = vmatpush1.msra.mxu0 0.0
          %1192 = vmatprep.subr.mxu0 0.0
          %1193 = vmatpush1.msra.mxu0 0.0
          %1194 = vmatprep.subr.mxu0 0.0
          %1195 = vmatpush1.msra.mxu0 0.0
          %1196 = vmatprep.subr.mxu0 0.0
          %1197 = vmatpush1.msra.mxu0 0.0
          %1198 = vmatprep.subr.mxu0 0.0
          %1199 = vmatpush1.msra.mxu0 0.0
          %1200 = vmatprep.subr.mxu0 0.0
          %1201 = vmatpush1.msra.mxu0 0.0
          %1202 = vmatprep.subr.mxu0 0.0
          %1203 = vmatpush1.msra.mxu0 0.0
          %1204 = vmatprep.subr.mxu0 0.0
          %1205 = vmatpush1.msra.mxu0 0.0
          %1206 = vmatprep.subr.mxu0 0.0
          %1207 = vmatpush1.msra.mxu0 0.0
          %1208 = vmatprep.subr.mxu0 0.0
          %1209 = vmatpush1.msra.mxu0 0.0
          %1210 = vmatprep.subr.mxu0 0.0
          %1211 = vmatpush1.msra.mxu0 0.0
          %1212 = vmatprep.subr.mxu0 0.0
          %1213 = vmatpush1.msra.mxu0 0.0
          %1214 = vmatprep.subr.mxu0 0.0
          %1215 = vmatpush1.msra.mxu0 0.0
          %1216 = vmatprep.subr.mxu0 0.0
          %1217 = vmatpush1.msra.mxu0 0.0
          %1218 = vmatprep.subr.mxu0 0.0
          %1219 = vmatpush1.msra.mxu0 0.0
          %1220 = vmatprep.subr.mxu0 0.0
          %1221 = vmatpush1.msra.mxu0 0.0
          %1222 = vmatprep.subr.mxu0 0.0
          %1223 = vmatpush1.msra.mxu0 0.0
          %1224 = vmatprep.subr.mxu0 0.0
          %1225 = vmatpush1.msra.mxu0 0.0
          %1226 = vmatprep.subr.mxu0 0.0
          %1227 = vmatpush1.msra.mxu0 0.0
          %1228 = vmatprep.subr.mxu0 0.0
          %1229 = vmatpush1.msra.mxu0 0.0
          %1230 = vmatprep.subr.mxu0 0.0
          %1231 = vmatpush1.msra.mxu0 0.0
          %1232 = vmatprep.subr.mxu0 0.0
          %1233 = vmatpush1.msra.mxu0 0.0
          %1234 = vmatprep.subr.mxu0 0.0
          %1235 = vmatpush1.msra.mxu0 0.0
          %1236 = vmatprep.mubr.f32.mxu0 0.0
          %1237 = vmatmul.mubr.f32.gmra.mrb[0].mxu0 %v1170
          %v1238 = vpop.f32.mrb[0].mxu0
          %v1239 = vadd.f32 0.0, %v1238
          %v1240 = vpop.f32.mrb[0].mxu0
          %1241 = vdwg.mxu0
          %1242 = vrot.lane.b32.xlu0 %v805, 64
          %v1243 = vpop.permute.xlu0 %1242
          %v1246 = vsel %vm819, %v1163, 0
          %1248 = vmatprep.subr.mxu0 0.0
          %1249 = vmatpush1.msra.mxu0 %v1243
          %1250 = vmatprep.subr.mxu0 0.0
          %1251 = vmatpush1.msra.mxu0 0.0
          %1252 = vmatprep.subr.mxu0 0.0
          %1253 = vmatpush1.msra.mxu0 0.0
          %1254 = vmatprep.subr.mxu0 0.0
          %1255 = vmatpush1.msra.mxu0 0.0
          %1256 = vmatprep.subr.mxu0 0.0
          %1257 = vmatpush1.msra.mxu0 0.0
          %1258 = vmatprep.subr.mxu0 0.0
          %1259 = vmatpush1.msra.mxu0 0.0
          %1260 = vmatprep.subr.mxu0 0.0
          %1261 = vmatpush1.msra.mxu0 0.0
          %1262 = vmatprep.subr.mxu0 0.0
          %1263 = vmatpush1.msra.mxu0 0.0
          %1264 = vmatprep.subr.mxu0 0.0
          %1265 = vmatpush1.msra.mxu0 0.0
          %1266 = vmatprep.subr.mxu0 0.0
          %1267 = vmatpush1.msra.mxu0 0.0
          %1268 = vmatprep.subr.mxu0 0.0
          %1269 = vmatpush1.msra.mxu0 0.0
          %1270 = vmatprep.subr.mxu0 0.0
          %1271 = vmatpush1.msra.mxu0 0.0
          %1272 = vmatprep.subr.mxu0 0.0
          %1273 = vmatpush1.msra.mxu0 0.0
          %1274 = vmatprep.subr.mxu0 0.0
          %1275 = vmatpush1.msra.mxu0 0.0
          %1276 = vmatprep.subr.mxu0 0.0
          %1277 = vmatpush1.msra.mxu0 0.0
          %1278 = vmatprep.subr.mxu0 0.0
          %1279 = vmatpush1.msra.mxu0 0.0
          %1280 = vmatprep.subr.mxu0 0.0
          %1281 = vmatpush1.msra.mxu0 0.0
          %1282 = vmatprep.subr.mxu0 0.0
          %1283 = vmatpush1.msra.mxu0 0.0
          %1284 = vmatprep.subr.mxu0 0.0
          %1285 = vmatpush1.msra.mxu0 0.0
          %1286 = vmatprep.subr.mxu0 0.0
          %1287 = vmatpush1.msra.mxu0 0.0
          %1288 = vmatprep.subr.mxu0 0.0
          %1289 = vmatpush1.msra.mxu0 0.0
          %1290 = vmatprep.subr.mxu0 0.0
          %1291 = vmatpush1.msra.mxu0 0.0
          %1292 = vmatprep.subr.mxu0 0.0
          %1293 = vmatpush1.msra.mxu0 0.0
          %1294 = vmatprep.subr.mxu0 0.0
          %1295 = vmatpush1.msra.mxu0 0.0
          %1296 = vmatprep.subr.mxu0 0.0
          %1297 = vmatpush1.msra.mxu0 0.0
          %1298 = vmatprep.subr.mxu0 0.0
          %1299 = vmatpush1.msra.mxu0 0.0
          %1300 = vmatprep.subr.mxu0 0.0
          %1301 = vmatpush1.msra.mxu0 0.0
          %1302 = vmatprep.subr.mxu0 0.0
          %1303 = vmatpush1.msra.mxu0 0.0
          %1304 = vmatprep.subr.mxu0 0.0
          %1305 = vmatpush1.msra.mxu0 0.0
          %1306 = vmatprep.subr.mxu0 0.0
          %1307 = vmatpush1.msra.mxu0 0.0
          %1308 = vmatprep.subr.mxu0 0.0
          %1309 = vmatpush1.msra.mxu0 0.0
          %1310 = vmatprep.subr.mxu0 0.0
          %1311 = vmatpush1.msra.mxu0 0.0
          %1312 = vmatprep.mubr.f32.mxu0 0.0
          %1313 = vmatmul.mubr.f32.gmra.mrb[0].mxu0 %v1246
          %v1314 = vpop.f32.mrb[0].mxu0
          %v1315 = vadd.f32 0.0, %v1314
          %v1316 = vpop.f32.mrb[0].mxu0
          %1317 = vdwg.mxu0
          %1318 = vrot.lane.b32.xlu0 %v807, 64
          %v1319 = vpop.permute.xlu0 %1318
          %v1322 = vsel %vm819, %v1164, 0
          %1324 = vmatprep.subr.mxu0 0.0
          %1325 = vmatpush1.msra.mxu0 %v1319
          %1326 = vmatprep.subr.mxu0 0.0
          %1327 = vmatpush1.msra.mxu0 0.0
          %1328 = vmatprep.subr.mxu0 0.0
          %1329 = vmatpush1.msra.mxu0 0.0
          %1330 = vmatprep.subr.mxu0 0.0
          %1331 = vmatpush1.msra.mxu0 0.0
          %1332 = vmatprep.subr.mxu0 0.0
          %1333 = vmatpush1.msra.mxu0 0.0
          %1334 = vmatprep.subr.mxu0 0.0
          %1335 = vmatpush1.msra.mxu0 0.0
          %1336 = vmatprep.subr.mxu0 0.0
          %1337 = vmatpush1.msra.mxu0 0.0
          %1338 = vmatprep.subr.mxu0 0.0
          %1339 = vmatpush1.msra.mxu0 0.0
          %1340 = vmatprep.subr.mxu0 0.0
          %1341 = vmatpush1.msra.mxu0 0.0
          %1342 = vmatprep.subr.mxu0 0.0
          %1343 = vmatpush1.msra.mxu0 0.0
          %1344 = vmatprep.subr.mxu0 0.0
          %1345 = vmatpush1.msra.mxu0 0.0
          %1346 = vmatprep.subr.mxu0 0.0
          %1347 = vmatpush1.msra.mxu0 0.0
          %1348 = vmatprep.subr.mxu0 0.0
          %1349 = vmatpush1.msra.mxu0 0.0
          %1350 = vmatprep.subr.mxu0 0.0
          %1351 = vmatpush1.msra.mxu0 0.0
          %1352 = vmatprep.subr.mxu0 0.0
          %1353 = vmatpush1.msra.mxu0 0.0
          %1354 = vmatprep.subr.mxu0 0.0
          %1355 = vmatpush1.msra.mxu0 0.0
          %1356 = vmatprep.subr.mxu0 0.0
          %1357 = vmatpush1.msra.mxu0 0.0
          %1358 = vmatprep.subr.mxu0 0.0
          %1359 = vmatpush1.msra.mxu0 0.0
          %1360 = vmatprep.subr.mxu0 0.0
          %1361 = vmatpush1.msra.mxu0 0.0
          %1362 = vmatprep.subr.mxu0 0.0
          %1363 = vmatpush1.msra.mxu0 0.0
          %1364 = vmatprep.subr.mxu0 0.0
          %1365 = vmatpush1.msra.mxu0 0.0
          %1366 = vmatprep.subr.mxu0 0.0
          %1367 = vmatpush1.msra.mxu0 0.0
          %1368 = vmatprep.subr.mxu0 0.0
          %1369 = vmatpush1.msra.mxu0 0.0
          %1370 = vmatprep.subr.mxu0 0.0
          %1371 = vmatpush1.msra.mxu0 0.0
          %1372 = vmatprep.subr.mxu0 0.0
          %1373 = vmatpush1.msra.mxu0 0.0
          %1374 = vmatprep.subr.mxu0 0.0
          %1375 = vmatpush1.msra.mxu0 0.0
          %1376 = vmatprep.subr.mxu0 0.0
          %1377 = vmatpush1.msra.mxu0 0.0
          %1378 = vmatprep.subr.mxu0 0.0
          %1379 = vmatpush1.msra.mxu0 0.0
          %1380 = vmatprep.subr.mxu0 0.0
          %1381 = vmatpush1.msra.mxu0 0.0
          %1382 = vmatprep.subr.mxu0 0.0
          %1383 = vmatpush1.msra.mxu0 0.0
          %1384 = vmatprep.subr.mxu0 0.0
          %1385 = vmatpush1.msra.mxu0 0.0
          %1386 = vmatprep.subr.mxu0 0.0
          %1387 = vmatpush1.msra.mxu0 0.0
          %1388 = vmatprep.mubr.f32.mxu0 0.0
          %1389 = vmatmul.mubr.f32.gmra.mrb[0].mxu0 %v1322
          %v1390 = vpop.f32.mrb[0].mxu0
          %v1391 = vadd.f32 0.0, %v1390
          %v1392 = vpop.f32.mrb[0].mxu0
          %1393 = vdwg.mxu0
          %1394 = vrot.lane.b32.xlu0 %v809, 64
          %v1395 = vpop.permute.xlu0 %1394
          %v1398 = vsel %vm819, %v1165, 0
          %1400 = vmatprep.subr.mxu0 0.0
          %1401 = vmatpush1.msra.mxu0 %v1395
          %1402 = vmatprep.subr.mxu0 0.0
          %1403 = vmatpush1.msra.mxu0 0.0
          %1404 = vmatprep.subr.mxu0 0.0
          %1405 = vmatpush1.msra.mxu0 0.0
          %1406 = vmatprep.subr.mxu0 0.0
          %1407 = vmatpush1.msra.mxu0 0.0
          %1408 = vmatprep.subr.mxu0 0.0
          %1409 = vmatpush1.msra.mxu0 0.0
          %1410 = vmatprep.subr.mxu0 0.0
          %1411 = vmatpush1.msra.mxu0 0.0
          %1412 = vmatprep.subr.mxu0 0.0
          %1413 = vmatpush1.msra.mxu0 0.0
          %1414 = vmatprep.subr.mxu0 0.0
          %1415 = vmatpush1.msra.mxu0 0.0
          %1416 = vmatprep.subr.mxu0 0.0
          %1417 = vmatpush1.msra.mxu0 0.0
          %1418 = vmatprep.subr.mxu0 0.0
          %1419 = vmatpush1.msra.mxu0 0.0
          %1420 = vmatprep.subr.mxu0 0.0
          %1421 = vmatpush1.msra.mxu0 0.0
          %1422 = vmatprep.subr.mxu0 0.0
          %1423 = vmatpush1.msra.mxu0 0.0
          %1424 = vmatprep.subr.mxu0 0.0
          %1425 = vmatpush1.msra.mxu0 0.0
          %1426 = vmatprep.subr.mxu0 0.0
          %1427 = vmatpush1.msra.mxu0 0.0
          %1428 = vmatprep.subr.mxu0 0.0
          %1429 = vmatpush1.msra.mxu0 0.0
          %1430 = vmatprep.subr.mxu0 0.0
          %1431 = vmatpush1.msra.mxu0 0.0
          %1432 = vmatprep.subr.mxu0 0.0
          %1433 = vmatpush1.msra.mxu0 0.0
          %1434 = vmatprep.subr.mxu0 0.0
          %1435 = vmatpush1.msra.mxu0 0.0
          %1436 = vmatprep.subr.mxu0 0.0
          %1437 = vmatpush1.msra.mxu0 0.0
          %1438 = vmatprep.subr.mxu0 0.0
          %1439 = vmatpush1.msra.mxu0 0.0
          %1440 = vmatprep.subr.mxu0 0.0
          %1441 = vmatpush1.msra.mxu0 0.0
          %1442 = vmatprep.subr.mxu0 0.0
          %1443 = vmatpush1.msra.mxu0 0.0
          %1444 = vmatprep.subr.mxu0 0.0
          %1445 = vmatpush1.msra.mxu0 0.0
          %1446 = vmatprep.subr.mxu0 0.0
          %1447 = vmatpush1.msra.mxu0 0.0
          %1448 = vmatprep.subr.mxu0 0.0
          %1449 = vmatpush1.msra.mxu0 0.0
          %1450 = vmatprep.subr.mxu0 0.0
          %1451 = vmatpush1.msra.mxu0 0.0
          %1452 = vmatprep.subr.mxu0 0.0
          %1453 = vmatpush1.msra.mxu0 0.0
          %1454 = vmatprep.subr.mxu0 0.0
          %1455 = vmatpush1.msra.mxu0 0.0
          %1456 = vmatprep.subr.mxu0 0.0
          %1457 = vmatpush1.msra.mxu0 0.0
          %1458 = vmatprep.subr.mxu0 0.0
          %1459 = vmatpush1.msra.mxu0 0.0
          %1460 = vmatprep.subr.mxu0 0.0
          %1461 = vmatpush1.msra.mxu0 0.0
          %1462 = vmatprep.subr.mxu0 0.0
          %1463 = vmatpush1.msra.mxu0 0.0
          %1464 = vmatprep.mubr.f32.mxu0 0.0
          %1465 = vmatmul.mubr.f32.gmra.mrb[0].mxu0 %v1398
          %v1466 = vpop.f32.mrb[0].mxu0
          %v1467 = vadd.f32 0.0, %v1466
          %v1468 = vpop.f32.mrb[0].mxu0
          %1469 = vdwg.mxu0
          %1471 = vrot.lane.b32.xlu0 %v1315, 8
          %v1472 = vpop.permute.xlu0 %1471
          %1475 = vrot.lane.b32.xlu0 %v1391, 16
          %v1476 = vpop.permute.xlu0 %1475
          %1479 = vrot.lane.b32.xlu0 %v1467, 24
          %v1480 = vpop.permute.xlu0 %1479
          %v1482 = vsel %vm819, %v1239, %v1472
          %vm1483 = vcmask 130048
          %v1484 = vsel %vm1483, %v1482, %v1476
          %vm1485 = vcmask 195584
          %v1486 = vsel %vm1485, %v1484, %v1480
          %v1487 = vlaneseq
          %v1488 = vshrl.u32 %v1487, 7
          %v1489 = vsub.s32 0, %v1488
          %v1490 = vrot.slane %v816, %v1489
          %v1492 = vsel %vm692, %v1486, 0
          %1494 = vmatprep.subr.mxu0 0.0
          %1495 = vmatpush1.msra.mxu0 %v811
          %1496 = vmatprep.subr.mxu0 0.0
          %1497 = vmatpush1.msra.mxu0 %v812
          %1498 = vmatprep.subr.mxu0 0.0
          %1499 = vmatpush1.msra.mxu0 %v813
          %1500 = vmatprep.subr.mxu0 0.0
          %1501 = vmatpush1.msra.mxu0 %v814
          %1502 = vmatprep.subr.mxu0 0.0
          %1503 = vmatpush1.msra.mxu0 0.0
          %1504 = vmatprep.subr.mxu0 0.0
          %1505 = vmatpush1.msra.mxu0 0.0
          %1506 = vmatprep.subr.mxu0 0.0
          %1507 = vmatpush1.msra.mxu0 0.0
          %1508 = vmatprep.subr.mxu0 0.0
          %1509 = vmatpush1.msra.mxu0 0.0
          %1510 = vmatprep.subr.mxu0 0.0
          %1511 = vmatpush1.msra.mxu0 0.0
          %1512 = vmatprep.subr.mxu0 0.0
          %1513 = vmatpush1.msra.mxu0 0.0
          %1514 = vmatprep.subr.mxu0 0.0
          %1515 = vmatpush1.msra.mxu0 0.0
          %1516 = vmatprep.subr.mxu0 0.0
          %1517 = vmatpush1.msra.mxu0 0.0
          %1518 = vmatprep.subr.mxu0 0.0
          %1519 = vmatpush1.msra.mxu0 0.0
          %1520 = vmatprep.subr.mxu0 0.0
          %1521 = vmatpush1.msra.mxu0 0.0
          %1522 = vmatprep.subr.mxu0 0.0
          %1523 = vmatpush1.msra.mxu0 0.0
          %1524 = vmatprep.subr.mxu0 0.0
          %1525 = vmatpush1.msra.mxu0 0.0
          %1526 = vmatprep.subr.mxu0 0.0
          %1527 = vmatpush1.msra.mxu0 0.0
          %1528 = vmatprep.subr.mxu0 0.0
          %1529 = vmatpush1.msra.mxu0 0.0
          %1530 = vmatprep.subr.mxu0 0.0
          %1531 = vmatpush1.msra.mxu0 0.0
          %1532 = vmatprep.subr.mxu0 0.0
          %1533 = vmatpush1.msra.mxu0 0.0
          %1534 = vmatprep.subr.mxu0 0.0
          %1535 = vmatpush1.msra.mxu0 0.0
          %1536 = vmatprep.subr.mxu0 0.0
          %1537 = vmatpush1.msra.mxu0 0.0
          %1538 = vmatprep.subr.mxu0 0.0
          %1539 = vmatpush1.msra.mxu0 0.0
          %1540 = vmatprep.subr.mxu0 0.0
          %1541 = vmatpush1.msra.mxu0 0.0
          %1542 = vmatprep.subr.mxu0 0.0
          %1543 = vmatpush1.msra.mxu0 0.0
          %1544 = vmatprep.subr.mxu0 0.0
          %1545 = vmatpush1.msra.mxu0 0.0
          %1546 = vmatprep.subr.mxu0 0.0
          %1547 = vmatpush1.msra.mxu0 0.0
          %1548 = vmatprep.subr.mxu0 0.0
          %1549 = vmatpush1.msra.mxu0 0.0
          %1550 = vmatprep.subr.mxu0 0.0
          %1551 = vmatpush1.msra.mxu0 0.0
          %1552 = vmatprep.subr.mxu0 0.0
          %1553 = vmatpush1.msra.mxu0 0.0
          %1554 = vmatprep.subr.mxu0 0.0
          %1555 = vmatpush1.msra.mxu0 0.0
          %1556 = vmatprep.subr.mxu0 0.0
          %1557 = vmatpush1.msra.mxu0 0.0
          %1558 = vmatprep.mubr.f32.mxu0 0.0
          %1559 = vmatmul.mubr.f32.gmra.mrb[0].mxu0 %v1492
          %v1560 = vpop.f32.mrb[0].mxu0
          %v1561 = vadd.f32 %v1490, %v1560
          %v1562 = vpop.f32.mrb[0].mxu0
          %1563 = vdwg.mxu0
          %v1564 = vadd.f32 %v687, %v1561
          %s1565 = sadd.s32 %s688, 2
          %s1566 = sld [smem:[#allocation9 + %s1565]]
          %s1567 = sadd.s32 %s688, 3
          %s1568 = sld [smem:[#allocation9 + %s1567]]
          %v1569 = vsel %vm692, %v1564, 0.0
          %1570 = vadd.xlane.f32.xlu0 %v1569
          %v1571 = vpop.xlane.xlu0 %1570
          %v1572 = vmul.f32 %v1571, %v696
          %v1573 = vsub.f32 %v1564, %v1572
          %v1574 = vmul.f32 %v1573, %v1573
          %v1575 = vsel %vm692, %v1574, 0.0
          %1576 = vadd.xlane.f32.xlu0 %v1575
          %v1577 = vpop.xlane.xlu0 %1576
          %v1578 = vmul.f32 %v1577, 0.032258064
          %v1579 = vrsqrt.pop %v1578
          %v1580 = vmul.f32 %v1578, %v1579
          %vm1581 = vcmp.eq.f32.partialorder %v1578, inf
          %v1582 = vsel %vm1581, %v1578, %v1580
          %vm1583 = vcmp.eq.f32.partialorder %v1578, 0.0
          %v1584 = vand.u32 %v1578, 2147483648
          %v1585 = vsel %vm1583, %v1584, %v1582
          %v1586 = vadd.f32 %v1585, 1e-06
          %v1587 = vrcp.pop %v1586
          %v1588 = vstv %s1566
          %v1589 = vmul.f32 %v1588, %v1573
          %v1590 = vmul.f32 %v1589, %v1587
          %v1591 = vstv %s1568
          %v1592 = vadd.f32 %v1590, %v1591
          %s1593 = scalar_lea.vmem %s8, %s718
          %v1594 = vld [vmem:[%s1593] sm:$0xff]
          %v1595 = vld [vmem:[%s1593 + $0x8] sm:$0xff]
          %v1596 = vld [vmem:[%s1593 + $0x10] sm:$0xff]
          %v1597 = vld [vmem:[%s1593 + $0x18] sm:$0xff]
          %s1598 = scalar_lea.vmem %s9, %s682
          %v1599 = vld [vmem:[%s1598] sm:$0x1]
          %v1600 = vlaneseq
          %v1601 = vshrl.u32 %v1600, 7
          %v1602 = vsub.s32 0, %v1601
          %v1603 = vrot.slane %v1599, %v1602
          %v1605 = vsel %vm692, %v1592, 0
          %1607 = vmatprep.subr.mxu0 0.0
          %1608 = vmatpush1.msra.mxu0 %v1594
          %1609 = vmatprep.subr.mxu0 0.0
          %1610 = vmatpush1.msra.mxu0 %v1595
          %1611 = vmatprep.subr.mxu0 0.0
          %1612 = vmatpush1.msra.mxu0 %v1596
          %1613 = vmatprep.subr.mxu0 0.0
          %1614 = vmatpush1.msra.mxu0 %v1597
          %1615 = vmatprep.subr.mxu0 0.0
          %1616 = vmatpush1.msra.mxu0 0.0
          %1617 = vmatprep.subr.mxu0 0.0
          %1618 = vmatpush1.msra.mxu0 0.0
          %1619 = vmatprep.subr.mxu0 0.0
          %1620 = vmatpush1.msra.mxu0 0.0
          %1621 = vmatprep.subr.mxu0 0.0
          %1622 = vmatpush1.msra.mxu0 0.0
          %1623 = vmatprep.subr.mxu0 0.0
          %1624 = vmatpush1.msra.mxu0 0.0
          %1625 = vmatprep.subr.mxu0 0.0
          %1626 = vmatpush1.msra.mxu0 0.0
          %1627 = vmatprep.subr.mxu0 0.0
          %1628 = vmatpush1.msra.mxu0 0.0
          %1629 = vmatprep.subr.mxu0 0.0
          %1630 = vmatpush1.msra.mxu0 0.0
          %1631 = vmatprep.subr.mxu0 0.0
          %1632 = vmatpush1.msra.mxu0 0.0
          %1633 = vmatprep.subr.mxu0 0.0
          %1634 = vmatpush1.msra.mxu0 0.0
          %1635 = vmatprep.subr.mxu0 0.0
          %1636 = vmatpush1.msra.mxu0 0.0
          %1637 = vmatprep.subr.mxu0 0.0
          %1638 = vmatpush1.msra.mxu0 0.0
          %1639 = vmatprep.subr.mxu0 0.0
          %1640 = vmatpush1.msra.mxu0 0.0
          %1641 = vmatprep.subr.mxu0 0.0
          %1642 = vmatpush1.msra.mxu0 0.0
          %1643 = vmatprep.subr.mxu0 0.0
          %1644 = vmatpush1.msra.mxu0 0.0
          %1645 = vmatprep.subr.mxu0 0.0
          %1646 = vmatpush1.msra.mxu0 0.0
          %1647 = vmatprep.subr.mxu0 0.0
          %1648 = vmatpush1.msra.mxu0 0.0
          %1649 = vmatprep.subr.mxu0 0.0
          %1650 = vmatpush1.msra.mxu0 0.0
          %1651 = vmatprep.subr.mxu0 0.0
          %1652 = vmatpush1.msra.mxu0 0.0
          %1653 = vmatprep.subr.mxu0 0.0
          %1654 = vmatpush1.msra.mxu0 0.0
          %1655 = vmatprep.subr.mxu0 0.0
          %1656 = vmatpush1.msra.mxu0 0.0
          %1657 = vmatprep.subr.mxu0 0.0
          %1658 = vmatpush1.msra.mxu0 0.0
          %1659 = vmatprep.subr.mxu0 0.0
          %1660 = vmatpush1.msra.mxu0 0.0
          %1661 = vmatprep.subr.mxu0 0.0
          %1662 = vmatpush1.msra.mxu0 0.0
          %1663 = vmatprep.subr.mxu0 0.0
          %1664 = vmatpush1.msra.mxu0 0.0
          %1665 = vmatprep.subr.mxu0 0.0
          %1666 = vmatpush1.msra.mxu0 0.0
          %1667 = vmatprep.subr.mxu0 0.0
          %1668 = vmatpush1.msra.mxu0 0.0
          %1669 = vmatprep.subr.mxu0 0.0
          %1670 = vmatpush1.msra.mxu0 0.0
          %1671 = vmatprep.mubr.f32.mxu0 0.0
          %1672 = vmatmul.mubr.f32.gmra.mrb[0].mxu0 %v1605
          %v1673 = vpop.f32.mrb[0].mxu0
          %v1674 = vadd.f32 %v1603, %v1673
          %v1675 = vpop.f32.mrb[0].mxu0
          %1676 = vdwg.mxu0
          %s1677 = scalar_lea.vmem [#allocation2], %s718
          %v1678 = vld [vmem:[%s1677] sm:$0xff]
          %v1679 = vld [vmem:[%s1677 + $0x8] sm:$0xff]
          %v1680 = vld [vmem:[%s1677 + $0x10] sm:$0xff]
          %v1681 = vld [vmem:[%s1677 + $0x18] sm:$0xff]
          %s1682 = scalar_lea.vmem %s11, %s682
          %v1683 = vld [vmem:[%s1682] sm:$0x1]
          %v1684 = vlaneseq
          %v1685 = vshrl.u32 %v1684, 7
          %v1686 = vsub.s32 0, %v1685
          %v1687 = vrot.slane %v1683, %v1686
          %v1689 = vsel %vm692, %v677, 0
          %v1692 = vsel %vm692, %v678, 0
          %1694 = vmatprep.subr.mxu0 0.0
          %1695 = vmatpush1.msra.mxu0 %v1678
          %1696 = vmatprep.subr.mxu0 0.0
          %1697 = vmatpush1.msra.mxu0 %v1679
          %1698 = vmatprep.subr.mxu0 0.0
          %1699 = vmatpush1.msra.mxu0 %v1680
          %1700 = vmatprep.subr.mxu0 0.0
          %1701 = vmatpush1.msra.mxu0 %v1681
          %1702 = vmatprep.subr.mxu0 0.0
          %1703 = vmatpush1.msra.mxu0 0.0
          %1704 = vmatprep.subr.mxu0 0.0
          %1705 = vmatpush1.msra.mxu0 0.0
          %1706 = vmatprep.subr.mxu0 0.0
          %1707 = vmatpush1.msra.mxu0 0.0
          %1708 = vmatprep.subr.mxu0 0.0
          %1709 = vmatpush1.msra.mxu0 0.0
          %1710 = vmatprep.subr.mxu0 0.0
          %1711 = vmatpush1.msra.mxu0 0.0
          %1712 = vmatprep.subr.mxu0 0.0
          %1713 = vmatpush1.msra.mxu0 0.0
          %1714 = vmatprep.subr.mxu0 0.0
          %1715 = vmatpush1.msra.mxu0 0.0
          %1716 = vmatprep.subr.mxu0 0.0
          %1717 = vmatpush1.msra.mxu0 0.0
          %1718 = vmatprep.subr.mxu0 0.0
          %1719 = vmatpush1.msra.mxu0 0.0
          %1720 = vmatprep.subr.mxu0 0.0
          %1721 = vmatpush1.msra.mxu0 0.0
          %1722 = vmatprep.subr.mxu0 0.0
          %1723 = vmatpush1.msra.mxu0 0.0
          %1724 = vmatprep.subr.mxu0 0.0
          %1725 = vmatpush1.msra.mxu0 0.0
          %1726 = vmatprep.subr.mxu0 0.0
          %1727 = vmatpush1.msra.mxu0 0.0
          %1728 = vmatprep.subr.mxu0 0.0
          %1729 = vmatpush1.msra.mxu0 0.0
          %1730 = vmatprep.subr.mxu0 0.0
          %1731 = vmatpush1.msra.mxu0 0.0
          %1732 = vmatprep.subr.mxu0 0.0
          %1733 = vmatpush1.msra.mxu0 0.0
          %1734 = vmatprep.subr.mxu0 0.0
          %1735 = vmatpush1.msra.mxu0 0.0
          %1736 = vmatprep.subr.mxu0 0.0
          %1737 = vmatpush1.msra.mxu0 0.0
          %1738 = vmatprep.subr.mxu0 0.0
          %1739 = vmatpush1.msra.mxu0 0.0
          %1740 = vmatprep.subr.mxu0 0.0
          %1741 = vmatpush1.msra.mxu0 0.0
          %1742 = vmatprep.subr.mxu0 0.0
          %1743 = vmatpush1.msra.mxu0 0.0
          %1744 = vmatprep.subr.mxu0 0.0
          %1745 = vmatpush1.msra.mxu0 0.0
          %1746 = vmatprep.subr.mxu0 0.0
          %1747 = vmatpush1.msra.mxu0 0.0
          %1748 = vmatprep.subr.mxu0 0.0
          %1749 = vmatpush1.msra.mxu0 0.0
          %1750 = vmatprep.subr.mxu0 0.0
          %1751 = vmatpush1.msra.mxu0 0.0
          %1752 = vmatprep.subr.mxu0 0.0
          %1753 = vmatpush1.msra.mxu0 0.0
          %1754 = vmatprep.subr.mxu0 0.0
          %1755 = vmatpush1.msra.mxu0 0.0
          %1756 = vmatprep.subr.mxu0 0.0
          %1757 = vmatpush1.msra.mxu0 0.0
          %1758 = vmatprep.mubr.f32.mxu0 0.0
          %1759 = vmatmul.mubr.f32.gmra.mrb[0].mxu0 %v1689
          %v1760 = vpop.f32.mrb[0].mxu0
          %v1761 = vadd.f32 %v1687, %v1760
          %v1762 = vpop.f32.mrb[0].mxu0
          %1763 = vmatprep.mubr.f32.mxu0 0.0
          %1764 = vmatmul.mubr.f32.gmra.mrb[0].mxu0 %v1692
          %v1765 = vpop.f32.mrb[0].mxu0
          %v1766 = vadd.f32 %v1687, %v1765
          %v1767 = vpop.f32.mrb[0].mxu0
          %1768 = vdwg.mxu0
          %1770 = vrot.lane.b32.xlu0 %v1674, 120
          %v1771 = vpop.permute.xlu0 %1770
          %1772 = vrot.lane.b32.xlu0 %v1674, 112
          %v1773 = vpop.permute.xlu0 %1772
          %1774 = vrot.lane.b32.xlu0 %v1674, 104
          %v1775 = vpop.permute.xlu0 %1774
          %1778 = vrot.lane.b32.xlu0 %v1761, 120
          %v1779 = vpop.permute.xlu0 %1778
          %1780 = vrot.lane.b32.xlu0 %v1766, 120
          %v1781 = vpop.permute.xlu0 %1780
          %1782 = vrot.lane.b32.xlu0 %v1761, 112
          %v1783 = vpop.permute.xlu0 %1782
          %1784 = vrot.lane.b32.xlu0 %v1766, 112
          %v1785 = vpop.permute.xlu0 %1784
          %1786 = vrot.lane.b32.xlu0 %v1761, 104
          %v1787 = vpop.permute.xlu0 %1786
          %1788 = vrot.lane.b32.xlu0 %v1766, 104
          %v1789 = vpop.permute.xlu0 %1788
          %s1790 = scalar_lea.vmem [#allocation6], %s718
          %v1791 = vld [vmem:[%s1790] sm:$0xff]
          %v1792 = vld [vmem:[%s1790 + $0x8] sm:$0xff]
          %v1793 = vld [vmem:[%s1790 + $0x10] sm:$0xff]
          %v1794 = vld [vmem:[%s1790 + $0x18] sm:$0xff]
          %s1795 = scalar_lea.vmem %s13, %s682
          %v1796 = vld [vmem:[%s1795] sm:$0x1]
          %v1798 = vlaneseq
          %v1799 = vshrl.u32 %v1798, 7
          %v1800 = vsub.s32 0, %v1799
          %v1801 = vrot.slane %v680, %v1800
          %v1803 = vsel %vm819, %v1674, 0
          %v1805 = vsel %vm819, %v1761, 0
          %v1807 = vsel %vm819, %v1766, 0
          %1809 = vmatprep.subr.mxu0 0.0
          %1810 = vmatpush1.xpose.msra.mxu0 %v1805
          %1811 = vmatprep.subr.mxu0 0.0
          %1812 = vmatpush1.xpose.msra.mxu0 %v1807
          %1813 = vmatprep.subr.mxu0 0.0
          %1814 = vmatpush1.xpose.msra.mxu0 0.0
          %1815 = vmatprep.subr.mxu0 0.0
          %1816 = vmatpush1.xpose.msra.mxu0 0.0
          %1817 = vmatprep.subr.mxu0 0.0
          %1818 = vmatpush1.xpose.msra.mxu0 0.0
          %1819 = vmatprep.subr.mxu0 0.0
          %1820 = vmatpush1.xpose.msra.mxu0 0.0
          %1821 = vmatprep.subr.mxu0 0.0
          %1822 = vmatpush1.xpose.msra.mxu0 0.0
          %1823 = vmatprep.subr.mxu0 0.0
          %1824 = vmatpush1.xpose.msra.mxu0 0.0
          %1825 = vmatprep.subr.mxu0 0.0
          %1826 = vmatpush1.xpose.msra.mxu0 0.0
          %1827 = vmatprep.subr.mxu0 0.0
          %1828 = vmatpush1.xpose.msra.mxu0 0.0
          %1829 = vmatprep.subr.mxu0 0.0
          %1830 = vmatpush1.xpose.msra.mxu0 0.0
          %1831 = vmatprep.subr.mxu0 0.0
          %1832 = vmatpush1.xpose.msra.mxu0 0.0
          %1833 = vmatprep.subr.mxu0 0.0
          %1834 = vmatpush1.xpose.msra.mxu0 0.0
          %1835 = vmatprep.subr.mxu0 0.0
          %1836 = vmatpush1.xpose.msra.mxu0 0.0
          %1837 = vmatprep.subr.mxu0 0.0
          %1838 = vmatpush1.xpose.msra.mxu0 0.0
          %1839 = vmatprep.subr.mxu0 0.0
          %1840 = vmatpush1.xpose.msra.mxu0 0.0
          %1841 = vmatprep.subr.mxu0 0.0
          %1842 = vmatpush1.xpose.msra.mxu0 0.0
          %1843 = vmatprep.subr.mxu0 0.0
          %1844 = vmatpush1.xpose.msra.mxu0 0.0
          %1845 = vmatprep.subr.mxu0 0.0
          %1846 = vmatpush1.xpose.msra.mxu0 0.0
          %1847 = vmatprep.subr.mxu0 0.0
          %1848 = vmatpush1.xpose.msra.mxu0 0.0
          %1849 = vmatprep.subr.mxu0 0.0
          %1850 = vmatpush1.xpose.msra.mxu0 0.0
          %1851 = vmatprep.subr.mxu0 0.0
          %1852 = vmatpush1.xpose.msra.mxu0 0.0
          %1853 = vmatprep.subr.mxu0 0.0
          %1854 = vmatpush1.xpose.msra.mxu0 0.0
          %1855 = vmatprep.subr.mxu0 0.0
          %1856 = vmatpush1.xpose.msra.mxu0 0.0
          %1857 = vmatprep.subr.mxu0 0.0
          %1858 = vmatpush1.xpose.msra.mxu0 0.0
          %1859 = vmatprep.subr.mxu0 0.0
          %1860 = vmatpush1.xpose.msra.mxu0 0.0
          %1861 = vmatprep.subr.mxu0 0.0
          %1862 = vmatpush1.xpose.msra.mxu0 0.0
          %1863 = vmatprep.subr.mxu0 0.0
          %1864 = vmatpush1.xpose.msra.mxu0 0.0
          %1865 = vmatprep.subr.mxu0 0.0
          %1866 = vmatpush1.xpose.msra.mxu0 0.0
          %1867 = vmatprep.subr.mxu0 0.0
          %1868 = vmatpush1.xpose.msra.mxu0 0.0
          %1869 = vmatprep.subr.mxu0 0.0
          %1870 = vmatpush1.xpose.msra.mxu0 0.0
          %1871 = vmatprep.subr.mxu0 0.0
          %1872 = vmatpush1.xpose.msra.mxu0 0.0
          %1873 = vmatprep.mubr.f32.mxu0 0.0
          %1874 = vmatmul.mubr.f32.gmra.mrb[0].mxu0 %v1803
          %v1875 = vpop.f32.mrb[0].mxu0
          %v1876 = vadd.f32 %v1801, %v1875
          %v1877 = vpop.f32.mrb[0].mxu0
          %1878 = vdwg.mxu0
          %v1879 = vsel %vm819, %v1771, 0
          %v1881 = vsel %vm819, %v1779, 0
          %v1883 = vsel %vm819, %v1781, 0
          %1885 = vmatprep.subr.mxu0 0.0
          %1886 = vmatpush1.xpose.msra.mxu0 %v1881
          %1887 = vmatprep.subr.mxu0 0.0
          %1888 = vmatpush1.xpose.msra.mxu0 %v1883
          %1889 = vmatprep.subr.mxu0 0.0
          %1890 = vmatpush1.xpose.msra.mxu0 0.0
          %1891 = vmatprep.subr.mxu0 0.0
          %1892 = vmatpush1.xpose.msra.mxu0 0.0
          %1893 = vmatprep.subr.mxu0 0.0
          %1894 = vmatpush1.xpose.msra.mxu0 0.0
          %1895 = vmatprep.subr.mxu0 0.0
          %1896 = vmatpush1.xpose.msra.mxu0 0.0
          %1897 = vmatprep.subr.mxu0 0.0
          %1898 = vmatpush1.xpose.msra.mxu0 0.0
          %1899 = vmatprep.subr.mxu0 0.0
          %1900 = vmatpush1.xpose.msra.mxu0 0.0
          %1901 = vmatprep.subr.mxu0 0.0
          %1902 = vmatpush1.xpose.msra.mxu0 0.0
          %1903 = vmatprep.subr.mxu0 0.0
          %1904 = vmatpush1.xpose.msra.mxu0 0.0
          %1905 = vmatprep.subr.mxu0 0.0
          %1906 = vmatpush1.xpose.msra.mxu0 0.0
          %1907 = vmatprep.subr.mxu0 0.0
          %1908 = vmatpush1.xpose.msra.mxu0 0.0
          %1909 = vmatprep.subr.mxu0 0.0
          %1910 = vmatpush1.xpose.msra.mxu0 0.0
          %1911 = vmatprep.subr.mxu0 0.0
          %1912 = vmatpush1.xpose.msra.mxu0 0.0
          %1913 = vmatprep.subr.mxu0 0.0
          %1914 = vmatpush1.xpose.msra.mxu0 0.0
          %1915 = vmatprep.subr.mxu0 0.0
          %1916 = vmatpush1.xpose.msra.mxu0 0.0
          %1917 = vmatprep.subr.mxu0 0.0
          %1918 = vmatpush1.xpose.msra.mxu0 0.0
          %1919 = vmatprep.subr.mxu0 0.0
          %1920 = vmatpush1.xpose.msra.mxu0 0.0
          %1921 = vmatprep.subr.mxu0 0.0
          %1922 = vmatpush1.xpose.msra.mxu0 0.0
          %1923 = vmatprep.subr.mxu0 0.0
          %1924 = vmatpush1.xpose.msra.mxu0 0.0
          %1925 = vmatprep.subr.mxu0 0.0
          %1926 = vmatpush1.xpose.msra.mxu0 0.0
          %1927 = vmatprep.subr.mxu0 0.0
          %1928 = vmatpush1.xpose.msra.mxu0 0.0
          %1929 = vmatprep.subr.mxu0 0.0
          %1930 = vmatpush1.xpose.msra.mxu0 0.0
          %1931 = vmatprep.subr.mxu0 0.0
          %1932 = vmatpush1.xpose.msra.mxu0 0.0
          %1933 = vmatprep.subr.mxu0 0.0
          %1934 = vmatpush1.xpose.msra.mxu0 0.0
          %1935 = vmatprep.subr.mxu0 0.0
          %1936 = vmatpush1.xpose.msra.mxu0 0.0
          %1937 = vmatprep.subr.mxu0 0.0
          %1938 = vmatpush1.xpose.msra.mxu0 0.0
          %1939 = vmatprep.subr.mxu0 0.0
          %1940 = vmatpush1.xpose.msra.mxu0 0.0
          %1941 = vmatprep.subr.mxu0 0.0
          %1942 = vmatpush1.xpose.msra.mxu0 0.0
          %1943 = vmatprep.subr.mxu0 0.0
          %1944 = vmatpush1.xpose.msra.mxu0 0.0
          %1945 = vmatprep.subr.mxu0 0.0
          %1946 = vmatpush1.xpose.msra.mxu0 0.0
          %1947 = vmatprep.subr.mxu0 0.0
          %1948 = vmatpush1.xpose.msra.mxu0 0.0
          %1949 = vmatprep.mubr.f32.mxu0 0.0
          %1950 = vmatmul.mubr.f32.gmra.mrb[0].mxu0 %v1879
          %v1951 = vpop.f32.mrb[0].mxu0
          %v1952 = vadd.f32 %v1801, %v1951
          %v1953 = vpop.f32.mrb[0].mxu0
          %1954 = vdwg.mxu0
          %v1955 = vsel %vm819, %v1773, 0
          %v1957 = vsel %vm819, %v1783, 0
          %v1959 = vsel %vm819, %v1785, 0
          %1961 = vmatprep.subr.mxu0 0.0
          %1962 = vmatpush1.xpose.msra.mxu0 %v1957
          %1963 = vmatprep.subr.mxu0 0.0
          %1964 = vmatpush1.xpose.msra.mxu0 %v1959
          %1965 = vmatprep.subr.mxu0 0.0
          %1966 = vmatpush1.xpose.msra.mxu0 0.0
          %1967 = vmatprep.subr.mxu0 0.0
          %1968 = vmatpush1.xpose.msra.mxu0 0.0
          %1969 = vmatprep.subr.mxu0 0.0
          %1970 = vmatpush1.xpose.msra.mxu0 0.0
          %1971 = vmatprep.subr.mxu0 0.0
          %1972 = vmatpush1.xpose.msra.mxu0 0.0
          %1973 = vmatprep.subr.mxu0 0.0
          %1974 = vmatpush1.xpose.msra.mxu0 0.0
          %1975 = vmatprep.subr.mxu0 0.0
          %1976 = vmatpush1.xpose.msra.mxu0 0.0
          %1977 = vmatprep.subr.mxu0 0.0
          %1978 = vmatpush1.xpose.msra.mxu0 0.0
          %1979 = vmatprep.subr.mxu0 0.0
          %1980 = vmatpush1.xpose.msra.mxu0 0.0
          %1981 = vmatprep.subr.mxu0 0.0
          %1982 = vmatpush1.xpose.msra.mxu0 0.0
          %1983 = vmatprep.subr.mxu0 0.0
          %1984 = vmatpush1.xpose.msra.mxu0 0.0
          %1985 = vmatprep.subr.mxu0 0.0
          %1986 = vmatpush1.xpose.msra.mxu0 0.0
          %1987 = vmatprep.subr.mxu0 0.0
          %1988 = vmatpush1.xpose.msra.mxu0 0.0
          %1989 = vmatprep.subr.mxu0 0.0
          %1990 = vmatpush1.xpose.msra.mxu0 0.0
          %1991 = vmatprep.subr.mxu0 0.0
          %1992 = vmatpush1.xpose.msra.mxu0 0.0
          %1993 = vmatprep.subr.mxu0 0.0
          %1994 = vmatpush1.xpose.msra.mxu0 0.0
          %1995 = vmatprep.subr.mxu0 0.0
          %1996 = vmatpush1.xpose.msra.mxu0 0.0
          %1997 = vmatprep.subr.mxu0 0.0
          %1998 = vmatpush1.xpose.msra.mxu0 0.0
          %1999 = vmatprep.subr.mxu0 0.0
          %2000 = vmatpush1.xpose.msra.mxu0 0.0
          %2001 = vmatprep.subr.mxu0 0.0
          %2002 = vmatpush1.xpose.msra.mxu0 0.0
          %2003 = vmatprep.subr.mxu0 0.0
          %2004 = vmatpush1.xpose.msra.mxu0 0.0
          %2005 = vmatprep.subr.mxu0 0.0
          %2006 = vmatpush1.xpose.msra.mxu0 0.0
          %2007 = vmatprep.subr.mxu0 0.0
          %2008 = vmatpush1.xpose.msra.mxu0 0.0
          %2009 = vmatprep.subr.mxu0 0.0
          %2010 = vmatpush1.xpose.msra.mxu0 0.0
          %2011 = vmatprep.subr.mxu0 0.0
          %2012 = vmatpush1.xpose.msra.mxu0 0.0
          %2013 = vmatprep.subr.mxu0 0.0
          %2014 = vmatpush1.xpose.msra.mxu0 0.0
          %2015 = vmatprep.subr.mxu0 0.0
          %2016 = vmatpush1.xpose.msra.mxu0 0.0
          %2017 = vmatprep.subr.mxu0 0.0
          %2018 = vmatpush1.xpose.msra.mxu0 0.0
          %2019 = vmatprep.subr.mxu0 0.0
          %2020 = vmatpush1.xpose.msra.mxu0 0.0
          %2021 = vmatprep.subr.mxu0 0.0
          %2022 = vmatpush1.xpose.msra.mxu0 0.0
          %2023 = vmatprep.subr.mxu0 0.0
          %2024 = vmatpush1.xpose.msra.mxu0 0.0
          %2025 = vmatprep.mubr.f32.mxu0 0.0
          %2026 = vmatmul.mubr.f32.gmra.mrb[0].mxu0 %v1955
          %v2027 = vpop.f32.mrb[0].mxu0
          %v2028 = vadd.f32 %v1801, %v2027
          %v2029 = vpop.f32.mrb[0].mxu0
          %2030 = vdwg.mxu0
          %v2031 = vsel %vm819, %v1775, 0
          %v2033 = vsel %vm819, %v1787, 0
          %v2035 = vsel %vm819, %v1789, 0
          %2037 = vmatprep.subr.mxu0 0.0
          %2038 = vmatpush1.xpose.msra.mxu0 %v2033
          %2039 = vmatprep.subr.mxu0 0.0
          %2040 = vmatpush1.xpose.msra.mxu0 %v2035
          %2041 = vmatprep.subr.mxu0 0.0
          %2042 = vmatpush1.xpose.msra.mxu0 0.0
          %2043 = vmatprep.subr.mxu0 0.0
          %2044 = vmatpush1.xpose.msra.mxu0 0.0
          %2045 = vmatprep.subr.mxu0 0.0
          %2046 = vmatpush1.xpose.msra.mxu0 0.0
          %2047 = vmatprep.subr.mxu0 0.0
          %2048 = vmatpush1.xpose.msra.mxu0 0.0
          %2049 = vmatprep.subr.mxu0 0.0
          %2050 = vmatpush1.xpose.msra.mxu0 0.0
          %2051 = vmatprep.subr.mxu0 0.0
          %2052 = vmatpush1.xpose.msra.mxu0 0.0
          %2053 = vmatprep.subr.mxu0 0.0
          %2054 = vmatpush1.xpose.msra.mxu0 0.0
          %2055 = vmatprep.subr.mxu0 0.0
          %2056 = vmatpush1.xpose.msra.mxu0 0.0
          %2057 = vmatprep.subr.mxu0 0.0
          %2058 = vmatpush1.xpose.msra.mxu0 0.0
          %2059 = vmatprep.subr.mxu0 0.0
          %2060 = vmatpush1.xpose.msra.mxu0 0.0
          %2061 = vmatprep.subr.mxu0 0.0
          %2062 = vmatpush1.xpose.msra.mxu0 0.0
          %2063 = vmatprep.subr.mxu0 0.0
          %2064 = vmatpush1.xpose.msra.mxu0 0.0
          %2065 = vmatprep.subr.mxu0 0.0
          %2066 = vmatpush1.xpose.msra.mxu0 0.0
          %2067 = vmatprep.subr.mxu0 0.0
          %2068 = vmatpush1.xpose.msra.mxu0 0.0
          %2069 = vmatprep.subr.mxu0 0.0
          %2070 = vmatpush1.xpose.msra.mxu0 0.0
          %2071 = vmatprep.subr.mxu0 0.0
          %2072 = vmatpush1.xpose.msra.mxu0 0.0
          %2073 = vmatprep.subr.mxu0 0.0
          %2074 = vmatpush1.xpose.msra.mxu0 0.0
          %2075 = vmatprep.subr.mxu0 0.0
          %2076 = vmatpush1.xpose.msra.mxu0 0.0
          %2077 = vmatprep.subr.mxu0 0.0
          %2078 = vmatpush1.xpose.msra.mxu0 0.0
          %2079 = vmatprep.subr.mxu0 0.0
          %2080 = vmatpush1.xpose.msra.mxu0 0.0
          %2081 = vmatprep.subr.mxu0 0.0
          %2082 = vmatpush1.xpose.msra.mxu0 0.0
          %2083 = vmatprep.subr.mxu0 0.0
          %2084 = vmatpush1.xpose.msra.mxu0 0.0
          %2085 = vmatprep.subr.mxu0 0.0
          %2086 = vmatpush1.xpose.msra.mxu0 0.0
          %2087 = vmatprep.subr.mxu0 0.0
          %2088 = vmatpush1.xpose.msra.mxu0 0.0
          %2089 = vmatprep.subr.mxu0 0.0
          %2090 = vmatpush1.xpose.msra.mxu0 0.0
          %2091 = vmatprep.subr.mxu0 0.0
          %2092 = vmatpush1.xpose.msra.mxu0 0.0
          %2093 = vmatprep.subr.mxu0 0.0
          %2094 = vmatpush1.xpose.msra.mxu0 0.0
          %2095 = vmatprep.subr.mxu0 0.0
          %2096 = vmatpush1.xpose.msra.mxu0 0.0
          %2097 = vmatprep.subr.mxu0 0.0
          %2098 = vmatpush1.xpose.msra.mxu0 0.0
          %2099 = vmatprep.subr.mxu0 0.0
          %2100 = vmatpush1.xpose.msra.mxu0 0.0
          %2101 = vmatprep.mubr.f32.mxu0 0.0
          %2102 = vmatmul.mubr.f32.gmra.mrb[0].mxu0 %v2031
          %v2103 = vpop.f32.mrb[0].mxu0
          %v2104 = vadd.f32 %v1801, %v2103
          %v2105 = vpop.f32.mrb[0].mxu0
          %2106 = vdwg.mxu0
          %vm2107 = vcmask 97280
          %v2108 = vsel %vm2107, %v1876, -inf
          %2109 = vmax.xlane.f32.xlu0 %v2108
          %v2110 = vpop.xlane.xlu0 %2109
          %v2111 = vsel %vm2107, %v1952, -inf
          %2112 = vmax.xlane.f32.xlu0 %v2111
          %v2113 = vpop.xlane.xlu0 %2112
          %v2114 = vsel %vm2107, %v2028, -inf
          %2115 = vmax.xlane.f32.xlu0 %v2114
          %v2116 = vpop.xlane.xlu0 %2115
          %v2117 = vsel %vm2107, %v2104, -inf
          %2118 = vmax.xlane.f32.xlu0 %v2117
          %v2119 = vpop.xlane.xlu0 %2118
          %v2120 = vsub.f32 %v1876, %v2110
          %v2121 = vsub.f32 %v1952, %v2113
          %v2122 = vsub.f32 %v2028, %v2116
          %v2123 = vsub.f32 %v2104, %v2119
          %v2124 = vmul.f32 %v2120, 1.442695
          %v2125 = vpow.pop %v2124
          %v2126 = vmul.f32 %v2121, 1.442695
          %v2127 = vpow.pop %v2126
          %v2128 = vmul.f32 %v2122, 1.442695
          %v2129 = vpow.pop %v2128
          %v2130 = vmul.f32 %v2123, 1.442695
          %v2131 = vpow.pop %v2130
          %v2132 = vsel %vm2107, %v2125, 0.0
          %2133 = vadd.xlane.f32.xlu0 %v2132
          %v2134 = vpop.xlane.xlu0 %2133
          %v2135 = vsel %vm2107, %v2127, 0.0
          %2136 = vadd.xlane.f32.xlu0 %v2135
          %v2137 = vpop.xlane.xlu0 %2136
          %v2138 = vsel %vm2107, %v2129, 0.0
          %2139 = vadd.xlane.f32.xlu0 %v2138
          %v2140 = vpop.xlane.xlu0 %2139
          %v2141 = vsel %vm2107, %v2131, 0.0
          %2142 = vadd.xlane.f32.xlu0 %v2141
          %v2143 = vpop.xlane.xlu0 %2142
          %v2144 = vrcp.pop %v2134
          %v2145 = vrcp.pop %v2137
          %v2146 = vrcp.pop %v2140
          %v2147 = vrcp.pop %v2143
          %v2148 = vmul.f32 %v2125, %v2144
          %v2149 = vmul.f32 %v2127, %v2145
          %v2150 = vmul.f32 %v2129, %v2146
          %v2151 = vmul.f32 %v2131, %v2147
          %2152 = vrot.lane.b32.xlu0 %v1761, 96
          %v2153 = vpop.permute.xlu0 %2152
          %2154 = vrot.lane.b32.xlu0 %v1766, 96
          %v2155 = vpop.permute.xlu0 %2154
          %v2158 = vsel %vm2107, %v2148, 0
          %vm2160 = vcmask 1043456
          %v2161 = vsel %vm2160, %v2155, 0
          %2163 = vmatprep.subr.mxu0 0.0
          %2164 = vmatpush1.msra.mxu0 %v2153
          %2165 = vmatprep.subr.mxu0 0.0
          %2166 = vmatpush1.msra.mxu0 %v2161
          %2167 = vmatprep.subr.mxu0 0.0
          %2168 = vmatpush1.msra.mxu0 0.0
          %2169 = vmatprep.subr.mxu0 0.0
          %2170 = vmatpush1.msra.mxu0 0.0
          %2171 = vmatprep.subr.mxu0 0.0
          %2172 = vmatpush1.msra.mxu0 0.0
          %2173 = vmatprep.subr.mxu0 0.0
          %2174 = vmatpush1.msra.mxu0 0.0
          %2175 = vmatprep.subr.mxu0 0.0
          %2176 = vmatpush1.msra.mxu0 0.0
          %2177 = vmatprep.subr.mxu0 0.0
          %2178 = vmatpush1.msra.mxu0 0.0
          %2179 = vmatprep.subr.mxu0 0.0
          %2180 = vmatpush1.msra.mxu0 0.0
          %2181 = vmatprep.subr.mxu0 0.0
          %2182 = vmatpush1.msra.mxu0 0.0
          %2183 = vmatprep.subr.mxu0 0.0
          %2184 = vmatpush1.msra.mxu0 0.0
          %2185 = vmatprep.subr.mxu0 0.0
          %2186 = vmatpush1.msra.mxu0 0.0
          %2187 = vmatprep.subr.mxu0 0.0
          %2188 = vmatpush1.msra.mxu0 0.0
          %2189 = vmatprep.subr.mxu0 0.0
          %2190 = vmatpush1.msra.mxu0 0.0
          %2191 = vmatprep.subr.mxu0 0.0
          %2192 = vmatpush1.msra.mxu0 0.0
          %2193 = vmatprep.subr.mxu0 0.0
          %2194 = vmatpush1.msra.mxu0 0.0
          %2195 = vmatprep.subr.mxu0 0.0
          %2196 = vmatpush1.msra.mxu0 0.0
          %2197 = vmatprep.subr.mxu0 0.0
          %2198 = vmatpush1.msra.mxu0 0.0
          %2199 = vmatprep.subr.mxu0 0.0
          %2200 = vmatpush1.msra.mxu0 0.0
          %2201 = vmatprep.subr.mxu0 0.0
          %2202 = vmatpush1.msra.mxu0 0.0
          %2203 = vmatprep.subr.mxu0 0.0
          %2204 = vmatpush1.msra.mxu0 0.0
          %2205 = vmatprep.subr.mxu0 0.0
          %2206 = vmatpush1.msra.mxu0 0.0
          %2207 = vmatprep.subr.mxu0 0.0
          %2208 = vmatpush1.msra.mxu0 0.0
          %2209 = vmatprep.subr.mxu0 0.0
          %2210 = vmatpush1.msra.mxu0 0.0
          %2211 = vmatprep.subr.mxu0 0.0
          %2212 = vmatpush1.msra.mxu0 0.0
          %2213 = vmatprep.subr.mxu0 0.0
          %2214 = vmatpush1.msra.mxu0 0.0
          %2215 = vmatprep.subr.mxu0 0.0
          %2216 = vmatpush1.msra.mxu0 0.0
          %2217 = vmatprep.subr.mxu0 0.0
          %2218 = vmatpush1.msra.mxu0 0.0
          %2219 = vmatprep.subr.mxu0 0.0
          %2220 = vmatpush1.msra.mxu0 0.0
          %2221 = vmatprep.subr.mxu0 0.0
          %2222 = vmatpush1.msra.mxu0 0.0
          %2223 = vmatprep.subr.mxu0 0.0
          %2224 = vmatpush1.msra.mxu0 0.0
          %2225 = vmatprep.subr.mxu0 0.0
          %2226 = vmatpush1.msra.mxu0 0.0
          %2227 = vmatprep.mubr.f32.mxu0 0.0
          %2228 = vmatmul.mubr.f32.gmra.mrb[0].mxu0 %v2158
          %v2229 = vpop.f32.mrb[0].mxu0
          %v2230 = vadd.f32 0.0, %v2229
          %v2231 = vpop.f32.mrb[0].mxu0
          %2232 = vdwg.mxu0
          %2233 = vrot.lane.b32.xlu0 %v1779, 96
          %v2234 = vpop.permute.xlu0 %2233
          %2235 = vrot.lane.b32.xlu0 %v1781, 96
          %v2236 = vpop.permute.xlu0 %2235
          %v2239 = vsel %vm2107, %v2149, 0
          %v2241 = vsel %vm2160, %v2236, 0
          %2243 = vmatprep.subr.mxu0 0.0
          %2244 = vmatpush1.msra.mxu0 %v2234
          %2245 = vmatprep.subr.mxu0 0.0
          %2246 = vmatpush1.msra.mxu0 %v2241
          %2247 = vmatprep.subr.mxu0 0.0
          %2248 = vmatpush1.msra.mxu0 0.0
          %2249 = vmatprep.subr.mxu0 0.0
          %2250 = vmatpush1.msra.mxu0 0.0
          %2251 = vmatprep.subr.mxu0 0.0
          %2252 = vmatpush1.msra.mxu0 0.0
          %2253 = vmatprep.subr.mxu0 0.0
          %2254 = vmatpush1.msra.mxu0 0.0
          %2255 = vmatprep.subr.mxu0 0.0
          %2256 = vmatpush1.msra.mxu0 0.0
          %2257 = vmatprep.subr.mxu0 0.0
          %2258 = vmatpush1.msra.mxu0 0.0
          %2259 = vmatprep.subr.mxu0 0.0
          %2260 = vmatpush1.msra.mxu0 0.0
          %2261 = vmatprep.subr.mxu0 0.0
          %2262 = vmatpush1.msra.mxu0 0.0
          %2263 = vmatprep.subr.mxu0 0.0
          %2264 = vmatpush1.msra.mxu0 0.0
          %2265 = vmatprep.subr.mxu0 0.0
          %2266 = vmatpush1.msra.mxu0 0.0
          %2267 = vmatprep.subr.mxu0 0.0
          %2268 = vmatpush1.msra.mxu0 0.0
          %2269 = vmatprep.subr.mxu0 0.0
          %2270 = vmatpush1.msra.mxu0 0.0
          %2271 = vmatprep.subr.mxu0 0.0
          %2272 = vmatpush1.msra.mxu0 0.0
          %2273 = vmatprep.subr.mxu0 0.0
          %2274 = vmatpush1.msra.mxu0 0.0
          %2275 = vmatprep.subr.mxu0 0.0
          %2276 = vmatpush1.msra.mxu0 0.0
          %2277 = vmatprep.subr.mxu0 0.0
          %2278 = vmatpush1.msra.mxu0 0.0
          %2279 = vmatprep.subr.mxu0 0.0
          %2280 = vmatpush1.msra.mxu0 0.0
          %2281 = vmatprep.subr.mxu0 0.0
          %2282 = vmatpush1.msra.mxu0 0.0
          %2283 = vmatprep.subr.mxu0 0.0
          %2284 = vmatpush1.msra.mxu0 0.0
          %2285 = vmatprep.subr.mxu0 0.0
          %2286 = vmatpush1.msra.mxu0 0.0
          %2287 = vmatprep.subr.mxu0 0.0
          %2288 = vmatpush1.msra.mxu0 0.0
          %2289 = vmatprep.subr.mxu0 0.0
          %2290 = vmatpush1.msra.mxu0 0.0
          %2291 = vmatprep.subr.mxu0 0.0
          %2292 = vmatpush1.msra.mxu0 0.0
          %2293 = vmatprep.subr.mxu0 0.0
          %2294 = vmatpush1.msra.mxu0 0.0
          %2295 = vmatprep.subr.mxu0 0.0
          %2296 = vmatpush1.msra.mxu0 0.0
          %2297 = vmatprep.subr.mxu0 0.0
          %2298 = vmatpush1.msra.mxu0 0.0
          %2299 = vmatprep.subr.mxu0 0.0
          %2300 = vmatpush1.msra.mxu0 0.0
          %2301 = vmatprep.subr.mxu0 0.0
          %2302 = vmatpush1.msra.mxu0 0.0
          %2303 = vmatprep.subr.mxu0 0.0
          %2304 = vmatpush1.msra.mxu0 0.0
          %2305 = vmatprep.subr.mxu0 0.0
          %2306 = vmatpush1.msra.mxu0 0.0
          %2307 = vmatprep.mubr.f32.mxu0 0.0
          %2308 = vmatmul.mubr.f32.gmra.mrb[0].mxu0 %v2239
          %v2309 = vpop.f32.mrb[0].mxu0
          %v2310 = vadd.f32 0.0, %v2309
          %v2311 = vpop.f32.mrb[0].mxu0
          %2312 = vdwg.mxu0
          %2313 = vrot.lane.b32.xlu0 %v1783, 96
          %v2314 = vpop.permute.xlu0 %2313
          %2315 = vrot.lane.b32.xlu0 %v1785, 96
          %v2316 = vpop.permute.xlu0 %2315
          %v2319 = vsel %vm2107, %v2150, 0
          %v2321 = vsel %vm2160, %v2316, 0
          %2323 = vmatprep.subr.mxu0 0.0
          %2324 = vmatpush1.msra.mxu0 %v2314
          %2325 = vmatprep.subr.mxu0 0.0
          %2326 = vmatpush1.msra.mxu0 %v2321
          %2327 = vmatprep.subr.mxu0 0.0
          %2328 = vmatpush1.msra.mxu0 0.0
          %2329 = vmatprep.subr.mxu0 0.0
          %2330 = vmatpush1.msra.mxu0 0.0
          %2331 = vmatprep.subr.mxu0 0.0
          %2332 = vmatpush1.msra.mxu0 0.0
          %2333 = vmatprep.subr.mxu0 0.0
          %2334 = vmatpush1.msra.mxu0 0.0
          %2335 = vmatprep.subr.mxu0 0.0
          %2336 = vmatpush1.msra.mxu0 0.0
          %2337 = vmatprep.subr.mxu0 0.0
          %2338 = vmatpush1.msra.mxu0 0.0
          %2339 = vmatprep.subr.mxu0 0.0
          %2340 = vmatpush1.msra.mxu0 0.0
          %2341 = vmatprep.subr.mxu0 0.0
          %2342 = vmatpush1.msra.mxu0 0.0
          %2343 = vmatprep.subr.mxu0 0.0
          %2344 = vmatpush1.msra.mxu0 0.0
          %2345 = vmatprep.subr.mxu0 0.0
          %2346 = vmatpush1.msra.mxu0 0.0
          %2347 = vmatprep.subr.mxu0 0.0
          %2348 = vmatpush1.msra.mxu0 0.0
          %2349 = vmatprep.subr.mxu0 0.0
          %2350 = vmatpush1.msra.mxu0 0.0
          %2351 = vmatprep.subr.mxu0 0.0
          %2352 = vmatpush1.msra.mxu0 0.0
          %2353 = vmatprep.subr.mxu0 0.0
          %2354 = vmatpush1.msra.mxu0 0.0
          %2355 = vmatprep.subr.mxu0 0.0
          %2356 = vmatpush1.msra.mxu0 0.0
          %2357 = vmatprep.subr.mxu0 0.0
          %2358 = vmatpush1.msra.mxu0 0.0
          %2359 = vmatprep.subr.mxu0 0.0
          %2360 = vmatpush1.msra.mxu0 0.0
          %2361 = vmatprep.subr.mxu0 0.0
          %2362 = vmatpush1.msra.mxu0 0.0
          %2363 = vmatprep.subr.mxu0 0.0
          %2364 = vmatpush1.msra.mxu0 0.0
          %2365 = vmatprep.subr.mxu0 0.0
          %2366 = vmatpush1.msra.mxu0 0.0
          %2367 = vmatprep.subr.mxu0 0.0
          %2368 = vmatpush1.msra.mxu0 0.0
          %2369 = vmatprep.subr.mxu0 0.0
          %2370 = vmatpush1.msra.mxu0 0.0
          %2371 = vmatprep.subr.mxu0 0.0
          %2372 = vmatpush1.msra.mxu0 0.0
          %2373 = vmatprep.subr.mxu0 0.0
          %2374 = vmatpush1.msra.mxu0 0.0
          %2375 = vmatprep.subr.mxu0 0.0
          %2376 = vmatpush1.msra.mxu0 0.0
          %2377 = vmatprep.subr.mxu0 0.0
          %2378 = vmatpush1.msra.mxu0 0.0
          %2379 = vmatprep.subr.mxu0 0.0
          %2380 = vmatpush1.msra.mxu0 0.0
          %2381 = vmatprep.subr.mxu0 0.0
          %2382 = vmatpush1.msra.mxu0 0.0
          %2383 = vmatprep.subr.mxu0 0.0
          %2384 = vmatpush1.msra.mxu0 0.0
          %2385 = vmatprep.subr.mxu0 0.0
          %2386 = vmatpush1.msra.mxu0 0.0
          %2387 = vmatprep.mubr.f32.mxu0 0.0
          %2388 = vmatmul.mubr.f32.gmra.mrb[0].mxu0 %v2319
          %v2389 = vpop.f32.mrb[0].mxu0
          %v2390 = vadd.f32 0.0, %v2389
          %v2391 = vpop.f32.mrb[0].mxu0
          %2392 = vdwg.mxu0
          %2393 = vrot.lane.b32.xlu0 %v1787, 96
          %v2394 = vpop.permute.xlu0 %2393
          %2395 = vrot.lane.b32.xlu0 %v1789, 96
          %v2396 = vpop.permute.xlu0 %2395
          %v2399 = vsel %vm2107, %v2151, 0
          %v2401 = vsel %vm2160, %v2396, 0
          %2403 = vmatprep.subr.mxu0 0.0
          %2404 = vmatpush1.msra.mxu0 %v2394
          %2405 = vmatprep.subr.mxu0 0.0
          %2406 = vmatpush1.msra.mxu0 %v2401
          %2407 = vmatprep.subr.mxu0 0.0
          %2408 = vmatpush1.msra.mxu0 0.0
          %2409 = vmatprep.subr.mxu0 0.0
          %2410 = vmatpush1.msra.mxu0 0.0
          %2411 = vmatprep.subr.mxu0 0.0
          %2412 = vmatpush1.msra.mxu0 0.0
          %2413 = vmatprep.subr.mxu0 0.0
          %2414 = vmatpush1.msra.mxu0 0.0
          %2415 = vmatprep.subr.mxu0 0.0
          %2416 = vmatpush1.msra.mxu0 0.0
          %2417 = vmatprep.subr.mxu0 0.0
          %2418 = vmatpush1.msra.mxu0 0.0
          %2419 = vmatprep.subr.mxu0 0.0
          %2420 = vmatpush1.msra.mxu0 0.0
          %2421 = vmatprep.subr.mxu0 0.0
          %2422 = vmatpush1.msra.mxu0 0.0
          %2423 = vmatprep.subr.mxu0 0.0
          %2424 = vmatpush1.msra.mxu0 0.0
          %2425 = vmatprep.subr.mxu0 0.0
          %2426 = vmatpush1.msra.mxu0 0.0
          %2427 = vmatprep.subr.mxu0 0.0
          %2428 = vmatpush1.msra.mxu0 0.0
          %2429 = vmatprep.subr.mxu0 0.0
          %2430 = vmatpush1.msra.mxu0 0.0
          %2431 = vmatprep.subr.mxu0 0.0
          %2432 = vmatpush1.msra.mxu0 0.0
          %2433 = vmatprep.subr.mxu0 0.0
          %2434 = vmatpush1.msra.mxu0 0.0
          %2435 = vmatprep.subr.mxu0 0.0
          %2436 = vmatpush1.msra.mxu0 0.0
          %2437 = vmatprep.subr.mxu0 0.0
          %2438 = vmatpush1.msra.mxu0 0.0
          %2439 = vmatprep.subr.mxu0 0.0
          %2440 = vmatpush1.msra.mxu0 0.0
          %2441 = vmatprep.subr.mxu0 0.0
          %2442 = vmatpush1.msra.mxu0 0.0
          %2443 = vmatprep.subr.mxu0 0.0
          %2444 = vmatpush1.msra.mxu0 0.0
          %2445 = vmatprep.subr.mxu0 0.0
          %2446 = vmatpush1.msra.mxu0 0.0
          %2447 = vmatprep.subr.mxu0 0.0
          %2448 = vmatpush1.msra.mxu0 0.0
          %2449 = vmatprep.subr.mxu0 0.0
          %2450 = vmatpush1.msra.mxu0 0.0
          %2451 = vmatprep.subr.mxu0 0.0
          %2452 = vmatpush1.msra.mxu0 0.0
          %2453 = vmatprep.subr.mxu0 0.0
          %2454 = vmatpush1.msra.mxu0 0.0
          %2455 = vmatprep.subr.mxu0 0.0
          %2456 = vmatpush1.msra.mxu0 0.0
          %2457 = vmatprep.subr.mxu0 0.0
          %2458 = vmatpush1.msra.mxu0 0.0
          %2459 = vmatprep.subr.mxu0 0.0
          %2460 = vmatpush1.msra.mxu0 0.0
          %2461 = vmatprep.subr.mxu0 0.0
          %2462 = vmatpush1.msra.mxu0 0.0
          %2463 = vmatprep.subr.mxu0 0.0
          %2464 = vmatpush1.msra.mxu0 0.0
          %2465 = vmatprep.subr.mxu0 0.0
          %2466 = vmatpush1.msra.mxu0 0.0
          %2467 = vmatprep.mubr.f32.mxu0 0.0
          %2468 = vmatmul.mubr.f32.gmra.mrb[0].mxu0 %v2399
          %v2469 = vpop.f32.mrb[0].mxu0
          %v2470 = vadd.f32 0.0, %v2469
          %v2471 = vpop.f32.mrb[0].mxu0
          %2472 = vdwg.mxu0
          %2474 = vrot.lane.b32.xlu0 %v2310, 8
          %v2475 = vpop.permute.xlu0 %2474
          %2478 = vrot.lane.b32.xlu0 %v2390, 16
          %v2479 = vpop.permute.xlu0 %2478
          %2482 = vrot.lane.b32.xlu0 %v2470, 24
          %v2483 = vpop.permute.xlu0 %2482
          %v2485 = vsel %vm819, %v2230, %v2475
          %v2486 = vsel %vm1483, %v2485, %v2479
          %v2487 = vsel %vm1485, %v2486, %v2483
          %v2488 = vlaneseq
          %v2489 = vshrl.u32 %v2488, 7
          %v2490 = vsub.s32 0, %v2489
          %v2491 = vrot.slane %v1796, %v2490
          %v2493 = vsel %vm692, %v2487, 0
          %2495 = vmatprep.subr.mxu0 0.0
          %2496 = vmatpush1.msra.mxu0 %v1791
          %2497 = vmatprep.subr.mxu0 0.0
          %2498 = vmatpush1.msra.mxu0 %v1792
          %2499 = vmatprep.subr.mxu0 0.0
          %2500 = vmatpush1.msra.mxu0 %v1793
          %2501 = vmatprep.subr.mxu0 0.0
          %2502 = vmatpush1.msra.mxu0 %v1794
          %2503 = vmatprep.subr.mxu0 0.0
          %2504 = vmatpush1.msra.mxu0 0.0
          %2505 = vmatprep.subr.mxu0 0.0
          %2506 = vmatpush1.msra.mxu0 0.0
          %2507 = vmatprep.subr.mxu0 0.0
          %2508 = vmatpush1.msra.mxu0 0.0
          %2509 = vmatprep.subr.mxu0 0.0
          %2510 = vmatpush1.msra.mxu0 0.0
          %2511 = vmatprep.subr.mxu0 0.0
          %2512 = vmatpush1.msra.mxu0 0.0
          %2513 = vmatprep.subr.mxu0 0.0
          %2514 = vmatpush1.msra.mxu0 0.0
          %2515 = vmatprep.subr.mxu0 0.0
          %2516 = vmatpush1.msra.mxu0 0.0
          %2517 = vmatprep.subr.mxu0 0.0
          %2518 = vmatpush1.msra.mxu0 0.0
          %2519 = vmatprep.subr.mxu0 0.0
          %2520 = vmatpush1.msra.mxu0 0.0
          %2521 = vmatprep.subr.mxu0 0.0
          %2522 = vmatpush1.msra.mxu0 0.0
          %2523 = vmatprep.subr.mxu0 0.0
          %2524 = vmatpush1.msra.mxu0 0.0
          %2525 = vmatprep.subr.mxu0 0.0
          %2526 = vmatpush1.msra.mxu0 0.0
          %2527 = vmatprep.subr.mxu0 0.0
          %2528 = vmatpush1.msra.mxu0 0.0
          %2529 = vmatprep.subr.mxu0 0.0
          %2530 = vmatpush1.msra.mxu0 0.0
          %2531 = vmatprep.subr.mxu0 0.0
          %2532 = vmatpush1.msra.mxu0 0.0
          %2533 = vmatprep.subr.mxu0 0.0
          %2534 = vmatpush1.msra.mxu0 0.0
          %2535 = vmatprep.subr.mxu0 0.0
          %2536 = vmatpush1.msra.mxu0 0.0
          %2537 = vmatprep.subr.mxu0 0.0
          %2538 = vmatpush1.msra.mxu0 0.0
          %2539 = vmatprep.subr.mxu0 0.0
          %2540 = vmatpush1.msra.mxu0 0.0
          %2541 = vmatprep.subr.mxu0 0.0
          %2542 = vmatpush1.msra.mxu0 0.0
          %2543 = vmatprep.subr.mxu0 0.0
          %2544 = vmatpush1.msra.mxu0 0.0
          %2545 = vmatprep.subr.mxu0 0.0
          %2546 = vmatpush1.msra.mxu0 0.0
          %2547 = vmatprep.subr.mxu0 0.0
          %2548 = vmatpush1.msra.mxu0 0.0
          %2549 = vmatprep.subr.mxu0 0.0
          %2550 = vmatpush1.msra.mxu0 0.0
          %2551 = vmatprep.subr.mxu0 0.0
          %2552 = vmatpush1.msra.mxu0 0.0
          %2553 = vmatprep.subr.mxu0 0.0
          %2554 = vmatpush1.msra.mxu0 0.0
          %2555 = vmatprep.subr.mxu0 0.0
          %2556 = vmatpush1.msra.mxu0 0.0
          %2557 = vmatprep.subr.mxu0 0.0
          %2558 = vmatpush1.msra.mxu0 0.0
          %2559 = vmatprep.mubr.f32.mxu0 0.0
          %2560 = vmatmul.mubr.f32.gmra.mrb[0].mxu0 %v2493
          %v2561 = vpop.f32.mrb[0].mxu0
          %v2562 = vadd.f32 %v2491, %v2561
          %v2563 = vpop.f32.mrb[0].mxu0
          %2564 = vdwg.mxu0
          %v2565 = vadd.f32 %v1564, %v2562
          %s2566 = sadd.s32 %s688, 4
          %s2567 = sld [smem:[#allocation9 + %s2566]]
          %s2568 = sadd.s32 %s688, 5
          %s2569 = sld [smem:[#allocation9 + %s2568]]
          %v2570 = vsel %vm692, %v2565, 0.0
          %2571 = vadd.xlane.f32.xlu0 %v2570
          %v2572 = vpop.xlane.xlu0 %2571
          %v2573 = vmul.f32 %v2572, %v696
          %v2574 = vsub.f32 %v2565, %v2573
          %v2575 = vmul.f32 %v2574, %v2574
          %v2576 = vsel %vm692, %v2575, 0.0
          %2577 = vadd.xlane.f32.xlu0 %v2576
          %v2578 = vpop.xlane.xlu0 %2577
          %v2579 = vmul.f32 %v2578, 0.032258064
          %v2580 = vrsqrt.pop %v2579
          %v2581 = vmul.f32 %v2579, %v2580
          %vm2582 = vcmp.eq.f32.partialorder %v2579, inf
          %v2583 = vsel %vm2582, %v2579, %v2581
          %vm2584 = vcmp.eq.f32.partialorder %v2579, 0.0
          %v2585 = vand.u32 %v2579, 2147483648
          %v2586 = vsel %vm2584, %v2585, %v2583
          %v2587 = vadd.f32 %v2586, 1e-06
          %v2588 = vrcp.pop %v2587
          %v2589 = vstv %s2567
          %v2590 = vmul.f32 %v2589, %v2574
          %v2591 = vmul.f32 %v2590, %v2588
          %v2592 = vstv %s2569
          %v2593 = vadd.f32 %v2591, %v2592
          %s2594 = scalar_lea.vmem [#allocation8], %s718
          %v2595 = vld [vmem:[%s2594] sm:$0xff]
          %v2596 = vld [vmem:[%s2594 + $0x8] sm:$0xff]
          %v2597 = vld [vmem:[%s2594 + $0x10] sm:$0xff]
          %v2598 = vld [vmem:[%s2594 + $0x18] sm:$0xff]
          %s2599 = scalar_lea.vmem %s15, %s682
          %v2600 = vld [vmem:[%s2599] sm:$0x1]
          %v2601 = vlaneseq
          %v2602 = vshrl.u32 %v2601, 7
          %v2603 = vsub.s32 0, %v2602
          %v2604 = vrot.slane %v2600, %v2603
          %v2606 = vsel %vm692, %v2593, 0
          %2608 = vmatprep.subr.mxu0 0.0
          %2609 = vmatpush1.msra.mxu0 %v2595
          %2610 = vmatprep.subr.mxu0 0.0
          %2611 = vmatpush1.msra.mxu0 %v2596
          %2612 = vmatprep.subr.mxu0 0.0
          %2613 = vmatpush1.msra.mxu0 %v2597
          %2614 = vmatprep.subr.mxu0 0.0
          %2615 = vmatpush1.msra.mxu0 %v2598
          %2616 = vmatprep.subr.mxu0 0.0
          %2617 = vmatpush1.msra.mxu0 0.0
          %2618 = vmatprep.subr.mxu0 0.0
          %2619 = vmatpush1.msra.mxu0 0.0
          %2620 = vmatprep.subr.mxu0 0.0
          %2621 = vmatpush1.msra.mxu0 0.0
          %2622 = vmatprep.subr.mxu0 0.0
          %2623 = vmatpush1.msra.mxu0 0.0
          %2624 = vmatprep.subr.mxu0 0.0
          %2625 = vmatpush1.msra.mxu0 0.0
          %2626 = vmatprep.subr.mxu0 0.0
          %2627 = vmatpush1.msra.mxu0 0.0
          %2628 = vmatprep.subr.mxu0 0.0
          %2629 = vmatpush1.msra.mxu0 0.0
          %2630 = vmatprep.subr.mxu0 0.0
          %2631 = vmatpush1.msra.mxu0 0.0
          %2632 = vmatprep.subr.mxu0 0.0
          %2633 = vmatpush1.msra.mxu0 0.0
          %2634 = vmatprep.subr.mxu0 0.0
          %2635 = vmatpush1.msra.mxu0 0.0
          %2636 = vmatprep.subr.mxu0 0.0
          %2637 = vmatpush1.msra.mxu0 0.0
          %2638 = vmatprep.subr.mxu0 0.0
          %2639 = vmatpush1.msra.mxu0 0.0
          %2640 = vmatprep.subr.mxu0 0.0
          %2641 = vmatpush1.msra.mxu0 0.0
          %2642 = vmatprep.subr.mxu0 0.0
          %2643 = vmatpush1.msra.mxu0 0.0
          %2644 = vmatprep.subr.mxu0 0.0
          %2645 = vmatpush1.msra.mxu0 0.0
          %2646 = vmatprep.subr.mxu0 0.0
          %2647 = vmatpush1.msra.mxu0 0.0
          %2648 = vmatprep.subr.mxu0 0.0
          %2649 = vmatpush1.msra.mxu0 0.0
          %2650 = vmatprep.subr.mxu0 0.0
          %2651 = vmatpush1.msra.mxu0 0.0
          %2652 = vmatprep.subr.mxu0 0.0
          %2653 = vmatpush1.msra.mxu0 0.0
          %2654 = vmatprep.subr.mxu0 0.0
          %2655 = vmatpush1.msra.mxu0 0.0
          %2656 = vmatprep.subr.mxu0 0.0
          %2657 = vmatpush1.msra.mxu0 0.0
          %2658 = vmatprep.subr.mxu0 0.0
          %2659 = vmatpush1.msra.mxu0 0.0
          %2660 = vmatprep.subr.mxu0 0.0
          %2661 = vmatpush1.msra.mxu0 0.0
          %2662 = vmatprep.subr.mxu0 0.0
          %2663 = vmatpush1.msra.mxu0 0.0
          %2664 = vmatprep.subr.mxu0 0.0
          %2665 = vmatpush1.msra.mxu0 0.0
          %2666 = vmatprep.subr.mxu0 0.0
          %2667 = vmatpush1.msra.mxu0 0.0
          %2668 = vmatprep.subr.mxu0 0.0
          %2669 = vmatpush1.msra.mxu0 0.0
          %2670 = vmatprep.subr.mxu0 0.0
          %2671 = vmatpush1.msra.mxu0 0.0
          %2672 = vmatprep.mubr.f32.mxu0 0.0
          %2673 = vmatmul.mubr.f32.gmra.mrb[0].mxu0 %v2606
          %v2674 = vpop.f32.mrb[0].mxu0
          %v2675 = vadd.f32 %v2604, %v2674
          %v2676 = vpop.f32.mrb[0].mxu0
          %2677 = vdwg.mxu0
          %v2678 = vmax.f32 %v2675, 0.0
          %s2679 = smul.u32 %s682, 64
          %s2680 = scalar_lea.vmem %s16, %s2679
          %v2681 = vld [vmem:[%s2680] sm:$0xff]
          %v2682 = vld [vmem:[%s2680 + $0x8] sm:$0xff]
          %v2683 = vld [vmem:[%s2680 + $0x10] sm:$0xff]
          %v2684 = vld [vmem:[%s2680 + $0x18] sm:$0xff]
          %v2685 = vld [vmem:[%s2680 + $0x20] sm:$0xff]
          %v2686 = vld [vmem:[%s2680 + $0x28] sm:$0xff]
          %v2687 = vld [vmem:[%s2680 + $0x30] sm:$0xff]
          %v2688 = vld [vmem:[%s2680 + $0x38] sm:$0xff]
          %vm2689 = vcmask 523264
          %v2691 = vsel %vm2689, %v2678, 0
          %2693 = vmatprep.subr.mxu0 0.0
          %2694 = vmatpush1.msra.mxu0 %v2681
          %2695 = vmatprep.subr.mxu0 0.0
          %2696 = vmatpush1.msra.mxu0 %v2682
          %2697 = vmatprep.subr.mxu0 0.0
          %2698 = vmatpush1.msra.mxu0 %v2683
          %2699 = vmatprep.subr.mxu0 0.0
          %2700 = vmatpush1.msra.mxu0 %v2684
          %2701 = vmatprep.subr.mxu0 0.0
          %2702 = vmatpush1.msra.mxu0 %v2685
          %2703 = vmatprep.subr.mxu0 0.0
          %2704 = vmatpush1.msra.mxu0 %v2686
          %2705 = vmatprep.subr.mxu0 0.0
          %2706 = vmatpush1.msra.mxu0 %v2687
          %2707 = vmatprep.subr.mxu0 0.0
          %2708 = vmatpush1.msra.mxu0 %v2688
          %2709 = vmatprep.subr.mxu0 0.0
          %2710 = vmatpush1.msra.mxu0 0.0
          %2711 = vmatprep.subr.mxu0 0.0
          %2712 = vmatpush1.msra.mxu0 0.0
          %2713 = vmatprep.subr.mxu0 0.0
          %2714 = vmatpush1.msra.mxu0 0.0
          %2715 = vmatprep.subr.mxu0 0.0
          %2716 = vmatpush1.msra.mxu0 0.0
          %2717 = vmatprep.subr.mxu0 0.0
          %2718 = vmatpush1.msra.mxu0 0.0
          %2719 = vmatprep.subr.mxu0 0.0
          %2720 = vmatpush1.msra.mxu0 0.0
          %2721 = vmatprep.subr.mxu0 0.0
          %2722 = vmatpush1.msra.mxu0 0.0
          %2723 = vmatprep.subr.mxu0 0.0
          %2724 = vmatpush1.msra.mxu0 0.0
          %2725 = vmatprep.subr.mxu0 0.0
          %2726 = vmatpush1.msra.mxu0 0.0
          %2727 = vmatprep.subr.mxu0 0.0
          %2728 = vmatpush1.msra.mxu0 0.0
          %2729 = vmatprep.subr.mxu0 0.0
          %2730 = vmatpush1.msra.mxu0 0.0
          %2731 = vmatprep.subr.mxu0 0.0
          %2732 = vmatpush1.msra.mxu0 0.0
          %2733 = vmatprep.subr.mxu0 0.0
          %2734 = vmatpush1.msra.mxu0 0.0
          %2735 = vmatprep.subr.mxu0 0.0
          %2736 = vmatpush1.msra.mxu0 0.0
          %2737 = vmatprep.subr.mxu0 0.0
          %2738 = vmatpush1.msra.mxu0 0.0
          %2739 = vmatprep.subr.mxu0 0.0
          %2740 = vmatpush1.msra.mxu0 0.0
          %2741 = vmatprep.subr.mxu0 0.0
          %2742 = vmatpush1.msra.mxu0 0.0
          %2743 = vmatprep.subr.mxu0 0.0
          %2744 = vmatpush1.msra.mxu0 0.0
          %2745 = vmatprep.subr.mxu0 0.0
          %2746 = vmatpush1.msra.mxu0 0.0
          %2747 = vmatprep.subr.mxu0 0.0
          %2748 = vmatpush1.msra.mxu0 0.0
          %2749 = vmatprep.subr.mxu0 0.0
          %2750 = vmatpush1.msra.mxu0 0.0
          %2751 = vmatprep.subr.mxu0 0.0
          %2752 = vmatpush1.msra.mxu0 0.0
          %2753 = vmatprep.subr.mxu0 0.0
          %2754 = vmatpush1.msra.mxu0 0.0
          %2755 = vmatprep.subr.mxu0 0.0
          %2756 = vmatpush1.msra.mxu0 0.0
          %2757 = vmatprep.mubr.f32.mxu0 0.0
          %2758 = vmatmul.mubr.f32.gmra.mrb[0].mxu0 %v2691
          %v2759 = vpop.f32.mrb[0].mxu0
          %v2760 = vadd.f32 0.0, %v2759
          %v2761 = vpop.f32.mrb[0].mxu0
          %2762 = vdwg.mxu0
          %v2763 = vadd.f32 %v2565, %v2760
          %s2764 = scalar_lea.vmem %s17, %s682
          %v2765 = vld [vmem:[%s2764] sm:$0x1]
          %v2766 = vlaneseq
          %v2767 = vshrl.u32 %v2766, 7
          %v2768 = vsub.s32 0, %v2767
          %v2769 = vrot.slane %v2765, %v2768
          %v2770 = vadd.f32 %v2763, %v2769
        $region117: #{tpu_custom_call.1} parent=95 // loop_footer
          %s686 = sadd.s32 1, %s682
        $region118: #{tpu_custom_call.1} parent=95 // loop_footer_branch
          %681 = sbr.rel target = $region114
        $region119: #{tpu_custom_call.1} parent=95 // loop_exit
          _
        %s2771 = sld [smem:[#allocation9 + $0xc]]
        %s2772 = sld [smem:[#allocation9 + $0xd]]
        %vm2773 = vcmask 261120
        %v2774 = vsel %vm2773, %v687, 0.0
        %2775 = vadd.xlane.f32.xlu0 %v2774
        %v2776 = vpop.xlane.xlu0 %2775
        %v2777 = vrcp.pop 32.0
        %v2778 = vmul.f32 %v2776, %v2777
        %v2779 = vsub.f32 %v687, %v2778
        %v2780 = vmul.f32 %v2779, %v2779
        %v2781 = vsel %vm2773, %v2780, 0.0
        %2782 = vadd.xlane.f32.xlu0 %v2781
        %v2783 = vpop.xlane.xlu0 %2782
        %v2784 = vmul.f32 %v2783, 0.032258064
        %v2785 = vrsqrt.pop %v2784
        %v2786 = vmul.f32 %v2784, %v2785
        %vm2787 = vcmp.eq.f32.partialorder %v2784, inf
        %v2788 = vsel %vm2787, %v2784, %v2786
        %vm2789 = vcmp.eq.f32.partialorder %v2784, 0.0
        %v2790 = vand.u32 %v2784, 2147483648
        %v2791 = vsel %vm2789, %v2790, %v2788
        %v2792 = vadd.f32 %v2791, 1e-06
        %v2793 = vrcp.pop %v2792
        %v2794 = vstv %s2771
        %v2795 = vmul.f32 %v2794, %v2779
        %v2796 = vmul.f32 %v2795, %v2793
        %v2797 = vstv %s2772
        %v2798 = vadd.f32 %v2796, %v2797
        %2799 = vst.msk [vmem:[%s666] sm:$0xff] %vm2773, %v2798
        %s2800 = sand.u32 %s453, 1
        %s2801 = scalar_lea.sflag [#allocation4], %s2800
        %s2802 = sand.u32 %s453, 1
        %s2803 = smul.addr %s2802, 8
        %s2804 = scalar_lea.vmem [#allocation10], %s2803
        // Predicated region
        $region120: #{tpu_custom_call.1} parent=95 // pred_check
          %p2805 = pneg %p463
        $region121: #{tpu_custom_call.1} parent=95 // pred_check_branch
          %2807 = sbr.rel (%p2805) target = $region123
        $region122: #{tpu_custom_call.1} parent=95 // pred_region
          %s2809 = ssub.s32 128, 128
          %2810 = vsyncadd %s2801, %s2809
          %s2811 = smul.addr %s36, 128
          %s2812 = scalar_lea.hbm %s19, %s2811
          %s2814 = sshll.u32 %s2804, 4
          %s2815 = int_to_ptr.vmem [resolvable:$true] %s2814
          %2817 = dma.vmem_to_hbm [thread:$0]  %s2815, 128, %s2812, %s2801
        $region123: #{tpu_custom_call.1} parent=95 // pred_fallthru
          _
      $region96: #{tpu_custom_call.1} parent=5 // pred_fallthru
        _
      %p2818 = scmp.le.s32.totalorder 2, %s31
      // Predicated region
      $region124: #{tpu_custom_call.1} parent=5 // pred_check
        %p2819 = pneg %p2818
      $region125: #{tpu_custom_call.1} parent=5 // pred_check_branch
        %2821 = sbr.rel (%p2819) target = $region127
      $region126: #{tpu_custom_call.1} parent=5 // pred_region
        %s2822 = ssub.s32 %s31, 2
        // Predicated region
        $region128: #{tpu_custom_call.1} parent=126 // pred_check
          %p2823 = pneg %p469
        $region129: #{tpu_custom_call.1} parent=126 // pred_check_branch
          %2825 = sbr.rel (%p2823) target = $region131
        $region130: #{tpu_custom_call.1} parent=126 // pred_region
          %s2826 = sand.u32 %s454, 1
          %s2827 = scalar_lea.sflag [#allocation4], %s2826
          %s2828 = sand.u32 %s454, 1
          %s2829 = smul.addr %s2828, 8
          %s2830 = scalar_lea.vmem [#allocation10], %s2829
          %2831 = dma.done %s2827, 128
        $region131: #{tpu_custom_call.1} parent=126 // pred_fallthru
          _
      $region127: #{tpu_custom_call.1} parent=5 // pred_fallthru
        _
    $region6: #{tpu_custom_call.1} parent=1 // loop_footer
      %s35 = sadd.s32 1, %s31
    $region7: #{tpu_custom_call.1} parent=1 // loop_footer_branch
      %30 = sbr.rel target = $region3
    $region8: #{tpu_custom_call.1} parent=1 // loop_exit
      _
    %2832 = vsyncpa [#allocation3], 1
    %s2833 = scalar_lea.sflag [#allocation3], 1
    %2834 = vsyncpa %s2833, 1
    %2835 = vsyncpa [#allocation7], 1
    %2836 = vsyncpa [#allocation4], 1
    %s2837 = scalar_lea.sflag [#allocation4], 1
    %2838 = vsyncpa %s2837, 1
    %2839 = vsyncpa [#allocation5], 1
    %s2840 = scalar_lea.sflag [#allocation5], 1
    %2841 = vsyncpa %s2840, 1

</llo_original>
